<compile_context>
chip_gen: v7x
topology: tpu7x:2x2x1
jax: 0.10.0
libtpu: 0.0.40
codegen_flags: <defaults>
</compile_context>

<pallas_src>
import functools

import jax
import jax.numpy as jnp
import numpy as np
from jax.experimental import pallas as pl
from jax.experimental.pallas import tpu as pltpu

_VMEM_LIMIT = 32 * 1024 * 1024  # explicit scoped-VMEM cap (safe on v5e/v6e/v7x, >> our usage)


# --------------------------------------------------------------------------------------
# host-side (cached) interpolation / pooling matrices
# --------------------------------------------------------------------------------------
@functools.lru_cache(maxsize=None)
def _bilinear_matrix(out_size: int, in_size: int) -> np.ndarray:
    """1-D bilinear interpolation matrix, align_corners=False (F.interpolate default)."""
    if out_size == in_size:
        return np.eye(out_size, dtype=np.float32)
    scale = in_size / out_size
    dst = np.arange(out_size, dtype=np.float64)
    src = np.clip((dst + 0.5) * scale - 0.5, 0.0, in_size - 1)
    lo = np.floor(src).astype(np.int64)
    hi = np.minimum(lo + 1, in_size - 1)
    frac = src - lo
    m = np.zeros((out_size, in_size), dtype=np.float64)
    m[np.arange(out_size), lo] += 1.0 - frac
    m[np.arange(out_size), hi] += frac
    return m.astype(np.float32)


@functools.lru_cache(maxsize=None)
def _adaptive_pool_matrix(out_size: int, in_size: int) -> np.ndarray:
    """1-D AdaptiveAvgPool matrix (PyTorch bin boundaries)."""
    m = np.zeros((out_size, in_size), dtype=np.float64)
    for i in range(out_size):
        start = (i * in_size) // out_size
        end = -(-((i + 1) * in_size) // out_size)  # ceil
        m[i, start:end] = 1.0 / (end - start)
    return m.astype(np.float32)


@functools.lru_cache(maxsize=None)
def _psp_matrices(h: int, w: int, scales: tuple):
    """Per pool-scale: pooling matrix (HW, s^2) and branch-upsample matrix (s^2, HW)."""
    pools, ups = [], []
    for s in scales:
        ph = _adaptive_pool_matrix(s, h)
        pw = _adaptive_pool_matrix(s, w)
        pools.append(jnp.asarray(np.kron(ph, pw).T))      # (H*W, s*s)
        ah = _bilinear_matrix(h, s)
        aw = _bilinear_matrix(w, s)
        ups.append(jnp.asarray(np.kron(ah, aw).T))        # (s*s, H*W)
    return tuple(pools), tuple(ups)


@functools.lru_cache(maxsize=None)
def _final_matrices(ho: int, h: int, wo: int, w: int):
    """Separable final upsample factors: A (Ho,H) and B^T (W,Wo)."""
    return jnp.asarray(_bilinear_matrix(ho, h)), jnp.asarray(_bilinear_matrix(wo, w).T)


# --------------------------------------------------------------------------------------
# parameter folding (eval-mode BatchNorm folded into the preceding conv)
# --------------------------------------------------------------------------------------
# TODO(synk): train-mode BatchNorm (batch statistics) and Dropout(0.1) masking are not
#             implemented; this is the inference forward (BN folded, dropout = identity).
def _fold_params(params, eps=1e-5):
    nb, mid, cin = params['psp_conv_w'].shape[:3]
    wb = params['psp_conv_w'].reshape(nb, mid, cin)
    sc = params['psp_bn_gamma'] / jnp.sqrt(params['psp_bn_var'] + eps)          # (nb, mid)
    wb = wb * sc[:, :, None]
    bb = params['psp_bn_beta'] - params['psp_bn_mean'] * sc                     # (nb, mid)
    s3 = params['final_bn_gamma'] / jnp.sqrt(params['final_bn_var'] + eps)      # (mid,)
    w3 = params['final_conv3_w'] * s3[:, None, None, None]                      # (mid, C, 3, 3)
    b3 = params['final_bn_beta'] - params['final_bn_mean'] * s3                 # (mid,)
    wc = params['final_cls_w'].reshape(params['final_cls_w'].shape[0], -1)      # (K, mid)
    bc = params['final_cls_b']                                                  # (K,)
    return dict(wb=wb, bb=bb, w3=w3, b3=b3, wc=wc, bc=bc)


# --------------------------------------------------------------------------------------
# Pallas kernels
# --------------------------------------------------------------------------------------
def _psp_concat_kernel(x_ref, wb_ref, bb_ref, *rest, cin, mid, nb):
    """PSP branches + channel concat for one batch element.

    x_ref:(1,Cin,HW) bf16; wb:(nb,mid,Cin) f32; bb:(nb,mid,1) f32;
    rest = nb pool mats (HW,s^2) f32, nb upsample mats (s^2,HW) f32, then cat_ref (1,C,HW) bf16.
    """
    p_refs = rest[:nb]
    u_refs = rest[nb:2 * nb]
    cat_ref = rest[2 * nb]

    x = x_ref[0].astype(jnp.float32)                       # (Cin, HW)
    cat_ref[0, :cin, :] = x_ref[0]                         # pass-through original features
    for b in range(nb):
        pooled = jnp.dot(x, p_refs[b][...], preferred_element_type=jnp.float32)      # (Cin, s^2)
        z = jnp.dot(wb_ref[b], pooled, preferred_element_type=jnp.float32) + bb_ref[b]
        z = jnp.maximum(z, 0.0)                                                       # (mid, s^2)
        up = jnp.dot(z, u_refs[b][...], preferred_element_type=jnp.float32)           # (mid, HW)
        cat_ref[0, cin + b * mid:cin + (b + 1) * mid, :] = up.astype(cat_ref.dtype)


def _head_kernel(x_ref, w3_ref, b3_ref, wc_ref, bc_ref, o_ref, *, out_len, wpad):
    """3x3 conv (folded BN) + ReLU + 1x1 classifier on the zero-padded flattened map.

    x_ref:(1,C,Lin) bf16 (Lin = (H+2)*(W+2)+2); w3:(9,mid,C) bf16; b3:(mid,1) f32;
    wc:(K,mid) bf16; bc:(K,1) f32; o_ref:(1,K,out_len) f32 with out_len = H*(W+2)
    (the 2 pad columns of each row hold junk and are dropped by the wrapper).
    """
    xin = x_ref[0]                                         # (C, Lin) bf16
    mid = w3_ref.shape[1]
    acc = jnp.zeros((mid, out_len), jnp.float32)
    for tap in range(9):                                   # unrolled: 9 shifted MXU matmuls
        dy, dx = divmod(tap, 3)
        off = dy * wpad + dx
        win = xin[:, off:off + out_len]                    # (C, out_len) shifted window
        acc = acc + jnp.dot(w3_ref[tap], win, preferred_element_type=jnp.float32)
    feat = jnp.maximum(acc + b3_ref[...], 0.0).astype(jnp.bfloat16)     # (mid, out_len)
    o_ref[0] = jnp.dot(wc_ref[...], feat, preferred_element_type=jnp.float32) + bc_ref[...]


def _upsample_softmax_kernel(y_ref, a_ref, bt_ref, o_ref, acc_ref, *, num_class, use_softmax):
    """Separable bilinear upsample + (log_)softmax over classes for one (batch, Wo-tile).

    y_ref:(1,K,H,W) f32; a_ref:(Ho,H) f32; bt_ref:(W,TWo) f32; o_ref:(1,K,Ho,TWo) f32;
    acc_ref: VMEM scratch (K,Ho,TWo) f32.
    """
    for k in range(num_class):
        t = jnp.dot(y_ref[0, k], bt_ref[...], preferred_element_type=jnp.float32)   # (H, TWo)
        acc_ref[k] = jnp.dot(a_ref[...], t, preferred_element_type=jnp.float32)     # (Ho, TWo)
    m = acc_ref[0]
    for k in range(1, num_class):
        m = jnp.maximum(m, acc_ref[k])
    denom = jnp.zeros_like(m)
    for k in range(num_class):
        denom = denom + jnp.exp(acc_ref[k] - m)
    if use_softmax:
        inv = pl.reciprocal(denom, approx=True)            # EUP slot -> effectively free
        for k in range(num_class):
            o_ref[0, k] = jnp.exp(acc_ref[k] - m) * inv
    else:
        lse = m + jnp.log(denom)
        for k in range(num_class):
            o_ref[0, k] = acc_ref[k] - lse


def _logsoftmax_kernel(y_ref, o_ref, *, use_softmax):
    """(log_)softmax over classes (axis 0 = sublanes) for the identity-upsample fast path."""
    z = y_ref[0].astype(jnp.float32)                       # (K, HW)
    m = jnp.max(z, axis=0, keepdims=True)
    e = jnp.exp(z - m)
    denom = jnp.sum(e, axis=0, keepdims=True)
    if use_softmax:
        o_ref[0] = e * pl.reciprocal(denom, approx=True)
    else:
        o_ref[0] = (z - m) - jnp.log(denom)


# --------------------------------------------------------------------------------------
# wrapper
# --------------------------------------------------------------------------------------
def psp_bilinear_forward(x, params, up_sample_scale=8, use_softmax=False,
                         pool_scales=(1, 2, 3, 6)):
    """x: (N, fc_dim, H, W) float32; params: dict of PyTorch-shaped weights (see demo)."""
    n, cin, h, w = x.shape
    folded = _fold_params(params)
    nb = len(pool_scales)
    mid = folded['wb'].shape[1]
    num_class = folded['wc'].shape[0]
    c_cat = cin + nb * mid
    hw = h * w

    # ---------------- stage 1: PSP branches + concat ----------------
    p_list, u_list = _psp_matrices(h, w, tuple(pool_scales))
    x_flat = x.reshape(n, cin, hw).astype(jnp.bfloat16)
    wb = folded['wb'].astype(jnp.float32)
    bb = folded['bb'].reshape(nb, mid, 1).astype(jnp.float32)

    cat = pl.pallas_call(
        functools.partial(_psp_concat_kernel, cin=cin, mid=mid, nb=nb),
        out_shape=jax.ShapeDtypeStruct((n, c_cat, hw), jnp.bfloat16),
        grid_spec=pltpu.PrefetchScalarGridSpec(
            num_scalar_prefetch=0,
            grid=(n,),
            in_specs=[pl.BlockSpec((1, cin, hw), lambda i: (i, 0, 0)),
                      pl.BlockSpec(wb.shape, lambda i: (0, 0, 0)),
                      pl.BlockSpec(bb.shape, lambda i: (0, 0, 0))]
                     + [pl.BlockSpec(p.shape, lambda i: (0, 0)) for p in p_list]
                     + [pl.BlockSpec(u.shape, lambda i: (0, 0)) for u in u_list],
            out_specs=pl.BlockSpec((1, c_cat, hw), lambda i: (i, 0, 0)),
        ),
        compiler_params=pltpu.CompilerParams(
            dimension_semantics=("parallel",), vmem_limit_bytes=_VMEM_LIMIT),
    )(x_flat, wb, bb, *p_list, *u_list)

    # ---------------- stage 2: 3x3 conv + BN + ReLU + 1x1 classifier ----------------
    hp_, wp_ = h + 2, w + 2
    out_len = h * wp_                                     # conv output length in padded coords
    catp = jnp.pad(cat.reshape(n, c_cat, h, w), ((0, 0), (0, 0), (1, 1), (1, 1)))
    cat_in = jnp.pad(catp.reshape(n, c_cat, hp_ * wp_), ((0, 0), (0, 0), (0, 2)))
    lin = cat_in.shape[-1]

    w3_taps = jnp.transpose(folded['w3'], (2, 3, 0, 1)).reshape(9, mid, c_cat).astype(jnp.bfloat16)
    b3 = folded['b3'].reshape(mid, 1).astype(jnp.float32)
    wc = folded['wc'].astype(jnp.bfloat16)
    bc = folded['bc'].reshape(num_class, 1).astype(jnp.float32)

    scores = pl.pallas_call(
        functools.partial(_head_kernel, out_len=out_len, wpad=wp_),
        out_shape=jax.ShapeDtypeStruct((n, num_class, out_len), jnp.float32),
        grid_spec=pltpu.PrefetchScalarGridSpec(
            num_scalar_prefetch=0,
            grid=(n,),
            in_specs=[pl.BlockSpec((1, c_cat, lin), lambda i: (i, 0, 0)),
                      pl.BlockSpec(w3_taps.shape, lambda i: (0, 0, 0)),
                      pl.BlockSpec(b3.shape, lambda i: (0, 0)),
                      pl.BlockSpec(wc.shape, lambda i: (0, 0)),
                      pl.BlockSpec(bc.shape, lambda i: (0, 0))],
            out_specs=pl.BlockSpec((1, num_class, out_len), lambda i: (i, 0, 0)),
        ),
        compiler_params=pltpu.CompilerParams(
            dimension_semantics=("parallel",), vmem_limit_bytes=_VMEM_LIMIT),
    )(cat_in, w3_taps, b3, wc, bc)

    # drop the per-row pad columns -> valid class logits (N, K, H, W)
    sc4 = scores.reshape(n, num_class, h, wp_)[..., :w]

    ho, wo = h * up_sample_scale, w * up_sample_scale

    # ---------------- stage 3a: static skip when the final upsample is the identity ---------
    if (ho, wo) == (h, w):
        out_flat = pl.pallas_call(
            functools.partial(_logsoftmax_kernel, use_softmax=use_softmax),
            out_shape=jax.ShapeDtypeStruct((n, num_class, hw), jnp.float32),
            grid_spec=pltpu.PrefetchScalarGridSpec(
                num_scalar_prefetch=0,
                grid=(n,),
                in_specs=[pl.BlockSpec((1, num_class, hw), lambda i: (i, 0, 0))],
                out_specs=pl.BlockSpec((1, num_class, hw), lambda i: (i, 0, 0)),
            ),
            compiler_params=pltpu.CompilerParams(
                dimension_semantics=("parallel",), vmem_limit_bytes=_VMEM_LIMIT),
        )(sc4.reshape(n, num_class, hw))
        return out_flat.reshape(n, num_class, h, w)

    # ---------------- stage 3b: separable upsample + (log_)softmax, tiled over Wo -----------
    a_h, b_wt = _final_matrices(ho, h, wo, w)             # (Ho,H), (W,Wo) f32
    two = wo
    for cand in (512, 256, 128):                          # lane-dense 128-multiple Wo tiles
        if wo > cand and wo % cand == 0:
            two = cand
            break

    out = pl.pallas_call(
        functools.partial(_upsample_softmax_kernel, num_class=num_class,
                          use_softmax=use_softmax),
        out_shape=jax.ShapeDtypeStruct((n, num_class, ho, wo), jnp.float32),
        grid_spec=pltpu.PrefetchScalarGridSpec(
            num_scalar_prefetch=0,
            grid=(n, wo // two),
            in_specs=[pl.BlockSpec((1, num_class, h, w), lambda i, j: (i, 0, 0, 0)),
                      pl.BlockSpec((ho, h), lambda i, j: (0, 0)),
                      pl.BlockSpec((w, two), lambda i, j: (0, j))],
            out_specs=pl.BlockSpec((1, num_class, ho, two), lambda i, j: (i, 0, 0, j)),
            scratch_shapes=[pltpu.VMEM((num_class, ho, two), jnp.float32)],
        ),
        compiler_params=pltpu.CompilerParams(
            dimension_semantics=("parallel", "parallel"), vmem_limit_bytes=_VMEM_LIMIT),
    )(sc4, a_h, b_wt)
    return out


# --------------------------------------------------------------------------------------
# pure-JAX reference (f32, HIGHEST precision).  The kernel intentionally stores the
# concatenated features / hidden features and the learned weights in bf16; the reference
# mirrors exactly those quantization points (q()) so the comparison isolates kernel
# correctness from the intentional mixed-precision rounding.
# --------------------------------------------------------------------------------------
def _reference(x, params, up_sample_scale=8, use_softmax=False, pool_scales=(1, 2, 3, 6)):
    n, cin, h, w = x.shape
    folded = _fold_params(params)
    q = lambda a: a.astype(jnp.bfloat16).astype(jnp.float32)
    hp = jax.lax.Precision.HIGHEST

    xq = q(x)
    feats = [xq]
    for b, s in enumerate(pool_scales):
        ph = jnp.asarray(_adaptive_pool_matrix(s, h))
        pw = jnp.asarray(_adaptive_pool_matrix(s, w))
        pooled = jnp.einsum('ai,bj,ncij->ncab', ph, pw, xq, precision=hp)
        z = jnp.einsum('mc,ncab->nmab', folded['wb'][b], pooled, precision=hp)
        z = jnp.maximum(z + folded['bb'][b][None, :, None, None], 0.0)
        ah = jnp.asarray(_bilinear_matrix(h, s))
        aw = jnp.asarray(_bilinear_matrix(w, s))
        feats.append(jnp.einsum('ia,jb,nmab->nmij', ah, aw, z, precision=hp))
    cat = q(jnp.concatenate(feats, axis=1))

    y = jax.lax.conv_general_dilated(cat, q(folded['w3']), (1, 1), ((1, 1), (1, 1)),
                                     dimension_numbers=('NCHW', 'OIHW', 'NCHW'), precision=hp)
    y = q(jnp.maximum(y + folded['b3'][None, :, None, None], 0.0))
    sc = jnp.einsum('km,nmhw->nkhw', q(folded['wc']), y, precision=hp) \
        + folded['bc'][None, :, None, None]

    ho, wo = h * up_sample_scale, w * up_sample_scale
    if (ho, wo) != (h, w):
        a = jnp.asarray(_bilinear_matrix(ho, h))
        bm = jnp.asarray(_bilinear_matrix(wo, w))
        sc = jnp.einsum('ih,nkhw,jw->nkij', a, sc, bm, precision=hp)
    if use_softmax:
        return jax.nn.softmax(sc, axis=1)
    return jax.nn.log_softmax(sc, axis=1)


# --------------------------------------------------------------------------------------
if __name__ == "__main__":
    # Small demo shapes consistent with the module structure (module defaults are
    # fc_dim=512, mid=512 -- kept parametric, shrunk here for a fast self-test).
    num_class, fc_dim, mid = 19, 32, 64
    pool_scales = (1, 2, 3, 6)
    batch, h, w = 2, 16, 32
    up_scale = 8                                   # module default upSampleScale
    c_cat = fc_dim + len(pool_scales) * mid

    key = jax.random.PRNGKey(0)
    ks = jax.random.split(key, 13)
    x = jax.random.normal(ks[0], (batch, fc_dim, h, w), dtype=jnp.float32)

    params = {
        'psp_conv_w': jax.random.normal(ks[1], (len(pool_scales), mid, fc_dim, 1, 1),
                                        jnp.float32) / np.sqrt(fc_dim),
        'psp_bn_gamma': jax.random.uniform(ks[2], (len(pool_scales), mid), jnp.float32, 0.5, 1.5),
        'psp_bn_beta': 0.1 * jax.random.normal(ks[3], (len(pool_scales), mid), jnp.float32),
        'psp_bn_mean': 0.2 * jax.random.normal(ks[4], (len(pool_scales), mid), jnp.float32),
        'psp_bn_var': jax.random.uniform(ks[5], (len(pool_scales), mid), jnp.float32, 0.5, 1.5),
        'final_conv3_w': jax.random.normal(ks[6], (mid, c_cat, 3, 3),
                                           jnp.float32) / np.sqrt(c_cat * 9),
        'final_bn_gamma': jax.random.uniform(ks[7], (mid,), jnp.float32, 0.5, 1.5),
        'final_bn_beta': 0.1 * jax.random.normal(ks[8], (mid,), jnp.float32),
        'final_bn_mean': 0.2 * jax.random.normal(ks[9], (mid,), jnp.float32),
        'final_bn_var': jax.random.uniform(ks[10], (mid,), jnp.float32, 0.5, 1.5),
        'final_cls_w': jax.random.normal(ks[11], (num_class, mid, 1, 1),
                                         jnp.float32) / np.sqrt(mid),
        'final_cls_b': 0.1 * jax.random.normal(ks[12], (num_class,), jnp.float32),
    }

    out = psp_bilinear_forward(x, params, up_sample_scale=up_scale,
                               use_softmax=False, pool_scales=pool_scales)
    out = jax.block_until_ready(out)
    assert out.shape == (batch, num_class, h * up_scale, w * up_scale), out.shape

    ref = _reference(x, params, up_sample_scale=up_scale,
                     use_softmax=False, pool_scales=pool_scales)
    np.testing.assert_allclose(np.asarray(out), np.asarray(ref), atol=5e-3, rtol=5e-3)

    print("KERNEL_OK")
</pallas_src>

<mosaic_0001>
module attributes {stable_mosaic.version = 11 : i64} {
  func.func @_psp_concat_kernel(%arg0: i32, %arg1: memref<1x32x512xbf16, #tpu.memory_space<vmem>>, %arg2: memref<4x64x32xf32, #tpu.memory_space<vmem>>, %arg3: memref<4x64x1xf32, #tpu.memory_space<vmem>>, %arg4: memref<512x1xf32, #tpu.memory_space<vmem>>, %arg5: memref<512x4xf32, #tpu.memory_space<vmem>>, %arg6: memref<512x9xf32, #tpu.memory_space<vmem>>, %arg7: memref<512x36xf32, #tpu.memory_space<vmem>>, %arg8: memref<1x512xf32, #tpu.memory_space<vmem>>, %arg9: memref<4x512xf32, #tpu.memory_space<vmem>>, %arg10: memref<9x512xf32, #tpu.memory_space<vmem>>, %arg11: memref<36x512xf32, #tpu.memory_space<vmem>>, %arg12: memref<1x288x512xbf16, #tpu.memory_space<vmem>>) attributes {dimension_semantics = [#tpu.dimension_semantics<parallel>], iteration_bounds = array<i64: 2>, scalar_prefetch = 0 : i64, scratch_operands = 0 : i64, tpu.core_type = #tpu.core_type<tc>, window_params = [{transform_indices = @transform_0, window_bounds = array<i64: 1, 32, 512>}, {pipeline_mode = #tpu.pipeline_mode<synchronous>, transform_indices = @transform_1, window_bounds = array<i64: 4, 64, 32>}, {pipeline_mode = #tpu.pipeline_mode<synchronous>, transform_indices = @transform_2, window_bounds = array<i64: 4, 64, 1>}, {pipeline_mode = #tpu.pipeline_mode<synchronous>, transform_indices = @transform_3, window_bounds = array<i64: 512, 1>}, {pipeline_mode = #tpu.pipeline_mode<synchronous>, transform_indices = @transform_4, window_bounds = array<i64: 512, 4>}, {pipeline_mode = #tpu.pipeline_mode<synchronous>, transform_indices = @transform_5, window_bounds = array<i64: 512, 9>}, {pipeline_mode = #tpu.pipeline_mode<synchronous>, transform_indices = @transform_6, window_bounds = array<i64: 512, 36>}, {pipeline_mode = #tpu.pipeline_mode<synchronous>, transform_indices = @transform_7, window_bounds = array<i64: 1, 512>}, {pipeline_mode = #tpu.pipeline_mode<synchronous>, transform_indices = @transform_8, window_bounds = array<i64: 4, 512>}, {pipeline_mode = #tpu.pipeline_mode<synchronous>, transform_indices = @transform_9, window_bounds = array<i64: 9, 512>}, {pipeline_mode = #tpu.pipeline_mode<synchronous>, transform_indices = @transform_10, window_bounds = array<i64: 36, 512>}, {transform_indices = @transform_11, window_bounds = array<i64: 1, 288, 512>}]} {
    %c0 = arith.constant 0 : index
    %c0_0 = arith.constant 0 : index
    %c0_1 = arith.constant 0 : index
    %0 = vector.load %arg1[%c0, %c0_0, %c0_1] : memref<1x32x512xbf16, #tpu.memory_space<vmem>>, vector<1x32x512xbf16>
    %1 = vector.shape_cast %0 : vector<1x32x512xbf16> to vector<32x512xbf16>
    %2 = arith.extf %1 : vector<32x512xbf16> to vector<32x512xf32>
    %c0_2 = arith.constant 0 : index
    %c0_3 = arith.constant 0 : index
    %c0_4 = arith.constant 0 : index
    %3 = vector.load %arg1[%c0_2, %c0_3, %c0_4] : memref<1x32x512xbf16, #tpu.memory_space<vmem>>, vector<1x32x512xbf16>
    %4 = vector.shape_cast %3 : vector<1x32x512xbf16> to vector<32x512xbf16>
    %c0_5 = arith.constant 0 : index
    %c0_6 = arith.constant 0 : index
    %c0_7 = arith.constant 0 : index
    %5 = vector.load %arg12[%c0_5, %c0_6, %c0_7] : memref<1x288x512xbf16, #tpu.memory_space<vmem>>, vector<1x32x512xbf16>
    %6 = vector.shape_cast %5 : vector<1x32x512xbf16> to vector<32x512xbf16>
    %7 = vector.shape_cast %4 : vector<32x512xbf16> to vector<1x32x512xbf16>
    tpu.vector_store %arg12[%c0_5, %c0_6, %c0_7], %7 {strides = array<i32>} : memref<1x288x512xbf16, #tpu.memory_space<vmem>>, vector<1x32x512xbf16>,
    %c0_8 = arith.constant 0 : index
    %c0_9 = arith.constant 0 : index
    %8 = vector.load %arg4[%c0_8, %c0_9] : memref<512x1xf32, #tpu.memory_space<vmem>>, vector<512x1xf32>
    %cst = arith.constant dense<0.000000e+00> : vector<32x1xf32>
    %9 = tpu.matmul %2, %8, %cst {dimension_numbers = #tpu.dot_dimension_numbers<[1], [0], [0], [1], [0, 0, 1, 1], [], []>} : vector<32x512xf32>, vector<512x1xf32>, vector<32x1xf32> -> vector<32x1xf32>
    %c0_10 = arith.constant 0 : index
    %c0_11 = arith.constant 0 : index
    %c0_12 = arith.constant 0 : index
    %10 = vector.load %arg2[%c0_10, %c0_11, %c0_12] : memref<4x64x32xf32, #tpu.memory_space<vmem>>, vector<1x64x32xf32>
    %11 = vector.shape_cast %10 : vector<1x64x32xf32> to vector<64x32xf32>
    %cst_13 = arith.constant dense<0.000000e+00> : vector<64x1xf32>
    %12 = tpu.matmul %11, %9, %cst_13 {dimension_numbers = #tpu.dot_dimension_numbers<[1], [0], [0], [1], [0, 0, 1, 1], [], []>} : vector<64x32xf32>, vector<32x1xf32>, vector<64x1xf32> -> vector<64x1xf32>
    %c0_14 = arith.constant 0 : index
    %c0_15 = arith.constant 0 : index
    %c0_16 = arith.constant 0 : index
    %13 = vector.load %arg3[%c0_14, %c0_15, %c0_16] : memref<4x64x1xf32, #tpu.memory_space<vmem>>, vector<1x64x1xf32>
    %14 = vector.shape_cast %13 : vector<1x64x1xf32> to vector<64x1xf32>
    %15 = arith.addf %12, %14 : vector<64x1xf32>
    %cst_17 = arith.constant 0.000000e+00 : f32
    %16 = vector.broadcast %cst_17 : f32 to vector<64x1xf32>
    %17 = arith.maximumf %15, %16 : vector<64x1xf32>
    %c0_18 = arith.constant 0 : index
    %c0_19 = arith.constant 0 : index
    %18 = vector.load %arg8[%c0_18, %c0_19] : memref<1x512xf32, #tpu.memory_space<vmem>>, vector<1x512xf32>
    %cst_20 = arith.constant dense<0.000000e+00> : vector<64x512xf32>
    %19 = tpu.matmul %17, %18, %cst_20 {dimension_numbers = #tpu.dot_dimension_numbers<[1], [0], [0], [1], [0, 0, 1, 1], [], []>} : vector<64x1xf32>, vector<1x512xf32>, vector<64x512xf32> -> vector<64x512xf32>
    %20 = arith.truncf %19 : vector<64x512xf32> to vector<64x512xbf16>
    %c0_21 = arith.constant 0 : index
    %c32 = arith.constant 32 : index
    %c0_22 = arith.constant 0 : index
    %21 = vector.load %arg12[%c0_21, %c32, %c0_22] : memref<1x288x512xbf16, #tpu.memory_space<vmem>>, vector<1x64x512xbf16>
    %22 = vector.shape_cast %21 : vector<1x64x512xbf16> to vector<64x512xbf16>
    %23 = vector.shape_cast %20 : vector<64x512xbf16> to vector<1x64x512xbf16>
    tpu.vector_store %arg12[%c0_21, %c32, %c0_22], %23 {strides = array<i32>} : memref<1x288x512xbf16, #tpu.memory_space<vmem>>, vector<1x64x512xbf16>,
    %c0_23 = arith.constant 0 : index
    %c0_24 = arith.constant 0 : index
    %24 = vector.load %arg5[%c0_23, %c0_24] : memref<512x4xf32, #tpu.memory_space<vmem>>, vector<512x4xf32>
    %cst_25 = arith.constant dense<0.000000e+00> : vector<32x4xf32>
    %25 = tpu.matmul %2, %24, %cst_25 {dimension_numbers = #tpu.dot_dimension_numbers<[1], [0], [0], [1], [0, 0, 1, 1], [], []>} : vector<32x512xf32>, vector<512x4xf32>, vector<32x4xf32> -> vector<32x4xf32>
    %c1 = arith.constant 1 : index
    %c0_26 = arith.constant 0 : index
    %c0_27 = arith.constant 0 : index
    %26 = vector.load %arg2[%c1, %c0_26, %c0_27] : memref<4x64x32xf32, #tpu.memory_space<vmem>>, vector<1x64x32xf32>
    %27 = vector.shape_cast %26 : vector<1x64x32xf32> to vector<64x32xf32>
    %cst_28 = arith.constant dense<0.000000e+00> : vector<64x4xf32>
    %28 = tpu.matmul %27, %25, %cst_28 {dimension_numbers = #tpu.dot_dimension_numbers<[1], [0], [0], [1], [0, 0, 1, 1], [], []>} : vector<64x32xf32>, vector<32x4xf32>, vector<64x4xf32> -> vector<64x4xf32>
    %c1_29 = arith.constant 1 : index
    %c0_30 = arith.constant 0 : index
    %c0_31 = arith.constant 0 : index
    %29 = vector.load %arg3[%c1_29, %c0_30, %c0_31] : memref<4x64x1xf32, #tpu.memory_space<vmem>>, vector<1x64x1xf32>
    %30 = vector.shape_cast %29 : vector<1x64x1xf32> to vector<64x1xf32>
    %31 = vector.broadcast %30 : vector<64x1xf32> to vector<64x4xf32>
    %32 = arith.addf %28, %31 : vector<64x4xf32>
    %cst_32 = arith.constant 0.000000e+00 : f32
    %33 = vector.broadcast %cst_32 : f32 to vector<64x4xf32>
    %34 = arith.maximumf %32, %33 : vector<64x4xf32>
    %c0_33 = arith.constant 0 : index
    %c0_34 = arith.constant 0 : index
    %35 = vector.load %arg9[%c0_33, %c0_34] : memref<4x512xf32, #tpu.memory_space<vmem>>, vector<4x512xf32>
    %cst_35 = arith.constant dense<0.000000e+00> : vector<64x512xf32>
    %36 = tpu.matmul %34, %35, %cst_35 {dimension_numbers = #tpu.dot_dimension_numbers<[1], [0], [0], [1], [0, 0, 1, 1], [], []>} : vector<64x4xf32>, vector<4x512xf32>, vector<64x512xf32> -> vector<64x512xf32>
    %37 = arith.truncf %36 : vector<64x512xf32> to vector<64x512xbf16>
    %c0_36 = arith.constant 0 : index
    %c96 = arith.constant 96 : index
    %c0_37 = arith.constant 0 : index
    %38 = vector.load %arg12[%c0_36, %c96, %c0_37] : memref<1x288x512xbf16, #tpu.memory_space<vmem>>, vector<1x64x512xbf16>
    %39 = vector.shape_cast %38 : vector<1x64x512xbf16> to vector<64x512xbf16>
    %40 = vector.shape_cast %37 : vector<64x512xbf16> to vector<1x64x512xbf16>
    tpu.vector_store %arg12[%c0_36, %c96, %c0_37], %40 {strides = array<i32>} : memref<1x288x512xbf16, #tpu.memory_space<vmem>>, vector<1x64x512xbf16>,
    %c0_38 = arith.constant 0 : index
    %c0_39 = arith.constant 0 : index
    %41 = vector.load %arg6[%c0_38, %c0_39] : memref<512x9xf32, #tpu.memory_space<vmem>>, vector<512x9xf32>
    %cst_40 = arith.constant dense<0.000000e+00> : vector<32x9xf32>
    %42 = tpu.matmul %2, %41, %cst_40 {dimension_numbers = #tpu.dot_dimension_numbers<[1], [0], [0], [1], [0, 0, 1, 1], [], []>} : vector<32x512xf32>, vector<512x9xf32>, vector<32x9xf32> -> vector<32x9xf32>
    %c2 = arith.constant 2 : index
    %c0_41 = arith.constant 0 : index
    %c0_42 = arith.constant 0 : index
    %43 = vector.load %arg2[%c2, %c0_41, %c0_42] : memref<4x64x32xf32, #tpu.memory_space<vmem>>, vector<1x64x32xf32>
    %44 = vector.shape_cast %43 : vector<1x64x32xf32> to vector<64x32xf32>
    %cst_43 = arith.constant dense<0.000000e+00> : vector<64x9xf32>
    %45 = tpu.matmul %44, %42, %cst_43 {dimension_numbers = #tpu.dot_dimension_numbers<[1], [0], [0], [1], [0, 0, 1, 1], [], []>} : vector<64x32xf32>, vector<32x9xf32>, vector<64x9xf32> -> vector<64x9xf32>
    %c2_44 = arith.constant 2 : index
    %c0_45 = arith.constant 0 : index
    %c0_46 = arith.constant 0 : index
    %46 = vector.load %arg3[%c2_44, %c0_45, %c0_46] : memref<4x64x1xf32, #tpu.memory_space<vmem>>, vector<1x64x1xf32>
    %47 = vector.shape_cast %46 : vector<1x64x1xf32> to vector<64x1xf32>
    %48 = vector.broadcast %47 : vector<64x1xf32> to vector<64x9xf32>
    %49 = arith.addf %45, %48 : vector<64x9xf32>
    %cst_47 = arith.constant 0.000000e+00 : f32
    %50 = vector.broadcast %cst_47 : f32 to vector<64x9xf32>
    %51 = arith.maximumf %49, %50 : vector<64x9xf32>
    %c0_48 = arith.constant 0 : index
    %c0_49 = arith.constant 0 : index
    %52 = vector.load %arg10[%c0_48, %c0_49] : memref<9x512xf32, #tpu.memory_space<vmem>>, vector<9x512xf32>
    %cst_50 = arith.constant dense<0.000000e+00> : vector<64x512xf32>
    %53 = tpu.matmul %51, %52, %cst_50 {dimension_numbers = #tpu.dot_dimension_numbers<[1], [0], [0], [1], [0, 0, 1, 1], [], []>} : vector<64x9xf32>, vector<9x512xf32>, vector<64x512xf32> -> vector<64x512xf32>
    %54 = arith.truncf %53 : vector<64x512xf32> to vector<64x512xbf16>
    %c0_51 = arith.constant 0 : index
    %c160 = arith.constant 160 : index
    %c0_52 = arith.constant 0 : index
    %55 = vector.load %arg12[%c0_51, %c160, %c0_52] : memref<1x288x512xbf16, #tpu.memory_space<vmem>>, vector<1x64x512xbf16>
    %56 = vector.shape_cast %55 : vector<1x64x512xbf16> to vector<64x512xbf16>
    %57 = vector.shape_cast %54 : vector<64x512xbf16> to vector<1x64x512xbf16>
    tpu.vector_store %arg12[%c0_51, %c160, %c0_52], %57 {strides = array<i32>} : memref<1x288x512xbf16, #tpu.memory_space<vmem>>, vector<1x64x512xbf16>,
    %c0_53 = arith.constant 0 : index
    %c0_54 = arith.constant 0 : index
    %58 = vector.load %arg7[%c0_53, %c0_54] : memref<512x36xf32, #tpu.memory_space<vmem>>, vector<512x36xf32>
    %cst_55 = arith.constant dense<0.000000e+00> : vector<32x36xf32>
    %59 = tpu.matmul %2, %58, %cst_55 {dimension_numbers = #tpu.dot_dimension_numbers<[1], [0], [0], [1], [0, 0, 1, 1], [], []>} : vector<32x512xf32>, vector<512x36xf32>, vector<32x36xf32> -> vector<32x36xf32>
    %c3 = arith.constant 3 : index
    %c0_56 = arith.constant 0 : index
    %c0_57 = arith.constant 0 : index
    %60 = vector.load %arg2[%c3, %c0_56, %c0_57] : memref<4x64x32xf32, #tpu.memory_space<vmem>>, vector<1x64x32xf32>
    %61 = vector.shape_cast %60 : vector<1x64x32xf32> to vector<64x32xf32>
    %cst_58 = arith.constant dense<0.000000e+00> : vector<64x36xf32>
    %62 = tpu.matmul %61, %59, %cst_58 {dimension_numbers = #tpu.dot_dimension_numbers<[1], [0], [0], [1], [0, 0, 1, 1], [], []>} : vector<64x32xf32>, vector<32x36xf32>, vector<64x36xf32> -> vector<64x36xf32>
    %c3_59 = arith.constant 3 : index
    %c0_60 = arith.constant 0 : index
    %c0_61 = arith.constant 0 : index
    %63 = vector.load %arg3[%c3_59, %c0_60, %c0_61] : memref<4x64x1xf32, #tpu.memory_space<vmem>>, vector<1x64x1xf32>
    %64 = vector.shape_cast %63 : vector<1x64x1xf32> to vector<64x1xf32>
    %65 = vector.broadcast %64 : vector<64x1xf32> to vector<64x36xf32>
    %66 = arith.addf %62, %65 : vector<64x36xf32>
    %cst_62 = arith.constant 0.000000e+00 : f32
    %67 = vector.broadcast %cst_62 : f32 to vector<64x36xf32>
    %68 = arith.maximumf %66, %67 : vector<64x36xf32>
    %c0_63 = arith.constant 0 : index
    %c0_64 = arith.constant 0 : index
    %69 = vector.load %arg11[%c0_63, %c0_64] : memref<36x512xf32, #tpu.memory_space<vmem>>, vector<36x512xf32>
    %cst_65 = arith.constant dense<0.000000e+00> : vector<64x512xf32>
    %70 = tpu.matmul %68, %69, %cst_65 {dimension_numbers = #tpu.dot_dimension_numbers<[1], [0], [0], [1], [0, 0, 1, 1], [], []>} : vector<64x36xf32>, vector<36x512xf32>, vector<64x512xf32> -> vector<64x512xf32>
    %71 = arith.truncf %70 : vector<64x512xf32> to vector<64x512xbf16>
    %c0_66 = arith.constant 0 : index
    %c224 = arith.constant 224 : index
    %c0_67 = arith.constant 0 : index
    %72 = vector.load %arg12[%c0_66, %c224, %c0_67] : memref<1x288x512xbf16, #tpu.memory_space<vmem>>, vector<1x64x512xbf16>
    %73 = vector.shape_cast %72 : vector<1x64x512xbf16> to vector<64x512xbf16>
    %74 = vector.shape_cast %71 : vector<64x512xbf16> to vector<1x64x512xbf16>
    tpu.vector_store %arg12[%c0_66, %c224, %c0_67], %74 {strides = array<i32>} : memref<1x288x512xbf16, #tpu.memory_space<vmem>>, vector<1x64x512xbf16>,
    return
  }
  func.func @transform_0(%arg0: i32) -> (i32, i32, i32) {
    %c0_i32 = arith.constant 0 : i32
    %c0_i32_0 = arith.constant 0 : i32
    %c0_i32_1 = arith.constant 0 : i32
    return %arg0, %c0_i32, %c0_i32_0 : i32, i32, i32
  }
  func.func @transform_1(%arg0: i32) -> (i32, i32, i32) {
    %c0_i32 = arith.constant 0 : i32
    %c0_i32_0 = arith.constant 0 : i32
    %c0_i32_1 = arith.constant 0 : i32
    %c0_i32_2 = arith.constant 0 : i32
    return %c0_i32, %c0_i32_0, %c0_i32_1 : i32, i32, i32
  }
  func.func @transform_2(%arg0: i32) -> (i32, i32, i32) {
    %c0_i32 = arith.constant 0 : i32
    %c0_i32_0 = arith.constant 0 : i32
    %c0_i32_1 = arith.constant 0 : i32
    %c0_i32_2 = arith.constant 0 : i32
    return %c0_i32, %c0_i32_0, %c0_i32_1 : i32, i32, i32
  }
  func.func @transform_3(%arg0: i32) -> (i32, i32) {
    %c0_i32 = arith.constant 0 : i32
    %c0_i32_0 = arith.constant 0 : i32
    %c0_i32_1 = arith.constant 0 : i32
    return %c0_i32, %c0_i32_0 : i32, i32
  }
  func.func @transform_4(%arg0: i32) -> (i32, i32) {
    %c0_i32 = arith.constant 0 : i32
    %c0_i32_0 = arith.constant 0 : i32
    %c0_i32_1 = arith.constant 0 : i32
    return %c0_i32, %c0_i32_0 : i32, i32
  }
  func.func @transform_5(%arg0: i32) -> (i32, i32) {
    %c0_i32 = arith.constant 0 : i32
    %c0_i32_0 = arith.constant 0 : i32
    %c0_i32_1 = arith.constant 0 : i32
    return %c0_i32, %c0_i32_0 : i32, i32
  }
  func.func @transform_6(%arg0: i32) -> (i32, i32) {
    %c0_i32 = arith.constant 0 : i32
    %c0_i32_0 = arith.constant 0 : i32
    %c0_i32_1 = arith.constant 0 : i32
    return %c0_i32, %c0_i32_0 : i32, i32
  }
  func.func @transform_7(%arg0: i32) -> (i32, i32) {
    %c0_i32 = arith.constant 0 : i32
    %c0_i32_0 = arith.constant 0 : i32
    %c0_i32_1 = arith.constant 0 : i32
    return %c0_i32, %c0_i32_0 : i32, i32
  }
  func.func @transform_8(%arg0: i32) -> (i32, i32) {
    %c0_i32 = arith.constant 0 : i32
    %c0_i32_0 = arith.constant 0 : i32
    %c0_i32_1 = arith.constant 0 : i32
    return %c0_i32, %c0_i32_0 : i32, i32
  }
  func.func @transform_9(%arg0: i32) -> (i32, i32) {
    %c0_i32 = arith.constant 0 : i32
    %c0_i32_0 = arith.constant 0 : i32
    %c0_i32_1 = arith.constant 0 : i32
    return %c0_i32, %c0_i32_0 : i32, i32
  }
  func.func @transform_10(%arg0: i32) -> (i32, i32) {
    %c0_i32 = arith.constant 0 : i32
    %c0_i32_0 = arith.constant 0 : i32
    %c0_i32_1 = arith.constant 0 : i32
    return %c0_i32, %c0_i32_0 : i32, i32
  }
  func.func @transform_11(%arg0: i32) -> (i32, i32, i32) {
    %c0_i32 = arith.constant 0 : i32
    %c0_i32_0 = arith.constant 0 : i32
    %c0_i32_1 = arith.constant 0 : i32
    return %arg0, %c0_i32, %c0_i32_0 : i32, i32, i32
  }
}

</mosaic_0001>

<llo_original>
// kernel: tpu_custom_call.1
$region0: #{tpu_custom_call.1}
  #allocation0 [shape = 'u32[]', space=smem, size = 0x4, offset = 0x4, fixed_abs, tag = 'smem constant byte address 0x4 - core index']
  #allocation1 [shape = 'u32[144,128]{1,0:T(1,128)}', space=vmem, size = 0x12000, scoped, tag = 'internal scratch']
  %s0 = inlined_call_operand.vmem [shape: bf16[2,32,512], index: 0, kind: input, shape index: {}]
  %s1 = inlined_call_operand.vmem [shape: f32[4,64,32], index: 1, kind: input, shape index: {}]
  %s2 = inlined_call_operand.vmem [shape: f32[4,64,1], index: 2, kind: input, shape index: {}]
  %s3 = inlined_call_operand.vmem [shape: f32[512,1], index: 3, kind: input, shape index: {}]
  %s4 = inlined_call_operand.vmem [shape: f32[512,4], index: 4, kind: input, shape index: {}]
  %s5 = inlined_call_operand.vmem [shape: f32[512,9], index: 5, kind: input, shape index: {}]
  %s6 = inlined_call_operand.vmem [shape: f32[512,36], index: 6, kind: input, shape index: {}]
  %s7 = inlined_call_operand.vmem [shape: f32[1,512], index: 7, kind: input, shape index: {}]
  %s8 = inlined_call_operand.vmem [shape: f32[4,512], index: 8, kind: input, shape index: {}]
  %s9 = inlined_call_operand.vmem [shape: f32[9,512], index: 9, kind: input, shape index: {}]
  %s10 = inlined_call_operand.vmem [shape: f32[36,512], index: 10, kind: input, shape index: {}]
  %s11 = inlined_call_operand.hbm [shape: bf16[2,288,512], index: 11, kind: output, shape index: {}]
  %s12 = sld [smem:[#allocation0]]
  $region77: #{tpu_custom_call.1} parent=0
    _
  %s14 = ssub.s32 1, %s12
  %s15 = scalar_select 0, %s14, %s12
  $region1: #{tpu_custom_call.1} parent=0
    #allocation2 [shape = 'u8[589824]{0}', space=vmem, size = 0x90000, scoped, tag = 'output window, operand 0']
    #allocation3 [shape = 's32[2]{0}', space=sflag, size = 0x8, scoped, tag = 'scoped memory for tpu_custom_call.1']
    %16 = vsyncpa [#allocation3], 0
    %s17 = scalar_lea.sflag [#allocation3], 1
    %18 = vsyncpa %s17, 0
    loop: start=0, step=1, limit=4
    $region2: #{tpu_custom_call.1} parent=1 // loop_pre_header
      _
    $region3: #{tpu_custom_call.1} parent=1 // loop_header
      %s20 = sphi 0, %s24
      %p21 = scmp.ge.s32.totalorder %s20, 4
      %s30 = sphi 0, %s32
      %s33 = sphi 0, %s30
      %s34 = sphi 0, %s33
      %s50 = sphi 0, %s34
      %s54 = sphi 0, %s54
      %s56 = sphi 0, %s54
      %s57 = sphi 0, %s56
      %s71 = sphi 0, %s57
      %s75 = sphi 0, %s75
      %s77 = sphi 0, %s75
      %s78 = sphi 0, %s77
      %s92 = sphi 0, %s78
      %s96 = sphi 0, %s96
      %s98 = sphi 0, %s96
      %s99 = sphi 0, %s98
      %s113 = sphi 0, %s99
      %s117 = sphi 0, %s117
      %s119 = sphi 0, %s117
      %s120 = sphi 0, %s119
      %s134 = sphi 0, %s120
      %s138 = sphi 0, %s138
      %s140 = sphi 0, %s138
      %s141 = sphi 0, %s140
      %s155 = sphi 0, %s141
      %s159 = sphi 0, %s159
      %s161 = sphi 0, %s159
      %s162 = sphi 0, %s161
      %s176 = sphi 0, %s162
      %s180 = sphi 0, %s180
      %s182 = sphi 0, %s180
      %s183 = sphi 0, %s182
      %s197 = sphi 0, %s183
      %s201 = sphi 0, %s201
      %s203 = sphi 0, %s201
      %s204 = sphi 0, %s203
      %s218 = sphi 0, %s204
      %s222 = sphi 0, %s222
      %s224 = sphi 0, %s222
      %s225 = sphi 0, %s224
      %s239 = sphi 0, %s225
      %s243 = sphi 0, %s243
      %s245 = sphi 0, %s243
      %s246 = sphi 0, %s245
      %s260 = sphi 0, %s246
      %s266 = sphi 0, %s268
      %s269 = sphi 0, %s266
      %s270 = sphi 0, %s269
      %s286 = sphi 0, %s270
    $region4: #{tpu_custom_call.1} parent=1 // loop_header_branch
      %23 = sbr.rel (%p21) target = $region8
    $region5: #{tpu_custom_call.1} parent=1 // loop_body
      %s25 = ssub.s32 %s20, 1
      %s26 = ssub.s32 %s20, 2
      %s27 = sadd.s32 %s20, 1
      %s28 = ssub.s32 %s20, %s27
      %p29 = scmp.eq.s32.totalorder %s28, 0
      %s31 = sadd.s32 %s30, 1
      %s32 = scalar_select %p29, %s30, %s31
      %p35 = pneg %p29
      %p36 = scmp.eq.s32.totalorder %s20, 1
      %p37 = por %p35, %p36
      %p38 = scmp.ne.s32.totalorder %s30, %s33
      %p39 = scmp.eq.s32.totalorder %s20, 0
      %p40 = por %p38, %p39
      %p41 = scmp.ne.s32.totalorder %s30, %s33
      %p42 = scmp.eq.s32.totalorder %s25, 1
      %p43 = por %p41, %p42
      %p44 = scmp.ne.s32.totalorder %s33, %s34
      %p45 = scmp.eq.s32.totalorder %s25, 0
      %p46 = por %p44, %p45
      %p47 = scmp.ne.s32.totalorder %s33, %s34
      %p48 = scmp.eq.s32.totalorder %s26, 1
      %p49 = por %p47, %p48
      %p51 = scmp.ne.s32.totalorder %s34, %s50
      %p52 = scmp.eq.s32.totalorder %s26, 0
      %p53 = por %p51, %p52
      %s55 = sadd.s32 %s54, 1
      %p58 = scmp.eq.s32.totalorder %s20, 1
      %p59 = scmp.ne.s32.totalorder %s54, %s56
      %p60 = scmp.eq.s32.totalorder %s20, 0
      %p61 = por %p59, %p60
      %p62 = scmp.ne.s32.totalorder %s54, %s56
      %p63 = scmp.eq.s32.totalorder %s25, 1
      %p64 = por %p62, %p63
      %p65 = scmp.ne.s32.totalorder %s56, %s57
      %p66 = scmp.eq.s32.totalorder %s25, 0
      %p67 = por %p65, %p66
      %p68 = scmp.ne.s32.totalorder %s56, %s57
      %p69 = scmp.eq.s32.totalorder %s26, 1
      %p70 = por %p68, %p69
      %p72 = scmp.ne.s32.totalorder %s57, %s71
      %p73 = scmp.eq.s32.totalorder %s26, 0
      %p74 = por %p72, %p73
      %s76 = sadd.s32 %s75, 1
      %p79 = scmp.eq.s32.totalorder %s20, 1
      %p80 = scmp.ne.s32.totalorder %s75, %s77
      %p81 = scmp.eq.s32.totalorder %s20, 0
      %p82 = por %p80, %p81
      %p83 = scmp.ne.s32.totalorder %s75, %s77
      %p84 = scmp.eq.s32.totalorder %s25, 1
      %p85 = por %p83, %p84
      %p86 = scmp.ne.s32.totalorder %s77, %s78
      %p87 = scmp.eq.s32.totalorder %s25, 0
      %p88 = por %p86, %p87
      %p89 = scmp.ne.s32.totalorder %s77, %s78
      %p90 = scmp.eq.s32.totalorder %s26, 1
      %p91 = por %p89, %p90
      %p93 = scmp.ne.s32.totalorder %s78, %s92
      %p94 = scmp.eq.s32.totalorder %s26, 0
      %p95 = por %p93, %p94
      %s97 = sadd.s32 %s96, 1
      %p100 = scmp.eq.s32.totalorder %s20, 1
      %p101 = scmp.ne.s32.totalorder %s96, %s98
      %p102 = scmp.eq.s32.totalorder %s20, 0
      %p103 = por %p101, %p102
      %p104 = scmp.ne.s32.totalorder %s96, %s98
      %p105 = scmp.eq.s32.totalorder %s25, 1
      %p106 = por %p104, %p105
      %p107 = scmp.ne.s32.totalorder %s98, %s99
      %p108 = scmp.eq.s32.totalorder %s25, 0
      %p109 = por %p107, %p108
      %p110 = scmp.ne.s32.totalorder %s98, %s99
      %p111 = scmp.eq.s32.totalorder %s26, 1
      %p112 = por %p110, %p111
      %p114 = scmp.ne.s32.totalorder %s99, %s113
      %p115 = scmp.eq.s32.totalorder %s26, 0
      %p116 = por %p114, %p115
      %s118 = sadd.s32 %s117, 1
      %p121 = scmp.eq.s32.totalorder %s20, 1
      %p122 = scmp.ne.s32.totalorder %s117, %s119
      %p123 = scmp.eq.s32.totalorder %s20, 0
      %p124 = por %p122, %p123
      %p125 = scmp.ne.s32.totalorder %s117, %s119
      %p126 = scmp.eq.s32.totalorder %s25, 1
      %p127 = por %p125, %p126
      %p128 = scmp.ne.s32.totalorder %s119, %s120
      %p129 = scmp.eq.s32.totalorder %s25, 0
      %p130 = por %p128, %p129
      %p131 = scmp.ne.s32.totalorder %s119, %s120
      %p132 = scmp.eq.s32.totalorder %s26, 1
      %p133 = por %p131, %p132
      %p135 = scmp.ne.s32.totalorder %s120, %s134
      %p136 = scmp.eq.s32.totalorder %s26, 0
      %p137 = por %p135, %p136
      %s139 = sadd.s32 %s138, 1
      %p142 = scmp.eq.s32.totalorder %s20, 1
      %p143 = scmp.ne.s32.totalorder %s138, %s140
      %p144 = scmp.eq.s32.totalorder %s20, 0
      %p145 = por %p143, %p144
      %p146 = scmp.ne.s32.totalorder %s138, %s140
      %p147 = scmp.eq.s32.totalorder %s25, 1
      %p148 = por %p146, %p147
      %p149 = scmp.ne.s32.totalorder %s140, %s141
      %p150 = scmp.eq.s32.totalorder %s25, 0
      %p151 = por %p149, %p150
      %p152 = scmp.ne.s32.totalorder %s140, %s141
      %p153 = scmp.eq.s32.totalorder %s26, 1
      %p154 = por %p152, %p153
      %p156 = scmp.ne.s32.totalorder %s141, %s155
      %p157 = scmp.eq.s32.totalorder %s26, 0
      %p158 = por %p156, %p157
      %s160 = sadd.s32 %s159, 1
      %p163 = scmp.eq.s32.totalorder %s20, 1
      %p164 = scmp.ne.s32.totalorder %s159, %s161
      %p165 = scmp.eq.s32.totalorder %s20, 0
      %p166 = por %p164, %p165
      %p167 = scmp.ne.s32.totalorder %s159, %s161
      %p168 = scmp.eq.s32.totalorder %s25, 1
      %p169 = por %p167, %p168
      %p170 = scmp.ne.s32.totalorder %s161, %s162
      %p171 = scmp.eq.s32.totalorder %s25, 0
      %p172 = por %p170, %p171
      %p173 = scmp.ne.s32.totalorder %s161, %s162
      %p174 = scmp.eq.s32.totalorder %s26, 1
      %p175 = por %p173, %p174
      %p177 = scmp.ne.s32.totalorder %s162, %s176
      %p178 = scmp.eq.s32.totalorder %s26, 0
      %p179 = por %p177, %p178
      %s181 = sadd.s32 %s180, 1
      %p184 = scmp.eq.s32.totalorder %s20, 1
      %p185 = scmp.ne.s32.totalorder %s180, %s182
      %p186 = scmp.eq.s32.totalorder %s20, 0
      %p187 = por %p185, %p186
      %p188 = scmp.ne.s32.totalorder %s180, %s182
      %p189 = scmp.eq.s32.totalorder %s25, 1
      %p190 = por %p188, %p189
      %p191 = scmp.ne.s32.totalorder %s182, %s183
      %p192 = scmp.eq.s32.totalorder %s25, 0
      %p193 = por %p191, %p192
      %p194 = scmp.ne.s32.totalorder %s182, %s183
      %p195 = scmp.eq.s32.totalorder %s26, 1
      %p196 = por %p194, %p195
      %p198 = scmp.ne.s32.totalorder %s183, %s197
      %p199 = scmp.eq.s32.totalorder %s26, 0
      %p200 = por %p198, %p199
      %s202 = sadd.s32 %s201, 1
      %p205 = scmp.eq.s32.totalorder %s20, 1
      %p206 = scmp.ne.s32.totalorder %s201, %s203
      %p207 = scmp.eq.s32.totalorder %s20, 0
      %p208 = por %p206, %p207
      %p209 = scmp.ne.s32.totalorder %s201, %s203
      %p210 = scmp.eq.s32.totalorder %s25, 1
      %p211 = por %p209, %p210
      %p212 = scmp.ne.s32.totalorder %s203, %s204
      %p213 = scmp.eq.s32.totalorder %s25, 0
      %p214 = por %p212, %p213
      %p215 = scmp.ne.s32.totalorder %s203, %s204
      %p216 = scmp.eq.s32.totalorder %s26, 1
      %p217 = por %p215, %p216
      %p219 = scmp.ne.s32.totalorder %s204, %s218
      %p220 = scmp.eq.s32.totalorder %s26, 0
      %p221 = por %p219, %p220
      %s223 = sadd.s32 %s222, 1
      %p226 = scmp.eq.s32.totalorder %s20, 1
      %p227 = scmp.ne.s32.totalorder %s222, %s224
      %p228 = scmp.eq.s32.totalorder %s20, 0
      %p229 = por %p227, %p228
      %p230 = scmp.ne.s32.totalorder %s222, %s224
      %p231 = scmp.eq.s32.totalorder %s25, 1
      %p232 = por %p230, %p231
      %p233 = scmp.ne.s32.totalorder %s224, %s225
      %p234 = scmp.eq.s32.totalorder %s25, 0
      %p235 = por %p233, %p234
      %p236 = scmp.ne.s32.totalorder %s224, %s225
      %p237 = scmp.eq.s32.totalorder %s26, 1
      %p238 = por %p236, %p237
      %p240 = scmp.ne.s32.totalorder %s225, %s239
      %p241 = scmp.eq.s32.totalorder %s26, 0
      %p242 = por %p240, %p241
      %s244 = sadd.s32 %s243, 1
      %p247 = scmp.eq.s32.totalorder %s20, 1
      %p248 = scmp.ne.s32.totalorder %s243, %s245
      %p249 = scmp.eq.s32.totalorder %s20, 0
      %p250 = por %p248, %p249
      %p251 = scmp.ne.s32.totalorder %s243, %s245
      %p252 = scmp.eq.s32.totalorder %s25, 1
      %p253 = por %p251, %p252
      %p254 = scmp.ne.s32.totalorder %s245, %s246
      %p255 = scmp.eq.s32.totalorder %s25, 0
      %p256 = por %p254, %p255
      %p257 = scmp.ne.s32.totalorder %s245, %s246
      %p258 = scmp.eq.s32.totalorder %s26, 1
      %p259 = por %p257, %p258
      %p261 = scmp.ne.s32.totalorder %s246, %s260
      %p262 = scmp.eq.s32.totalorder %s26, 0
      %p263 = por %p261, %p262
      %s264 = ssub.s32 %s20, %s27
      %p265 = scmp.eq.s32.totalorder %s264, 0
      %s267 = sadd.s32 %s266, 1
      %s268 = scalar_select %p265, %s266, %s267
      %p271 = pneg %p265
      %p272 = scmp.eq.s32.totalorder %s20, 1
      %p273 = por %p271, %p272
      %p274 = scmp.ne.s32.totalorder %s266, %s269
      %p275 = scmp.eq.s32.totalorder %s20, 0
      %p276 = por %p274, %p275
      %p277 = scmp.ne.s32.totalorder %s266, %s269
      %p278 = scmp.eq.s32.totalorder %s25, 1
      %p279 = por %p277, %p278
      %p280 = scmp.ne.s32.totalorder %s269, %s270
      %p281 = scmp.eq.s32.totalorder %s25, 0
      %p282 = por %p280, %p281
      %p283 = scmp.ne.s32.totalorder %s269, %s270
      %p284 = scmp.eq.s32.totalorder %s26, 1
      %p285 = por %p283, %p284
      %p287 = scmp.ne.s32.totalorder %s270, %s286
      %p288 = scmp.eq.s32.totalorder %s26, 0
      %p289 = por %p287, %p288
      %p290 = scmp.le.s32.totalorder 1, %s20
      %p291 = scmp.lt.s32.totalorder %s20, 3
      %p292 = pnand %p290, %p291
      %p293 = pneg %p292
      // Predicated region
      $region9: #{tpu_custom_call.1} parent=5 // pred_check
        _
      $region10: #{tpu_custom_call.1} parent=5 // pred_check_branch
        %295 = sbr.rel (%p292) target = $region12
      $region11: #{tpu_custom_call.1} parent=5 // pred_region
        %s296 = ssub.s32 %s20, 1
        // Predicated region
        $region13: #{tpu_custom_call.1} parent=11 // pred_check
          %p297 = pneg %p67
        $region14: #{tpu_custom_call.1} parent=11 // pred_check_branch
          %299 = sbr.rel (%p297) target = $region16
        $region15: #{tpu_custom_call.1} parent=11 // pred_region
          _
        $region16: #{tpu_custom_call.1} parent=11 // pred_fallthru
          _
        // Predicated region
        $region17: #{tpu_custom_call.1} parent=11 // pred_check
          %p300 = pneg %p88
        $region18: #{tpu_custom_call.1} parent=11 // pred_check_branch
          %302 = sbr.rel (%p300) target = $region20
        $region19: #{tpu_custom_call.1} parent=11 // pred_region
          _
        $region20: #{tpu_custom_call.1} parent=11 // pred_fallthru
          _
        // Predicated region
        $region21: #{tpu_custom_call.1} parent=11 // pred_check
          %p303 = pneg %p109
        $region22: #{tpu_custom_call.1} parent=11 // pred_check_branch
          %305 = sbr.rel (%p303) target = $region24
        $region23: #{tpu_custom_call.1} parent=11 // pred_region
          _
        $region24: #{tpu_custom_call.1} parent=11 // pred_fallthru
          _
        // Predicated region
        $region25: #{tpu_custom_call.1} parent=11 // pred_check
          %p306 = pneg %p130
        $region26: #{tpu_custom_call.1} parent=11 // pred_check_branch
          %308 = sbr.rel (%p306) target = $region28
        $region27: #{tpu_custom_call.1} parent=11 // pred_region
          _
        $region28: #{tpu_custom_call.1} parent=11 // pred_fallthru
          _
        // Predicated region
        $region29: #{tpu_custom_call.1} parent=11 // pred_check
          %p309 = pneg %p151
        $region30: #{tpu_custom_call.1} parent=11 // pred_check_branch
          %311 = sbr.rel (%p309) target = $region32
        $region31: #{tpu_custom_call.1} parent=11 // pred_region
          _
        $region32: #{tpu_custom_call.1} parent=11 // pred_fallthru
          _
        // Predicated region
        $region33: #{tpu_custom_call.1} parent=11 // pred_check
          %p312 = pneg %p172
        $region34: #{tpu_custom_call.1} parent=11 // pred_check_branch
          %314 = sbr.rel (%p312) target = $region36
        $region35: #{tpu_custom_call.1} parent=11 // pred_region
          _
        $region36: #{tpu_custom_call.1} parent=11 // pred_fallthru
          _
        // Predicated region
        $region37: #{tpu_custom_call.1} parent=11 // pred_check
          %p315 = pneg %p193
        $region38: #{tpu_custom_call.1} parent=11 // pred_check_branch
          %317 = sbr.rel (%p315) target = $region40
        $region39: #{tpu_custom_call.1} parent=11 // pred_region
          _
        $region40: #{tpu_custom_call.1} parent=11 // pred_fallthru
          _
        // Predicated region
        $region41: #{tpu_custom_call.1} parent=11 // pred_check
          %p318 = pneg %p214
        $region42: #{tpu_custom_call.1} parent=11 // pred_check_branch
          %320 = sbr.rel (%p318) target = $region44
        $region43: #{tpu_custom_call.1} parent=11 // pred_region
          _
        $region44: #{tpu_custom_call.1} parent=11 // pred_fallthru
          _
        // Predicated region
        $region45: #{tpu_custom_call.1} parent=11 // pred_check
          %p321 = pneg %p235
        $region46: #{tpu_custom_call.1} parent=11 // pred_check_branch
          %323 = sbr.rel (%p321) target = $region48
        $region47: #{tpu_custom_call.1} parent=11 // pred_region
          _
        $region48: #{tpu_custom_call.1} parent=11 // pred_fallthru
          _
        // Predicated region
        $region49: #{tpu_custom_call.1} parent=11 // pred_check
          %p324 = pneg %p256
        $region50: #{tpu_custom_call.1} parent=11 // pred_check_branch
          %326 = sbr.rel (%p324) target = $region52
        $region51: #{tpu_custom_call.1} parent=11 // pred_region
          _
        $region52: #{tpu_custom_call.1} parent=11 // pred_fallthru
          _
      $region12: #{tpu_custom_call.1} parent=5 // pred_fallthru
        _
      %p327 = scmp.lt.s32.totalorder %s20, 2
      // Predicated region
      $region53: #{tpu_custom_call.1} parent=5 // pred_check
        %p328 = pneg %p327
      $region54: #{tpu_custom_call.1} parent=5 // pred_check_branch
        %330 = sbr.rel (%p328) target = $region56
      $region55: #{tpu_custom_call.1} parent=5 // pred_region
        // Predicated region
        $region57: #{tpu_custom_call.1} parent=55 // pred_check
          %p331 = pneg %p40
        $region58: #{tpu_custom_call.1} parent=55 // pred_check_branch
          %333 = sbr.rel (%p331) target = $region60
        $region59: #{tpu_custom_call.1} parent=55 // pred_region
          %p334 = scmp.lt.s32.totalorder %s20, 1
          %s335 = scalar_select %p334, %s20, 1
          %s336 = smul.addr %s335, 16
          %s337 = smul.addr %s336, 4
          %s338 = scalar_lea.vmem %s0, %s337
        $region60: #{tpu_custom_call.1} parent=55 // pred_fallthru
          _
      $region56: #{tpu_custom_call.1} parent=5 // pred_fallthru
        _
      %p339 = scmp.le.s32.totalorder 1, %s20
      %p340 = scmp.lt.s32.totalorder %s20, 3
      %p341 = pnand %p339, %p340
      %p342 = pneg %p341
      // Predicated region
      $region61: #{tpu_custom_call.1} parent=5 // pred_check
        _
      $region62: #{tpu_custom_call.1} parent=5 // pred_check_branch
        %344 = sbr.rel (%p341) target = $region64
      $region63: #{tpu_custom_call.1} parent=5 // pred_region
        %s345 = ssub.s32 %s20, 1
        %p346 = scmp.lt.s32.totalorder %s25, 1
        %s347 = scalar_select %p346, %s25, 1
        %s348 = smul.addr %s347, 16
        %s349 = smul.addr %s348, 4
        %s350 = scalar_lea.vmem %s0, %s349
        %p351 = pneg %p46
        %p352 = pneg %p43
        %p353 = pneg %p67
        %p354 = pneg %p64
        %p355 = pneg %p88
        %p356 = pneg %p85
        %p357 = pneg %p109
        %p358 = pneg %p106
        %p359 = pneg %p130
        %p360 = pneg %p127
        %p361 = pneg %p151
        %p362 = pneg %p148
        %p363 = pneg %p172
        %p364 = pneg %p169
        %p365 = pneg %p193
        %p366 = pneg %p190
        %p367 = pneg %p214
        %p368 = pneg %p211
        %p369 = pneg %p235
        %p370 = pneg %p232
        %p371 = pneg %p256
        %p372 = pneg %p253
        %p373 = pneg %p282
        %p374 = pneg %p279
        %s375 = sand.u32 %s269, 1
        %s376 = scalar_lea.sflag [#allocation3], %s375
        %s377 = sand.u32 %s269, 1
        %s378 = smul.addr %s377, 576
        %s379 = scalar_lea.vmem [#allocation2], %s378
        %p380 = scmp.lt.s32.totalorder %s25, 1
        %s381 = scalar_select %p380, %s25, 1
        %s382 = smul.addr %s381, 16
        %s383 = smul.addr %s382, 4
        %s384 = scalar_lea.vmem %s0, %s383
        %v385 = vld [vmem:[%s384] sm:$0xff]
        %v386 = vld [vmem:[%s384 + $0x8] sm:$0xff]
        %v387 = vld [vmem:[%s384 + $0x10] sm:$0xff]
        %v388 = vld [vmem:[%s384 + $0x18] sm:$0xff]
        %v389 = vld [vmem:[%s384 + $0x20] sm:$0xff]
        %v390 = vld [vmem:[%s384 + $0x28] sm:$0xff]
        %v391 = vld [vmem:[%s384 + $0x30] sm:$0xff]
        %v392 = vld [vmem:[%s384 + $0x38] sm:$0xff]
        %v393 = vunpack.c.l.bf16 %v385
        %v394 = vunpack.c.h.bf16 %v385
        %v395 = vunpack.c.l.bf16 %v386
        %v396 = vunpack.c.h.bf16 %v386
        %v397 = vunpack.c.l.bf16 %v387
        %v398 = vunpack.c.h.bf16 %v387
        %v399 = vunpack.c.l.bf16 %v388
        %v400 = vunpack.c.h.bf16 %v388
        %v401 = vunpack.c.l.bf16 %v389
        %v402 = vunpack.c.h.bf16 %v389
        %v403 = vunpack.c.l.bf16 %v390
        %v404 = vunpack.c.h.bf16 %v390
        %v405 = vunpack.c.l.bf16 %v391
        %v406 = vunpack.c.h.bf16 %v391
        %v407 = vunpack.c.l.bf16 %v392
        %v408 = vunpack.c.h.bf16 %v392
        %409 = vst [vmem:[%s379] sm:$0xff] %v385
        %410 = vst [vmem:[%s379 + $0x8] sm:$0xff] %v386
        %411 = vst [vmem:[%s379 + $0x10] sm:$0xff] %v387
        %412 = vst [vmem:[%s379 + $0x18] sm:$0xff] %v388
        %413 = vst [vmem:[%s379 + $0x20] sm:$0xff] %v389
        %414 = vst [vmem:[%s379 + $0x28] sm:$0xff] %v390
        %415 = vst [vmem:[%s379 + $0x30] sm:$0xff] %v391
        %416 = vst [vmem:[%s379 + $0x38] sm:$0xff] %v392
        %v417 = vld [vmem:[%s3] sm:$0xff]
        %v418 = vld [vmem:[%s3 + $0x8] sm:$0xff]
        %v419 = vld [vmem:[%s3 + $0x10] sm:$0xff]
        %v420 = vld [vmem:[%s3 + $0x18] sm:$0xff]
        %v421 = vld [vmem:[%s3 + $0x20] sm:$0xff]
        %v422 = vld [vmem:[%s3 + $0x28] sm:$0xff]
        %v423 = vld [vmem:[%s3 + $0x30] sm:$0xff]
        %v424 = vld [vmem:[%s3 + $0x38] sm:$0xff]
        %v425 = vld [vmem:[%s3 + $0x40] sm:$0xff]
        %v426 = vld [vmem:[%s3 + $0x48] sm:$0xff]
        %v427 = vld [vmem:[%s3 + $0x50] sm:$0xff]
        %v428 = vld [vmem:[%s3 + $0x58] sm:$0xff]
        %v429 = vld [vmem:[%s3 + $0x60] sm:$0xff]
        %v430 = vld [vmem:[%s3 + $0x68] sm:$0xff]
        %v431 = vld [vmem:[%s3 + $0x70] sm:$0xff]
        %v432 = vld [vmem:[%s3 + $0x78] sm:$0xff]
        %v433 = vld [vmem:[%s3 + $0x80] sm:$0xff]
        %v434 = vld [vmem:[%s3 + $0x88] sm:$0xff]
        %v435 = vld [vmem:[%s3 + $0x90] sm:$0xff]
        %v436 = vld [vmem:[%s3 + $0x98] sm:$0xff]
        %v437 = vld [vmem:[%s3 + $0xa0] sm:$0xff]
        %v438 = vld [vmem:[%s3 + $0xa8] sm:$0xff]
        %v439 = vld [vmem:[%s3 + $0xb0] sm:$0xff]
        %v440 = vld [vmem:[%s3 + $0xb8] sm:$0xff]
        %v441 = vld [vmem:[%s3 + $0xc0] sm:$0xff]
        %v442 = vld [vmem:[%s3 + $0xc8] sm:$0xff]
        %v443 = vld [vmem:[%s3 + $0xd0] sm:$0xff]
        %v444 = vld [vmem:[%s3 + $0xd8] sm:$0xff]
        %v445 = vld [vmem:[%s3 + $0xe0] sm:$0xff]
        %v446 = vld [vmem:[%s3 + $0xe8] sm:$0xff]
        %v447 = vld [vmem:[%s3 + $0xf0] sm:$0xff]
        %v448 = vld [vmem:[%s3 + $0xf8] sm:$0xff]
        %v449 = vld [vmem:[%s3 + $0x100] sm:$0xff]
        %v450 = vld [vmem:[%s3 + $0x108] sm:$0xff]
        %v451 = vld [vmem:[%s3 + $0x110] sm:$0xff]
        %v452 = vld [vmem:[%s3 + $0x118] sm:$0xff]
        %v453 = vld [vmem:[%s3 + $0x120] sm:$0xff]
        %v454 = vld [vmem:[%s3 + $0x128] sm:$0xff]
        %v455 = vld [vmem:[%s3 + $0x130] sm:$0xff]
        %v456 = vld [vmem:[%s3 + $0x138] sm:$0xff]
        %v457 = vld [vmem:[%s3 + $0x140] sm:$0xff]
        %v458 = vld [vmem:[%s3 + $0x148] sm:$0xff]
        %v459 = vld [vmem:[%s3 + $0x150] sm:$0xff]
        %v460 = vld [vmem:[%s3 + $0x158] sm:$0xff]
        %v461 = vld [vmem:[%s3 + $0x160] sm:$0xff]
        %v462 = vld [vmem:[%s3 + $0x168] sm:$0xff]
        %v463 = vld [vmem:[%s3 + $0x170] sm:$0xff]
        %v464 = vld [vmem:[%s3 + $0x178] sm:$0xff]
        %v465 = vld [vmem:[%s3 + $0x180] sm:$0xff]
        %v466 = vld [vmem:[%s3 + $0x188] sm:$0xff]
        %v467 = vld [vmem:[%s3 + $0x190] sm:$0xff]
        %v468 = vld [vmem:[%s3 + $0x198] sm:$0xff]
        %v469 = vld [vmem:[%s3 + $0x1a0] sm:$0xff]
        %v470 = vld [vmem:[%s3 + $0x1a8] sm:$0xff]
        %v471 = vld [vmem:[%s3 + $0x1b0] sm:$0xff]
        %v472 = vld [vmem:[%s3 + $0x1b8] sm:$0xff]
        %v473 = vld [vmem:[%s3 + $0x1c0] sm:$0xff]
        %v474 = vld [vmem:[%s3 + $0x1c8] sm:$0xff]
        %v475 = vld [vmem:[%s3 + $0x1d0] sm:$0xff]
        %v476 = vld [vmem:[%s3 + $0x1d8] sm:$0xff]
        %v477 = vld [vmem:[%s3 + $0x1e0] sm:$0xff]
        %v478 = vld [vmem:[%s3 + $0x1e8] sm:$0xff]
        %v479 = vld [vmem:[%s3 + $0x1f0] sm:$0xff]
        %v480 = vld [vmem:[%s3 + $0x1f8] sm:$0xff]
        %481 = vmatprep.subr.mxu0 0.0
        %482 = vmatpush1.msra.mxu0 %v417
        %483 = vmatprep.subr.mxu0 0.0
        %484 = vmatpush1.msra.mxu0 %v418
        %485 = vmatprep.subr.mxu0 0.0
        %486 = vmatpush1.msra.mxu0 %v419
        %487 = vmatprep.subr.mxu0 0.0
        %488 = vmatpush1.msra.mxu0 %v420
        %489 = vmatprep.subr.mxu0 0.0
        %490 = vmatpush1.msra.mxu0 %v421
        %491 = vmatprep.subr.mxu0 0.0
        %492 = vmatpush1.msra.mxu0 %v422
        %493 = vmatprep.subr.mxu0 0.0
        %494 = vmatpush1.msra.mxu0 %v423
        %495 = vmatprep.subr.mxu0 0.0
        %496 = vmatpush1.msra.mxu0 %v424
        %497 = vmatprep.subr.mxu0 0.0
        %498 = vmatpush1.msra.mxu0 %v425
        %499 = vmatprep.subr.mxu0 0.0
        %500 = vmatpush1.msra.mxu0 %v426
        %501 = vmatprep.subr.mxu0 0.0
        %502 = vmatpush1.msra.mxu0 %v427
        %503 = vmatprep.subr.mxu0 0.0
        %504 = vmatpush1.msra.mxu0 %v428
        %505 = vmatprep.subr.mxu0 0.0
        %506 = vmatpush1.msra.mxu0 %v429
        %507 = vmatprep.subr.mxu0 0.0
        %508 = vmatpush1.msra.mxu0 %v430
        %509 = vmatprep.subr.mxu0 0.0
        %510 = vmatpush1.msra.mxu0 %v431
        %511 = vmatprep.subr.mxu0 0.0
        %512 = vmatpush1.msra.mxu0 %v432
        %513 = vmatprep.subr.mxu0 0.0
        %514 = vmatpush1.msra.mxu0 %v433
        %515 = vmatprep.subr.mxu0 0.0
        %516 = vmatpush1.msra.mxu0 %v434
        %517 = vmatprep.subr.mxu0 0.0
        %518 = vmatpush1.msra.mxu0 %v435
        %519 = vmatprep.subr.mxu0 0.0
        %520 = vmatpush1.msra.mxu0 %v436
        %521 = vmatprep.subr.mxu0 0.0
        %522 = vmatpush1.msra.mxu0 %v437
        %523 = vmatprep.subr.mxu0 0.0
        %524 = vmatpush1.msra.mxu0 %v438
        %525 = vmatprep.subr.mxu0 0.0
        %526 = vmatpush1.msra.mxu0 %v439
        %527 = vmatprep.subr.mxu0 0.0
        %528 = vmatpush1.msra.mxu0 %v440
        %529 = vmatprep.subr.mxu0 0.0
        %530 = vmatpush1.msra.mxu0 %v441
        %531 = vmatprep.subr.mxu0 0.0
        %532 = vmatpush1.msra.mxu0 %v442
        %533 = vmatprep.subr.mxu0 0.0
        %534 = vmatpush1.msra.mxu0 %v443
        %535 = vmatprep.subr.mxu0 0.0
        %536 = vmatpush1.msra.mxu0 %v444
        %537 = vmatprep.subr.mxu0 0.0
        %538 = vmatpush1.msra.mxu0 %v445
        %539 = vmatprep.subr.mxu0 0.0
        %540 = vmatpush1.msra.mxu0 %v446
        %541 = vmatprep.subr.mxu0 0.0
        %542 = vmatpush1.msra.mxu0 %v447
        %543 = vmatprep.subr.mxu0 0.0
        %544 = vmatpush1.msra.mxu0 %v448
        %545 = vmatprep.mubr.f32.mxu0 %v394
        %546 = vmatmul.mubr.f32.gmra.mrb[0].mxu0 %v393
        %v547 = vpop.f32.mrb[0].mxu0
        %v548 = vadd.f32 0.0, %v547
        %v549 = vpop.f32.mrb[0].mxu0
        %550 = vmatprep.mubr.f32.mxu0 %v398
        %551 = vmatmul.mubr.f32.gmra.mrb[0].mxu0 %v397
        %v552 = vpop.f32.mrb[0].mxu0
        %v553 = vadd.f32 0.0, %v552
        %v554 = vpop.f32.mrb[0].mxu0
        %555 = vmatprep.mubr.f32.mxu0 %v402
        %556 = vmatmul.mubr.f32.gmra.mrb[0].mxu0 %v401
        %v557 = vpop.f32.mrb[0].mxu0
        %v558 = vadd.f32 0.0, %v557
        %v559 = vpop.f32.mrb[0].mxu0
        %560 = vmatprep.mubr.f32.mxu0 %v406
        %561 = vmatmul.mubr.f32.gmra.mrb[0].mxu0 %v405
        %v562 = vpop.f32.mrb[0].mxu0
        %v563 = vadd.f32 0.0, %v562
        %v564 = vpop.f32.mrb[0].mxu0
        %565 = vdwg.mxu0
        %566 = vmatprep.subr.mxu0 0.0
        %567 = vmatpush1.msra.mxu0 %v449
        %568 = vmatprep.subr.mxu0 0.0
        %569 = vmatpush1.msra.mxu0 %v450
        %570 = vmatprep.subr.mxu0 0.0
        %571 = vmatpush1.msra.mxu0 %v451
        %572 = vmatprep.subr.mxu0 0.0
        %573 = vmatpush1.msra.mxu0 %v452
        %574 = vmatprep.subr.mxu0 0.0
        %575 = vmatpush1.msra.mxu0 %v453
        %576 = vmatprep.subr.mxu0 0.0
        %577 = vmatpush1.msra.mxu0 %v454
        %578 = vmatprep.subr.mxu0 0.0
        %579 = vmatpush1.msra.mxu0 %v455
        %580 = vmatprep.subr.mxu0 0.0
        %581 = vmatpush1.msra.mxu0 %v456
        %582 = vmatprep.subr.mxu0 0.0
        %583 = vmatpush1.msra.mxu0 %v457
        %584 = vmatprep.subr.mxu0 0.0
        %585 = vmatpush1.msra.mxu0 %v458
        %586 = vmatprep.subr.mxu0 0.0
        %587 = vmatpush1.msra.mxu0 %v459
        %588 = vmatprep.subr.mxu0 0.0
        %589 = vmatpush1.msra.mxu0 %v460
        %590 = vmatprep.subr.mxu0 0.0
        %591 = vmatpush1.msra.mxu0 %v461
        %592 = vmatprep.subr.mxu0 0.0
        %593 = vmatpush1.msra.mxu0 %v462
        %594 = vmatprep.subr.mxu0 0.0
        %595 = vmatpush1.msra.mxu0 %v463
        %596 = vmatprep.subr.mxu0 0.0
        %597 = vmatpush1.msra.mxu0 %v464
        %598 = vmatprep.subr.mxu0 0.0
        %599 = vmatpush1.msra.mxu0 %v465
        %600 = vmatprep.subr.mxu0 0.0
        %601 = vmatpush1.msra.mxu0 %v466
        %602 = vmatprep.subr.mxu0 0.0
        %603 = vmatpush1.msra.mxu0 %v467
        %604 = vmatprep.subr.mxu0 0.0
        %605 = vmatpush1.msra.mxu0 %v468
        %606 = vmatprep.subr.mxu0 0.0
        %607 = vmatpush1.msra.mxu0 %v469
        %608 = vmatprep.subr.mxu0 0.0
        %609 = vmatpush1.msra.mxu0 %v470
        %610 = vmatprep.subr.mxu0 0.0
        %611 = vmatpush1.msra.mxu0 %v471
        %612 = vmatprep.subr.mxu0 0.0
        %613 = vmatpush1.msra.mxu0 %v472
        %614 = vmatprep.subr.mxu0 0.0
        %615 = vmatpush1.msra.mxu0 %v473
        %616 = vmatprep.subr.mxu0 0.0
        %617 = vmatpush1.msra.mxu0 %v474
        %618 = vmatprep.subr.mxu0 0.0
        %619 = vmatpush1.msra.mxu0 %v475
        %620 = vmatprep.subr.mxu0 0.0
        %621 = vmatpush1.msra.mxu0 %v476
        %622 = vmatprep.subr.mxu0 0.0
        %623 = vmatpush1.msra.mxu0 %v477
        %624 = vmatprep.subr.mxu0 0.0
        %625 = vmatpush1.msra.mxu0 %v478
        %626 = vmatprep.subr.mxu0 0.0
        %627 = vmatpush1.msra.mxu0 %v479
        %628 = vmatprep.subr.mxu0 0.0
        %629 = vmatpush1.msra.mxu0 %v480
        %630 = vmatprep.mubr.f32.mxu0 %v396
        %631 = vmatmul.mubr.f32.gmra.mrb[0].mxu0 %v395
        %v632 = vpop.f32.mrb[0].mxu0
        %v633 = vadd.f32 %v548, %v632
        %v634 = vpop.f32.mrb[0].mxu0
        %635 = vmatprep.mubr.f32.mxu0 %v400
        %636 = vmatmul.mubr.f32.gmra.mrb[0].mxu0 %v399
        %v637 = vpop.f32.mrb[0].mxu0
        %v638 = vadd.f32 %v553, %v637
        %v639 = vpop.f32.mrb[0].mxu0
        %640 = vmatprep.mubr.f32.mxu0 %v404
        %641 = vmatmul.mubr.f32.gmra.mrb[0].mxu0 %v403
        %v642 = vpop.f32.mrb[0].mxu0
        %v643 = vadd.f32 %v558, %v642
        %v644 = vpop.f32.mrb[0].mxu0
        %645 = vmatprep.mubr.f32.mxu0 %v408
        %646 = vmatmul.mubr.f32.gmra.mrb[0].mxu0 %v407
        %v647 = vpop.f32.mrb[0].mxu0
        %v648 = vadd.f32 %v563, %v647
        %v649 = vpop.f32.mrb[0].mxu0
        %650 = vdwg.mxu0
        %v651 = vld [vmem:[%s1] sm:$0xff]
        %v652 = vld [vmem:[%s1 + $0x8] sm:$0xff]
        %v653 = vld [vmem:[%s1 + $0x10] sm:$0xff]
        %v654 = vld [vmem:[%s1 + $0x18] sm:$0xff]
        %v655 = vld [vmem:[%s1 + $0x20] sm:$0xff]
        %v656 = vld [vmem:[%s1 + $0x28] sm:$0xff]
        %v657 = vld [vmem:[%s1 + $0x30] sm:$0xff]
        %v658 = vld [vmem:[%s1 + $0x38] sm:$0xff]
        %v659 = vld [vmem:[%s2] sm:$0xff]
        %v660 = vld [vmem:[%s2 + $0x8] sm:$0xff]
        %v661 = vld [vmem:[%s2 + $0x10] sm:$0xff]
        %v662 = vld [vmem:[%s2 + $0x18] sm:$0xff]
        %v663 = vld [vmem:[%s2 + $0x20] sm:$0xff]
        %v664 = vld [vmem:[%s2 + $0x28] sm:$0xff]
        %v665 = vld [vmem:[%s2 + $0x30] sm:$0xff]
        %v666 = vld [vmem:[%s2 + $0x38] sm:$0xff]
        %vm667 = vcmask 261120
        %v669 = vsel %vm667, %v651, 0
        %v672 = vsel %vm667, %v652, 0
        %v675 = vsel %vm667, %v653, 0
        %v678 = vsel %vm667, %v654, 0
        %v681 = vsel %vm667, %v655, 0
        %v684 = vsel %vm667, %v656, 0
        %v687 = vsel %vm667, %v657, 0
        %v690 = vsel %vm667, %v658, 0
        %692 = vmatprep.subr.mxu0 0.0
        %693 = vmatpush1.msra.mxu0 %v633
        %694 = vmatprep.subr.mxu0 0.0
        %695 = vmatpush1.msra.mxu0 %v638
        %696 = vmatprep.subr.mxu0 0.0
        %697 = vmatpush1.msra.mxu0 %v643
        %698 = vmatprep.subr.mxu0 0.0
        %699 = vmatpush1.msra.mxu0 %v648
        %700 = vmatprep.subr.mxu0 0.0
        %701 = vmatpush1.msra.mxu0 0.0
        %702 = vmatprep.subr.mxu0 0.0
        %703 = vmatpush1.msra.mxu0 0.0
        %704 = vmatprep.subr.mxu0 0.0
        %705 = vmatpush1.msra.mxu0 0.0
        %706 = vmatprep.subr.mxu0 0.0
        %707 = vmatpush1.msra.mxu0 0.0
        %708 = vmatprep.subr.mxu0 0.0
        %709 = vmatpush1.msra.mxu0 0.0
        %710 = vmatprep.subr.mxu0 0.0
        %711 = vmatpush1.msra.mxu0 0.0
        %712 = vmatprep.subr.mxu0 0.0
        %713 = vmatpush1.msra.mxu0 0.0
        %714 = vmatprep.subr.mxu0 0.0
        %715 = vmatpush1.msra.mxu0 0.0
        %716 = vmatprep.subr.mxu0 0.0
        %717 = vmatpush1.msra.mxu0 0.0
        %718 = vmatprep.subr.mxu0 0.0
        %719 = vmatpush1.msra.mxu0 0.0
        %720 = vmatprep.subr.mxu0 0.0
        %721 = vmatpush1.msra.mxu0 0.0
        %722 = vmatprep.subr.mxu0 0.0
        %723 = vmatpush1.msra.mxu0 0.0
        %724 = vmatprep.subr.mxu0 0.0
        %725 = vmatpush1.msra.mxu0 0.0
        %726 = vmatprep.subr.mxu0 0.0
        %727 = vmatpush1.msra.mxu0 0.0
        %728 = vmatprep.subr.mxu0 0.0
        %729 = vmatpush1.msra.mxu0 0.0
        %730 = vmatprep.subr.mxu0 0.0
        %731 = vmatpush1.msra.mxu0 0.0
        %732 = vmatprep.subr.mxu0 0.0
        %733 = vmatpush1.msra.mxu0 0.0
        %734 = vmatprep.subr.mxu0 0.0
        %735 = vmatpush1.msra.mxu0 0.0
        %736 = vmatprep.subr.mxu0 0.0
        %737 = vmatpush1.msra.mxu0 0.0
        %738 = vmatprep.subr.mxu0 0.0
        %739 = vmatpush1.msra.mxu0 0.0
        %740 = vmatprep.subr.mxu0 0.0
        %741 = vmatpush1.msra.mxu0 0.0
        %742 = vmatprep.subr.mxu0 0.0
        %743 = vmatpush1.msra.mxu0 0.0
        %744 = vmatprep.subr.mxu0 0.0
        %745 = vmatpush1.msra.mxu0 0.0
        %746 = vmatprep.subr.mxu0 0.0
        %747 = vmatpush1.msra.mxu0 0.0
        %748 = vmatprep.subr.mxu0 0.0
        %749 = vmatpush1.msra.mxu0 0.0
        %750 = vmatprep.subr.mxu0 0.0
        %751 = vmatpush1.msra.mxu0 0.0
        %752 = vmatprep.subr.mxu0 0.0
        %753 = vmatpush1.msra.mxu0 0.0
        %754 = vmatprep.subr.mxu0 0.0
        %755 = vmatpush1.msra.mxu0 0.0
        %756 = vmatprep.mubr.f32.mxu0 0.0
        %757 = vmatmul.mubr.f32.gmra.mrb[0].mxu0 %v669
        %v758 = vpop.f32.mrb[0].mxu0
        %v759 = vadd.f32 %v659, %v758
        %v760 = vpop.f32.mrb[0].mxu0
        %761 = vmatprep.mubr.f32.mxu0 0.0
        %762 = vmatmul.mubr.f32.gmra.mrb[0].mxu0 %v672
        %v763 = vpop.f32.mrb[0].mxu0
        %v764 = vadd.f32 %v660, %v763
        %v765 = vpop.f32.mrb[0].mxu0
        %766 = vmatprep.mubr.f32.mxu0 0.0
        %767 = vmatmul.mubr.f32.gmra.mrb[0].mxu0 %v675
        %v768 = vpop.f32.mrb[0].mxu0
        %v769 = vadd.f32 %v661, %v768
        %v770 = vpop.f32.mrb[0].mxu0
        %771 = vmatprep.mubr.f32.mxu0 0.0
        %772 = vmatmul.mubr.f32.gmra.mrb[0].mxu0 %v678
        %v773 = vpop.f32.mrb[0].mxu0
        %v774 = vadd.f32 %v662, %v773
        %v775 = vpop.f32.mrb[0].mxu0
        %776 = vmatprep.mubr.f32.mxu0 0.0
        %777 = vmatmul.mubr.f32.gmra.mrb[0].mxu0 %v681
        %v778 = vpop.f32.mrb[0].mxu0
        %v779 = vadd.f32 %v663, %v778
        %v780 = vpop.f32.mrb[0].mxu0
        %781 = vmatprep.mubr.f32.mxu0 0.0
        %782 = vmatmul.mubr.f32.gmra.mrb[0].mxu0 %v684
        %v783 = vpop.f32.mrb[0].mxu0
        %v784 = vadd.f32 %v664, %v783
        %v785 = vpop.f32.mrb[0].mxu0
        %786 = vmatprep.mubr.f32.mxu0 0.0
        %787 = vmatmul.mubr.f32.gmra.mrb[0].mxu0 %v687
        %v788 = vpop.f32.mrb[0].mxu0
        %v789 = vadd.f32 %v665, %v788
        %v790 = vpop.f32.mrb[0].mxu0
        %791 = vmatprep.mubr.f32.mxu0 0.0
        %792 = vmatmul.mubr.f32.gmra.mrb[0].mxu0 %v690
        %v793 = vpop.f32.mrb[0].mxu0
        %v794 = vadd.f32 %v666, %v793
        %v795 = vpop.f32.mrb[0].mxu0
        %796 = vdwg.mxu0
        %v797 = vmax.f32 %v759, 0.0
        %v798 = vmax.f32 %v764, 0.0
        %v799 = vmax.f32 %v769, 0.0
        %v800 = vmax.f32 %v774, 0.0
        %v801 = vmax.f32 %v779, 0.0
        %v802 = vmax.f32 %v784, 0.0
        %v803 = vmax.f32 %v789, 0.0
        %v804 = vmax.f32 %v794, 0.0
        %v805 = vld [vmem:[%s7] sm:$0xf]
        %v807 = vlaneseq
        %v808 = vshrl.u32 %v807, 7
        %v809 = vsub.s32 0, %v808
        %v810 = vrot.slane %v805, %v809
        %v811 = vlaneseq
        %v812 = vshrl.u32 %v811, 7
        %v813 = vsub.s32 1, %v812
        %v814 = vrot.slane %v805, %v813
        %v815 = vlaneseq
        %v816 = vshrl.u32 %v815, 7
        %v817 = vsub.s32 2, %v816
        %v818 = vrot.slane %v805, %v817
        %v819 = vlaneseq
        %v820 = vshrl.u32 %v819, 7
        %v821 = vsub.s32 3, %v820
        %v822 = vrot.slane %v805, %v821
        %vm823 = vcmask 7168
        %v825 = vsel %vm823, %v797, 0
        %v828 = vsel %vm823, %v798, 0
        %v831 = vsel %vm823, %v799, 0
        %v834 = vsel %vm823, %v800, 0
        %v837 = vsel %vm823, %v801, 0
        %v840 = vsel %vm823, %v802, 0
        %v843 = vsel %vm823, %v803, 0
        %v846 = vsel %vm823, %v804, 0
        %vm848 = vcmask 1040384
        %v849 = vsel %vm848, %v810, 0
        %v851 = vsel %vm848, %v814, 0
        %v853 = vsel %vm848, %v818, 0
        %v855 = vsel %vm848, %v822, 0
        %857 = vmatprep.subr.mxu0 %v851
        %858 = vmatpush1.msra.mxu0 %v849
        %859 = vmatprep.subr.mxu0 0.0
        %860 = vmatpush1.msra.mxu0 0.0
        %861 = vmatprep.subr.mxu0 0.0
        %862 = vmatpush1.msra.mxu0 0.0
        %863 = vmatprep.subr.mxu0 0.0
        %864 = vmatpush1.msra.mxu0 0.0
        %865 = vmatprep.subr.mxu0 0.0
        %866 = vmatpush1.msra.mxu0 0.0
        %867 = vmatprep.subr.mxu0 0.0
        %868 = vmatpush1.msra.mxu0 0.0
        %869 = vmatprep.subr.mxu0 0.0
        %870 = vmatpush1.msra.mxu0 0.0
        %871 = vmatprep.subr.mxu0 0.0
        %872 = vmatpush1.msra.mxu0 0.0
        %873 = vmatprep.subr.mxu0 0.0
        %874 = vmatpush1.msra.mxu0 0.0
        %875 = vmatprep.subr.mxu0 0.0
        %876 = vmatpush1.msra.mxu0 0.0
        %877 = vmatprep.subr.mxu0 0.0
        %878 = vmatpush1.msra.mxu0 0.0
        %879 = vmatprep.subr.mxu0 0.0
        %880 = vmatpush1.msra.mxu0 0.0
        %881 = vmatprep.subr.mxu0 0.0
        %882 = vmatpush1.msra.mxu0 0.0
        %883 = vmatprep.subr.mxu0 0.0
        %884 = vmatpush1.msra.mxu0 0.0
        %885 = vmatprep.subr.mxu0 0.0
        %886 = vmatpush1.msra.mxu0 0.0
        %887 = vmatprep.subr.mxu0 0.0
        %888 = vmatpush1.msra.mxu0 0.0
        %889 = vmatprep.subr.mxu0 0.0
        %890 = vmatpush1.msra.mxu0 0.0
        %891 = vmatprep.subr.mxu0 0.0
        %892 = vmatpush1.msra.mxu0 0.0
        %893 = vmatprep.subr.mxu0 0.0
        %894 = vmatpush1.msra.mxu0 0.0
        %895 = vmatprep.subr.mxu0 0.0
        %896 = vmatpush1.msra.mxu0 0.0
        %897 = vmatprep.subr.mxu0 0.0
        %898 = vmatpush1.msra.mxu0 0.0
        %899 = vmatprep.subr.mxu0 0.0
        %900 = vmatpush1.msra.mxu0 0.0
        %901 = vmatprep.subr.mxu0 0.0
        %902 = vmatpush1.msra.mxu0 0.0
        %903 = vmatprep.subr.mxu0 0.0
        %904 = vmatpush1.msra.mxu0 0.0
        %905 = vmatprep.subr.mxu0 0.0
        %906 = vmatpush1.msra.mxu0 0.0
        %907 = vmatprep.subr.mxu0 0.0
        %908 = vmatpush1.msra.mxu0 0.0
        %909 = vmatprep.subr.mxu0 0.0
        %910 = vmatpush1.msra.mxu0 0.0
        %911 = vmatprep.subr.mxu0 0.0
        %912 = vmatpush1.msra.mxu0 0.0
        %913 = vmatprep.subr.mxu0 0.0
        %914 = vmatpush1.msra.mxu0 0.0
        %915 = vmatprep.subr.mxu0 0.0
        %916 = vmatpush1.msra.mxu0 0.0
        %917 = vmatprep.subr.mxu0 0.0
        %918 = vmatpush1.msra.mxu0 0.0
        %919 = vmatprep.subr.mxu0 0.0
        %920 = vmatpush1.msra.mxu0 0.0
        %921 = vmatprep.mubr.f32.mxu0 0.0
        %922 = vmatmul.mubr.f32.gmra.mrb[0].mxu0 %v825
        %v923 = vpop.f32.mrb[0].mxu0
        %v924 = vadd.f32 0.0, %v923
        %v925 = vpop.f32.mrb[0].mxu0
        %v926 = vadd.f32 0.0, %v925
        %927 = vmatprep.mubr.f32.mxu0 0.0
        %928 = vmatmul.mubr.f32.gmra.mrb[0].mxu0 %v828
        %v929 = vpop.f32.mrb[0].mxu0
        %v930 = vadd.f32 0.0, %v929
        %v931 = vpop.f32.mrb[0].mxu0
        %v932 = vadd.f32 0.0, %v931
        %933 = vmatprep.mubr.f32.mxu0 0.0
        %934 = vmatmul.mubr.f32.gmra.mrb[0].mxu0 %v831
        %v935 = vpop.f32.mrb[0].mxu0
        %v936 = vadd.f32 0.0, %v935
        %v937 = vpop.f32.mrb[0].mxu0
        %v938 = vadd.f32 0.0, %v937
        %939 = vmatprep.mubr.f32.mxu0 0.0
        %940 = vmatmul.mubr.f32.gmra.mrb[0].mxu0 %v834
        %v941 = vpop.f32.mrb[0].mxu0
        %v942 = vadd.f32 0.0, %v941
        %v943 = vpop.f32.mrb[0].mxu0
        %v944 = vadd.f32 0.0, %v943
        %945 = vmatprep.mubr.f32.mxu0 0.0
        %946 = vmatmul.mubr.f32.gmra.mrb[0].mxu0 %v837
        %v947 = vpop.f32.mrb[0].mxu0
        %v948 = vadd.f32 0.0, %v947
        %v949 = vpop.f32.mrb[0].mxu0
        %v950 = vadd.f32 0.0, %v949
        %951 = vmatprep.mubr.f32.mxu0 0.0
        %952 = vmatmul.mubr.f32.gmra.mrb[0].mxu0 %v840
        %v953 = vpop.f32.mrb[0].mxu0
        %v954 = vadd.f32 0.0, %v953
        %v955 = vpop.f32.mrb[0].mxu0
        %v956 = vadd.f32 0.0, %v955
        %957 = vmatprep.mubr.f32.mxu0 0.0
        %958 = vmatmul.mubr.f32.gmra.mrb[0].mxu0 %v843
        %v959 = vpop.f32.mrb[0].mxu0
        %v960 = vadd.f32 0.0, %v959
        %v961 = vpop.f32.mrb[0].mxu0
        %v962 = vadd.f32 0.0, %v961
        %963 = vmatprep.mubr.f32.mxu0 0.0
        %964 = vmatmul.mubr.f32.gmra.mrb[0].mxu0 %v846
        %v965 = vpop.f32.mrb[0].mxu0
        %v966 = vadd.f32 0.0, %v965
        %v967 = vpop.f32.mrb[0].mxu0
        %v968 = vadd.f32 0.0, %v967
        %969 = vdwg.mxu0
        %970 = vmatprep.subr.mxu0 %v855
        %971 = vmatpush1.msra.mxu0 %v853
        %972 = vmatprep.subr.mxu0 0.0
        %973 = vmatpush1.msra.mxu0 0.0
        %974 = vmatprep.subr.mxu0 0.0
        %975 = vmatpush1.msra.mxu0 0.0
        %976 = vmatprep.subr.mxu0 0.0
        %977 = vmatpush1.msra.mxu0 0.0
        %978 = vmatprep.subr.mxu0 0.0
        %979 = vmatpush1.msra.mxu0 0.0
        %980 = vmatprep.subr.mxu0 0.0
        %981 = vmatpush1.msra.mxu0 0.0
        %982 = vmatprep.subr.mxu0 0.0
        %983 = vmatpush1.msra.mxu0 0.0
        %984 = vmatprep.subr.mxu0 0.0
        %985 = vmatpush1.msra.mxu0 0.0
        %986 = vmatprep.subr.mxu0 0.0
        %987 = vmatpush1.msra.mxu0 0.0
        %988 = vmatprep.subr.mxu0 0.0
        %989 = vmatpush1.msra.mxu0 0.0
        %990 = vmatprep.subr.mxu0 0.0
        %991 = vmatpush1.msra.mxu0 0.0
        %992 = vmatprep.subr.mxu0 0.0
        %993 = vmatpush1.msra.mxu0 0.0
        %994 = vmatprep.subr.mxu0 0.0
        %995 = vmatpush1.msra.mxu0 0.0
        %996 = vmatprep.subr.mxu0 0.0
        %997 = vmatpush1.msra.mxu0 0.0
        %998 = vmatprep.subr.mxu0 0.0
        %999 = vmatpush1.msra.mxu0 0.0
        %1000 = vmatprep.subr.mxu0 0.0
        %1001 = vmatpush1.msra.mxu0 0.0
        %1002 = vmatprep.subr.mxu0 0.0
        %1003 = vmatpush1.msra.mxu0 0.0
        %1004 = vmatprep.subr.mxu0 0.0
        %1005 = vmatpush1.msra.mxu0 0.0
        %1006 = vmatprep.subr.mxu0 0.0
        %1007 = vmatpush1.msra.mxu0 0.0
        %1008 = vmatprep.subr.mxu0 0.0
        %1009 = vmatpush1.msra.mxu0 0.0
        %1010 = vmatprep.subr.mxu0 0.0
        %1011 = vmatpush1.msra.mxu0 0.0
        %1012 = vmatprep.subr.mxu0 0.0
        %1013 = vmatpush1.msra.mxu0 0.0
        %1014 = vmatprep.subr.mxu0 0.0
        %1015 = vmatpush1.msra.mxu0 0.0
        %1016 = vmatprep.subr.mxu0 0.0
        %1017 = vmatpush1.msra.mxu0 0.0
        %1018 = vmatprep.subr.mxu0 0.0
        %1019 = vmatpush1.msra.mxu0 0.0
        %1020 = vmatprep.subr.mxu0 0.0
        %1021 = vmatpush1.msra.mxu0 0.0
        %1022 = vmatprep.subr.mxu0 0.0
        %1023 = vmatpush1.msra.mxu0 0.0
        %1024 = vmatprep.subr.mxu0 0.0
        %1025 = vmatpush1.msra.mxu0 0.0
        %1026 = vmatprep.subr.mxu0 0.0
        %1027 = vmatpush1.msra.mxu0 0.0
        %1028 = vmatprep.subr.mxu0 0.0
        %1029 = vmatpush1.msra.mxu0 0.0
        %1030 = vmatprep.subr.mxu0 0.0
        %1031 = vmatpush1.msra.mxu0 0.0
        %1032 = vmatprep.subr.mxu0 0.0
        %1033 = vmatpush1.msra.mxu0 0.0
        %1034 = vmatprep.mubr.f32.mxu0 0.0
        %1035 = vmatmul.mubr.f32.gmra.mrb[0].mxu0 %v825
        %v1036 = vpop.f32.mrb[0].mxu0
        %v1037 = vadd.f32 0.0, %v1036
        %v1038 = vpop.f32.mrb[0].mxu0
        %v1039 = vadd.f32 0.0, %v1038
        %1040 = vmatprep.mubr.f32.mxu0 0.0
        %1041 = vmatmul.mubr.f32.gmra.mrb[0].mxu0 %v828
        %v1042 = vpop.f32.mrb[0].mxu0
        %v1043 = vadd.f32 0.0, %v1042
        %v1044 = vpop.f32.mrb[0].mxu0
        %v1045 = vadd.f32 0.0, %v1044
        %1046 = vmatprep.mubr.f32.mxu0 0.0
        %1047 = vmatmul.mubr.f32.gmra.mrb[0].mxu0 %v831
        %v1048 = vpop.f32.mrb[0].mxu0
        %v1049 = vadd.f32 0.0, %v1048
        %v1050 = vpop.f32.mrb[0].mxu0
        %v1051 = vadd.f32 0.0, %v1050
        %1052 = vmatprep.mubr.f32.mxu0 0.0
        %1053 = vmatmul.mubr.f32.gmra.mrb[0].mxu0 %v834
        %v1054 = vpop.f32.mrb[0].mxu0
        %v1055 = vadd.f32 0.0, %v1054
        %v1056 = vpop.f32.mrb[0].mxu0
        %v1057 = vadd.f32 0.0, %v1056
        %1058 = vmatprep.mubr.f32.mxu0 0.0
        %1059 = vmatmul.mubr.f32.gmra.mrb[0].mxu0 %v837
        %v1060 = vpop.f32.mrb[0].mxu0
        %v1061 = vadd.f32 0.0, %v1060
        %v1062 = vpop.f32.mrb[0].mxu0
        %v1063 = vadd.f32 0.0, %v1062
        %1064 = vmatprep.mubr.f32.mxu0 0.0
        %1065 = vmatmul.mubr.f32.gmra.mrb[0].mxu0 %v840
        %v1066 = vpop.f32.mrb[0].mxu0
        %v1067 = vadd.f32 0.0, %v1066
        %v1068 = vpop.f32.mrb[0].mxu0
        %v1069 = vadd.f32 0.0, %v1068
        %1070 = vmatprep.mubr.f32.mxu0 0.0
        %1071 = vmatmul.mubr.f32.gmra.mrb[0].mxu0 %v843
        %v1072 = vpop.f32.mrb[0].mxu0
        %v1073 = vadd.f32 0.0, %v1072
        %v1074 = vpop.f32.mrb[0].mxu0
        %v1075 = vadd.f32 0.0, %v1074
        %1076 = vmatprep.mubr.f32.mxu0 0.0
        %1077 = vmatmul.mubr.f32.gmra.mrb[0].mxu0 %v846
        %v1078 = vpop.f32.mrb[0].mxu0
        %v1079 = vadd.f32 0.0, %v1078
        %v1080 = vpop.f32.mrb[0].mxu0
        %v1081 = vadd.f32 0.0, %v1080
        %1082 = vdwg.mxu0
        %v1083 = vpack.c.bf16 %v930, %v924
        %v1084 = vpack.c.bf16 %v932, %v926
        %v1085 = vpack.c.bf16 %v1043, %v1037
        %v1086 = vpack.c.bf16 %v1045, %v1039
        %v1087 = vpack.c.bf16 %v942, %v936
        %v1088 = vpack.c.bf16 %v944, %v938
        %v1089 = vpack.c.bf16 %v1055, %v1049
        %v1090 = vpack.c.bf16 %v1057, %v1051
        %v1091 = vpack.c.bf16 %v954, %v948
        %v1092 = vpack.c.bf16 %v956, %v950
        %v1093 = vpack.c.bf16 %v1067, %v1061
        %v1094 = vpack.c.bf16 %v1069, %v1063
        %v1095 = vpack.c.bf16 %v966, %v960
        %v1096 = vpack.c.bf16 %v968, %v962
        %v1097 = vpack.c.bf16 %v1079, %v1073
        %v1098 = vpack.c.bf16 %v1081, %v1075
        %v1115 = vunpack.c.l.b16 %v1083
        %v1116 = vunpack.c.l.b16 %v1084
        %v1117 = vunpack.c.l.b16 %v1085
        %v1118 = vunpack.c.l.b16 %v1086
        %v1119 = vunpack.c.h.b16 %v1083
        %v1120 = vunpack.c.h.b16 %v1084
        %v1121 = vunpack.c.h.b16 %v1085
        %v1122 = vunpack.c.h.b16 %v1086
        %v1123 = vunpack.c.l.b16 %v1087
        %v1124 = vunpack.c.l.b16 %v1088
        %v1125 = vunpack.c.l.b16 %v1089
        %v1126 = vunpack.c.l.b16 %v1090
        %v1127 = vunpack.c.h.b16 %v1087
        %v1128 = vunpack.c.h.b16 %v1088
        %v1129 = vunpack.c.h.b16 %v1089
        %v1130 = vunpack.c.h.b16 %v1090
        %v1131 = vunpack.c.l.b16 %v1091
        %v1132 = vunpack.c.l.b16 %v1092
        %v1133 = vunpack.c.l.b16 %v1093
        %v1134 = vunpack.c.l.b16 %v1094
        %v1135 = vunpack.c.h.b16 %v1091
        %v1136 = vunpack.c.h.b16 %v1092
        %v1137 = vunpack.c.h.b16 %v1093
        %v1138 = vunpack.c.h.b16 %v1094
        %v1139 = vunpack.c.l.b16 %v1095
        %v1140 = vunpack.c.l.b16 %v1096
        %v1141 = vunpack.c.l.b16 %v1097
        %v1142 = vunpack.c.l.b16 %v1098
        %v1143 = vunpack.c.h.b16 %v1095
        %v1144 = vunpack.c.h.b16 %v1096
        %v1145 = vunpack.c.h.b16 %v1097
        %v1146 = vunpack.c.h.b16 %v1098
        %v1147 = vpack.c.b16 %v1116, %v1115
        %v1148 = vpack.c.b16 %v1118, %v1117
        %v1149 = vpack.c.b16 %v1120, %v1119
        %v1150 = vpack.c.b16 %v1122, %v1121
        %v1151 = vpack.c.b16 %v1124, %v1123
        %v1152 = vpack.c.b16 %v1126, %v1125
        %v1153 = vpack.c.b16 %v1128, %v1127
        %v1154 = vpack.c.b16 %v1130, %v1129
        %v1155 = vpack.c.b16 %v1132, %v1131
        %v1156 = vpack.c.b16 %v1134, %v1133
        %v1157 = vpack.c.b16 %v1136, %v1135
        %v1158 = vpack.c.b16 %v1138, %v1137
        %v1159 = vpack.c.b16 %v1140, %v1139
        %v1160 = vpack.c.b16 %v1142, %v1141
        %v1161 = vpack.c.b16 %v1144, %v1143
        %v1162 = vpack.c.b16 %v1146, %v1145
        %1179 = vst [vmem:[%s379 + $0x40] sm:$0xff] %v1147
        %1180 = vst [vmem:[%s379 + $0x48] sm:$0xff] %v1148
        %1181 = vst [vmem:[%s379 + $0x50] sm:$0xff] %v1149
        %1182 = vst [vmem:[%s379 + $0x58] sm:$0xff] %v1150
        %1183 = vst [vmem:[%s379 + $0x60] sm:$0xff] %v1151
        %1184 = vst [vmem:[%s379 + $0x68] sm:$0xff] %v1152
        %1185 = vst [vmem:[%s379 + $0x70] sm:$0xff] %v1153
        %1186 = vst [vmem:[%s379 + $0x78] sm:$0xff] %v1154
        %1187 = vst [vmem:[%s379 + $0x80] sm:$0xff] %v1155
        %1188 = vst [vmem:[%s379 + $0x88] sm:$0xff] %v1156
        %1189 = vst [vmem:[%s379 + $0x90] sm:$0xff] %v1157
        %1190 = vst [vmem:[%s379 + $0x98] sm:$0xff] %v1158
        %1191 = vst [vmem:[%s379 + $0xa0] sm:$0xff] %v1159
        %1192 = vst [vmem:[%s379 + $0xa8] sm:$0xff] %v1160
        %1193 = vst [vmem:[%s379 + $0xb0] sm:$0xff] %v1161
        %1194 = vst [vmem:[%s379 + $0xb8] sm:$0xff] %v1162
        %v1195 = vld [vmem:[%s4] sm:$0xff]
        %v1196 = vld [vmem:[%s4 + $0x8] sm:$0xff]
        %v1197 = vld [vmem:[%s4 + $0x10] sm:$0xff]
        %v1198 = vld [vmem:[%s4 + $0x18] sm:$0xff]
        %v1199 = vld [vmem:[%s4 + $0x20] sm:$0xff]
        %v1200 = vld [vmem:[%s4 + $0x28] sm:$0xff]
        %v1201 = vld [vmem:[%s4 + $0x30] sm:$0xff]
        %v1202 = vld [vmem:[%s4 + $0x38] sm:$0xff]
        %v1203 = vld [vmem:[%s4 + $0x40] sm:$0xff]
        %v1204 = vld [vmem:[%s4 + $0x48] sm:$0xff]
        %v1205 = vld [vmem:[%s4 + $0x50] sm:$0xff]
        %v1206 = vld [vmem:[%s4 + $0x58] sm:$0xff]
        %v1207 = vld [vmem:[%s4 + $0x60] sm:$0xff]
        %v1208 = vld [vmem:[%s4 + $0x68] sm:$0xff]
        %v1209 = vld [vmem:[%s4 + $0x70] sm:$0xff]
        %v1210 = vld [vmem:[%s4 + $0x78] sm:$0xff]
        %v1211 = vld [vmem:[%s4 + $0x80] sm:$0xff]
        %v1212 = vld [vmem:[%s4 + $0x88] sm:$0xff]
        %v1213 = vld [vmem:[%s4 + $0x90] sm:$0xff]
        %v1214 = vld [vmem:[%s4 + $0x98] sm:$0xff]
        %v1215 = vld [vmem:[%s4 + $0xa0] sm:$0xff]
        %v1216 = vld [vmem:[%s4 + $0xa8] sm:$0xff]
        %v1217 = vld [vmem:[%s4 + $0xb0] sm:$0xff]
        %v1218 = vld [vmem:[%s4 + $0xb8] sm:$0xff]
        %v1219 = vld [vmem:[%s4 + $0xc0] sm:$0xff]
        %v1220 = vld [vmem:[%s4 + $0xc8] sm:$0xff]
        %v1221 = vld [vmem:[%s4 + $0xd0] sm:$0xff]
        %v1222 = vld [vmem:[%s4 + $0xd8] sm:$0xff]
        %v1223 = vld [vmem:[%s4 + $0xe0] sm:$0xff]
        %v1224 = vld [vmem:[%s4 + $0xe8] sm:$0xff]
        %v1225 = vld [vmem:[%s4 + $0xf0] sm:$0xff]
        %v1226 = vld [vmem:[%s4 + $0xf8] sm:$0xff]
        %v1227 = vld [vmem:[%s4 + $0x100] sm:$0xff]
        %v1228 = vld [vmem:[%s4 + $0x108] sm:$0xff]
        %v1229 = vld [vmem:[%s4 + $0x110] sm:$0xff]
        %v1230 = vld [vmem:[%s4 + $0x118] sm:$0xff]
        %v1231 = vld [vmem:[%s4 + $0x120] sm:$0xff]
        %v1232 = vld [vmem:[%s4 + $0x128] sm:$0xff]
        %v1233 = vld [vmem:[%s4 + $0x130] sm:$0xff]
        %v1234 = vld [vmem:[%s4 + $0x138] sm:$0xff]
        %v1235 = vld [vmem:[%s4 + $0x140] sm:$0xff]
        %v1236 = vld [vmem:[%s4 + $0x148] sm:$0xff]
        %v1237 = vld [vmem:[%s4 + $0x150] sm:$0xff]
        %v1238 = vld [vmem:[%s4 + $0x158] sm:$0xff]
        %v1239 = vld [vmem:[%s4 + $0x160] sm:$0xff]
        %v1240 = vld [vmem:[%s4 + $0x168] sm:$0xff]
        %v1241 = vld [vmem:[%s4 + $0x170] sm:$0xff]
        %v1242 = vld [vmem:[%s4 + $0x178] sm:$0xff]
        %v1243 = vld [vmem:[%s4 + $0x180] sm:$0xff]
        %v1244 = vld [vmem:[%s4 + $0x188] sm:$0xff]
        %v1245 = vld [vmem:[%s4 + $0x190] sm:$0xff]
        %v1246 = vld [vmem:[%s4 + $0x198] sm:$0xff]
        %v1247 = vld [vmem:[%s4 + $0x1a0] sm:$0xff]
        %v1248 = vld [vmem:[%s4 + $0x1a8] sm:$0xff]
        %v1249 = vld [vmem:[%s4 + $0x1b0] sm:$0xff]
        %v1250 = vld [vmem:[%s4 + $0x1b8] sm:$0xff]
        %v1251 = vld [vmem:[%s4 + $0x1c0] sm:$0xff]
        %v1252 = vld [vmem:[%s4 + $0x1c8] sm:$0xff]
        %v1253 = vld [vmem:[%s4 + $0x1d0] sm:$0xff]
        %v1254 = vld [vmem:[%s4 + $0x1d8] sm:$0xff]
        %v1255 = vld [vmem:[%s4 + $0x1e0] sm:$0xff]
        %v1256 = vld [vmem:[%s4 + $0x1e8] sm:$0xff]
        %v1257 = vld [vmem:[%s4 + $0x1f0] sm:$0xff]
        %v1258 = vld [vmem:[%s4 + $0x1f8] sm:$0xff]
        %1259 = vmatprep.subr.mxu0 0.0
        %1260 = vmatpush1.msra.mxu0 %v1195
        %1261 = vmatprep.subr.mxu0 0.0
        %1262 = vmatpush1.msra.mxu0 %v1196
        %1263 = vmatprep.subr.mxu0 0.0
        %1264 = vmatpush1.msra.mxu0 %v1197
        %1265 = vmatprep.subr.mxu0 0.0
        %1266 = vmatpush1.msra.mxu0 %v1198
        %1267 = vmatprep.subr.mxu0 0.0
        %1268 = vmatpush1.msra.mxu0 %v1199
        %1269 = vmatprep.subr.mxu0 0.0
        %1270 = vmatpush1.msra.mxu0 %v1200
        %1271 = vmatprep.subr.mxu0 0.0
        %1272 = vmatpush1.msra.mxu0 %v1201
        %1273 = vmatprep.subr.mxu0 0.0
        %1274 = vmatpush1.msra.mxu0 %v1202
        %1275 = vmatprep.subr.mxu0 0.0
        %1276 = vmatpush1.msra.mxu0 %v1203
        %1277 = vmatprep.subr.mxu0 0.0
        %1278 = vmatpush1.msra.mxu0 %v1204
        %1279 = vmatprep.subr.mxu0 0.0
        %1280 = vmatpush1.msra.mxu0 %v1205
        %1281 = vmatprep.subr.mxu0 0.0
        %1282 = vmatpush1.msra.mxu0 %v1206
        %1283 = vmatprep.subr.mxu0 0.0
        %1284 = vmatpush1.msra.mxu0 %v1207
        %1285 = vmatprep.subr.mxu0 0.0
        %1286 = vmatpush1.msra.mxu0 %v1208
        %1287 = vmatprep.subr.mxu0 0.0
        %1288 = vmatpush1.msra.mxu0 %v1209
        %1289 = vmatprep.subr.mxu0 0.0
        %1290 = vmatpush1.msra.mxu0 %v1210
        %1291 = vmatprep.subr.mxu0 0.0
        %1292 = vmatpush1.msra.mxu0 %v1211
        %1293 = vmatprep.subr.mxu0 0.0
        %1294 = vmatpush1.msra.mxu0 %v1212
        %1295 = vmatprep.subr.mxu0 0.0
        %1296 = vmatpush1.msra.mxu0 %v1213
        %1297 = vmatprep.subr.mxu0 0.0
        %1298 = vmatpush1.msra.mxu0 %v1214
        %1299 = vmatprep.subr.mxu0 0.0
        %1300 = vmatpush1.msra.mxu0 %v1215
        %1301 = vmatprep.subr.mxu0 0.0
        %1302 = vmatpush1.msra.mxu0 %v1216
        %1303 = vmatprep.subr.mxu0 0.0
        %1304 = vmatpush1.msra.mxu0 %v1217
        %1305 = vmatprep.subr.mxu0 0.0
        %1306 = vmatpush1.msra.mxu0 %v1218
        %1307 = vmatprep.subr.mxu0 0.0
        %1308 = vmatpush1.msra.mxu0 %v1219
        %1309 = vmatprep.subr.mxu0 0.0
        %1310 = vmatpush1.msra.mxu0 %v1220
        %1311 = vmatprep.subr.mxu0 0.0
        %1312 = vmatpush1.msra.mxu0 %v1221
        %1313 = vmatprep.subr.mxu0 0.0
        %1314 = vmatpush1.msra.mxu0 %v1222
        %1315 = vmatprep.subr.mxu0 0.0
        %1316 = vmatpush1.msra.mxu0 %v1223
        %1317 = vmatprep.subr.mxu0 0.0
        %1318 = vmatpush1.msra.mxu0 %v1224
        %1319 = vmatprep.subr.mxu0 0.0
        %1320 = vmatpush1.msra.mxu0 %v1225
        %1321 = vmatprep.subr.mxu0 0.0
        %1322 = vmatpush1.msra.mxu0 %v1226
        %1323 = vmatprep.mubr.f32.mxu0 %v394
        %1324 = vmatmul.mubr.f32.gmra.mrb[0].mxu0 %v393
        %v1325 = vpop.f32.mrb[0].mxu0
        %v1326 = vadd.f32 0.0, %v1325
        %v1327 = vpop.f32.mrb[0].mxu0
        %1328 = vmatprep.mubr.f32.mxu0 %v398
        %1329 = vmatmul.mubr.f32.gmra.mrb[0].mxu0 %v397
        %v1330 = vpop.f32.mrb[0].mxu0
        %v1331 = vadd.f32 0.0, %v1330
        %v1332 = vpop.f32.mrb[0].mxu0
        %1333 = vmatprep.mubr.f32.mxu0 %v402
        %1334 = vmatmul.mubr.f32.gmra.mrb[0].mxu0 %v401
        %v1335 = vpop.f32.mrb[0].mxu0
        %v1336 = vadd.f32 0.0, %v1335
        %v1337 = vpop.f32.mrb[0].mxu0
        %1338 = vmatprep.mubr.f32.mxu0 %v406
        %1339 = vmatmul.mubr.f32.gmra.mrb[0].mxu0 %v405
        %v1340 = vpop.f32.mrb[0].mxu0
        %v1341 = vadd.f32 0.0, %v1340
        %v1342 = vpop.f32.mrb[0].mxu0
        %1343 = vdwg.mxu0
        %1344 = vmatprep.subr.mxu0 0.0
        %1345 = vmatpush1.msra.mxu0 %v1227
        %1346 = vmatprep.subr.mxu0 0.0
        %1347 = vmatpush1.msra.mxu0 %v1228
        %1348 = vmatprep.subr.mxu0 0.0
        %1349 = vmatpush1.msra.mxu0 %v1229
        %1350 = vmatprep.subr.mxu0 0.0
        %1351 = vmatpush1.msra.mxu0 %v1230
        %1352 = vmatprep.subr.mxu0 0.0
        %1353 = vmatpush1.msra.mxu0 %v1231
        %1354 = vmatprep.subr.mxu0 0.0
        %1355 = vmatpush1.msra.mxu0 %v1232
        %1356 = vmatprep.subr.mxu0 0.0
        %1357 = vmatpush1.msra.mxu0 %v1233
        %1358 = vmatprep.subr.mxu0 0.0
        %1359 = vmatpush1.msra.mxu0 %v1234
        %1360 = vmatprep.subr.mxu0 0.0
        %1361 = vmatpush1.msra.mxu0 %v1235
        %1362 = vmatprep.subr.mxu0 0.0
        %1363 = vmatpush1.msra.mxu0 %v1236
        %1364 = vmatprep.subr.mxu0 0.0
        %1365 = vmatpush1.msra.mxu0 %v1237
        %1366 = vmatprep.subr.mxu0 0.0
        %1367 = vmatpush1.msra.mxu0 %v1238
        %1368 = vmatprep.subr.mxu0 0.0
        %1369 = vmatpush1.msra.mxu0 %v1239
        %1370 = vmatprep.subr.mxu0 0.0
        %1371 = vmatpush1.msra.mxu0 %v1240
        %1372 = vmatprep.subr.mxu0 0.0
        %1373 = vmatpush1.msra.mxu0 %v1241
        %1374 = vmatprep.subr.mxu0 0.0
        %1375 = vmatpush1.msra.mxu0 %v1242
        %1376 = vmatprep.subr.mxu0 0.0
        %1377 = vmatpush1.msra.mxu0 %v1243
        %1378 = vmatprep.subr.mxu0 0.0
        %1379 = vmatpush1.msra.mxu0 %v1244
        %1380 = vmatprep.subr.mxu0 0.0
        %1381 = vmatpush1.msra.mxu0 %v1245
        %1382 = vmatprep.subr.mxu0 0.0
        %1383 = vmatpush1.msra.mxu0 %v1246
        %1384 = vmatprep.subr.mxu0 0.0
        %1385 = vmatpush1.msra.mxu0 %v1247
        %1386 = vmatprep.subr.mxu0 0.0
        %1387 = vmatpush1.msra.mxu0 %v1248
        %1388 = vmatprep.subr.mxu0 0.0
        %1389 = vmatpush1.msra.mxu0 %v1249
        %1390 = vmatprep.subr.mxu0 0.0
        %1391 = vmatpush1.msra.mxu0 %v1250
        %1392 = vmatprep.subr.mxu0 0.0
        %1393 = vmatpush1.msra.mxu0 %v1251
        %1394 = vmatprep.subr.mxu0 0.0
        %1395 = vmatpush1.msra.mxu0 %v1252
        %1396 = vmatprep.subr.mxu0 0.0
        %1397 = vmatpush1.msra.mxu0 %v1253
        %1398 = vmatprep.subr.mxu0 0.0
        %1399 = vmatpush1.msra.mxu0 %v1254
        %1400 = vmatprep.subr.mxu0 0.0
        %1401 = vmatpush1.msra.mxu0 %v1255
        %1402 = vmatprep.subr.mxu0 0.0
        %1403 = vmatpush1.msra.mxu0 %v1256
        %1404 = vmatprep.subr.mxu0 0.0
        %1405 = vmatpush1.msra.mxu0 %v1257
        %1406 = vmatprep.subr.mxu0 0.0
        %1407 = vmatpush1.msra.mxu0 %v1258
        %1408 = vmatprep.mubr.f32.mxu0 %v396
        %1409 = vmatmul.mubr.f32.gmra.mrb[0].mxu0 %v395
        %v1410 = vpop.f32.mrb[0].mxu0
        %v1411 = vadd.f32 %v1326, %v1410
        %v1412 = vpop.f32.mrb[0].mxu0
        %1413 = vmatprep.mubr.f32.mxu0 %v400
        %1414 = vmatmul.mubr.f32.gmra.mrb[0].mxu0 %v399
        %v1415 = vpop.f32.mrb[0].mxu0
        %v1416 = vadd.f32 %v1331, %v1415
        %v1417 = vpop.f32.mrb[0].mxu0
        %1418 = vmatprep.mubr.f32.mxu0 %v404
        %1419 = vmatmul.mubr.f32.gmra.mrb[0].mxu0 %v403
        %v1420 = vpop.f32.mrb[0].mxu0
        %v1421 = vadd.f32 %v1336, %v1420
        %v1422 = vpop.f32.mrb[0].mxu0
        %1423 = vmatprep.mubr.f32.mxu0 %v408
        %1424 = vmatmul.mubr.f32.gmra.mrb[0].mxu0 %v407
        %v1425 = vpop.f32.mrb[0].mxu0
        %v1426 = vadd.f32 %v1341, %v1425
        %v1427 = vpop.f32.mrb[0].mxu0
        %1428 = vdwg.mxu0
        %s1429 = scalar_lea.vmem %s1, 64
        %v1430 = vld [vmem:[%s1429] sm:$0xff]
        %v1431 = vld [vmem:[%s1429 + $0x8] sm:$0xff]
        %v1432 = vld [vmem:[%s1429 + $0x10] sm:$0xff]
        %v1433 = vld [vmem:[%s1429 + $0x18] sm:$0xff]
        %v1434 = vld [vmem:[%s1429 + $0x20] sm:$0xff]
        %v1435 = vld [vmem:[%s1429 + $0x28] sm:$0xff]
        %v1436 = vld [vmem:[%s1429 + $0x30] sm:$0xff]
        %v1437 = vld [vmem:[%s1429 + $0x38] sm:$0xff]
        %s1438 = scalar_lea.vmem %s2, 64
        %v1439 = vld [vmem:[%s1438] sm:$0xff]
        %v1440 = vld [vmem:[%s1438 + $0x8] sm:$0xff]
        %v1441 = vld [vmem:[%s1438 + $0x10] sm:$0xff]
        %v1442 = vld [vmem:[%s1438 + $0x18] sm:$0xff]
        %v1443 = vld [vmem:[%s1438 + $0x20] sm:$0xff]
        %v1444 = vld [vmem:[%s1438 + $0x28] sm:$0xff]
        %v1445 = vld [vmem:[%s1438 + $0x30] sm:$0xff]
        %v1446 = vld [vmem:[%s1438 + $0x38] sm:$0xff]
        %1448 = vset.pattern.permute.xlu0 0
        %1449 = vperm.xlu0 %1448, %v1439
        %v1450 = vpop.permute.xlu0 %1449
        %1453 = vset.pattern.permute.xlu0 0
        %1454 = vperm.xlu0 %1453, %v1440
        %v1455 = vpop.permute.xlu0 %1454
        %1458 = vset.pattern.permute.xlu0 0
        %1459 = vperm.xlu0 %1458, %v1441
        %v1460 = vpop.permute.xlu0 %1459
        %1463 = vset.pattern.permute.xlu0 0
        %1464 = vperm.xlu0 %1463, %v1442
        %v1465 = vpop.permute.xlu0 %1464
        %1468 = vset.pattern.permute.xlu0 0
        %1469 = vperm.xlu0 %1468, %v1443
        %v1470 = vpop.permute.xlu0 %1469
        %1473 = vset.pattern.permute.xlu0 0
        %1474 = vperm.xlu0 %1473, %v1444
        %v1475 = vpop.permute.xlu0 %1474
        %1478 = vset.pattern.permute.xlu0 0
        %1479 = vperm.xlu0 %1478, %v1445
        %v1480 = vpop.permute.xlu0 %1479
        %1483 = vset.pattern.permute.xlu0 0
        %1484 = vperm.xlu0 %1483, %v1446
        %v1485 = vpop.permute.xlu0 %1484
        %v1488 = vsel %vm667, %v1430, 0
        %v1491 = vsel %vm667, %v1431, 0
        %v1494 = vsel %vm667, %v1432, 0
        %v1497 = vsel %vm667, %v1433, 0
        %v1500 = vsel %vm667, %v1434, 0
        %v1503 = vsel %vm667, %v1435, 0
        %v1506 = vsel %vm667, %v1436, 0
        %v1509 = vsel %vm667, %v1437, 0
        %1511 = vmatprep.subr.mxu0 0.0
        %1512 = vmatpush1.msra.mxu0 %v1411
        %1513 = vmatprep.subr.mxu0 0.0
        %1514 = vmatpush1.msra.mxu0 %v1416
        %1515 = vmatprep.subr.mxu0 0.0
        %1516 = vmatpush1.msra.mxu0 %v1421
        %1517 = vmatprep.subr.mxu0 0.0
        %1518 = vmatpush1.msra.mxu0 %v1426
        %1519 = vmatprep.subr.mxu0 0.0
        %1520 = vmatpush1.msra.mxu0 0.0
        %1521 = vmatprep.subr.mxu0 0.0
        %1522 = vmatpush1.msra.mxu0 0.0
        %1523 = vmatprep.subr.mxu0 0.0
        %1524 = vmatpush1.msra.mxu0 0.0
        %1525 = vmatprep.subr.mxu0 0.0
        %1526 = vmatpush1.msra.mxu0 0.0
        %1527 = vmatprep.subr.mxu0 0.0
        %1528 = vmatpush1.msra.mxu0 0.0
        %1529 = vmatprep.subr.mxu0 0.0
        %1530 = vmatpush1.msra.mxu0 0.0
        %1531 = vmatprep.subr.mxu0 0.0
        %1532 = vmatpush1.msra.mxu0 0.0
        %1533 = vmatprep.subr.mxu0 0.0
        %1534 = vmatpush1.msra.mxu0 0.0
        %1535 = vmatprep.subr.mxu0 0.0
        %1536 = vmatpush1.msra.mxu0 0.0
        %1537 = vmatprep.subr.mxu0 0.0
        %1538 = vmatpush1.msra.mxu0 0.0
        %1539 = vmatprep.subr.mxu0 0.0
        %1540 = vmatpush1.msra.mxu0 0.0
        %1541 = vmatprep.subr.mxu0 0.0
        %1542 = vmatpush1.msra.mxu0 0.0
        %1543 = vmatprep.subr.mxu0 0.0
        %1544 = vmatpush1.msra.mxu0 0.0
        %1545 = vmatprep.subr.mxu0 0.0
        %1546 = vmatpush1.msra.mxu0 0.0
        %1547 = vmatprep.subr.mxu0 0.0
        %1548 = vmatpush1.msra.mxu0 0.0
        %1549 = vmatprep.subr.mxu0 0.0
        %1550 = vmatpush1.msra.mxu0 0.0
        %1551 = vmatprep.subr.mxu0 0.0
        %1552 = vmatpush1.msra.mxu0 0.0
        %1553 = vmatprep.subr.mxu0 0.0
        %1554 = vmatpush1.msra.mxu0 0.0
        %1555 = vmatprep.subr.mxu0 0.0
        %1556 = vmatpush1.msra.mxu0 0.0
        %1557 = vmatprep.subr.mxu0 0.0
        %1558 = vmatpush1.msra.mxu0 0.0
        %1559 = vmatprep.subr.mxu0 0.0
        %1560 = vmatpush1.msra.mxu0 0.0
        %1561 = vmatprep.subr.mxu0 0.0
        %1562 = vmatpush1.msra.mxu0 0.0
        %1563 = vmatprep.subr.mxu0 0.0
        %1564 = vmatpush1.msra.mxu0 0.0
        %1565 = vmatprep.subr.mxu0 0.0
        %1566 = vmatpush1.msra.mxu0 0.0
        %1567 = vmatprep.subr.mxu0 0.0
        %1568 = vmatpush1.msra.mxu0 0.0
        %1569 = vmatprep.subr.mxu0 0.0
        %1570 = vmatpush1.msra.mxu0 0.0
        %1571 = vmatprep.subr.mxu0 0.0
        %1572 = vmatpush1.msra.mxu0 0.0
        %1573 = vmatprep.subr.mxu0 0.0
        %1574 = vmatpush1.msra.mxu0 0.0
        %1575 = vmatprep.mubr.f32.mxu0 0.0
        %1576 = vmatmul.mubr.f32.gmra.mrb[0].mxu0 %v1488
        %v1577 = vpop.f32.mrb[0].mxu0
        %v1578 = vadd.f32 %v1450, %v1577
        %v1579 = vpop.f32.mrb[0].mxu0
        %1580 = vmatprep.mubr.f32.mxu0 0.0
        %1581 = vmatmul.mubr.f32.gmra.mrb[0].mxu0 %v1491
        %v1582 = vpop.f32.mrb[0].mxu0
        %v1583 = vadd.f32 %v1455, %v1582
        %v1584 = vpop.f32.mrb[0].mxu0
        %1585 = vmatprep.mubr.f32.mxu0 0.0
        %1586 = vmatmul.mubr.f32.gmra.mrb[0].mxu0 %v1494
        %v1587 = vpop.f32.mrb[0].mxu0
        %v1588 = vadd.f32 %v1460, %v1587
        %v1589 = vpop.f32.mrb[0].mxu0
        %1590 = vmatprep.mubr.f32.mxu0 0.0
        %1591 = vmatmul.mubr.f32.gmra.mrb[0].mxu0 %v1497
        %v1592 = vpop.f32.mrb[0].mxu0
        %v1593 = vadd.f32 %v1465, %v1592
        %v1594 = vpop.f32.mrb[0].mxu0
        %1595 = vmatprep.mubr.f32.mxu0 0.0
        %1596 = vmatmul.mubr.f32.gmra.mrb[0].mxu0 %v1500
        %v1597 = vpop.f32.mrb[0].mxu0
        %v1598 = vadd.f32 %v1470, %v1597
        %v1599 = vpop.f32.mrb[0].mxu0
        %1600 = vmatprep.mubr.f32.mxu0 0.0
        %1601 = vmatmul.mubr.f32.gmra.mrb[0].mxu0 %v1503
        %v1602 = vpop.f32.mrb[0].mxu0
        %v1603 = vadd.f32 %v1475, %v1602
        %v1604 = vpop.f32.mrb[0].mxu0
        %1605 = vmatprep.mubr.f32.mxu0 0.0
        %1606 = vmatmul.mubr.f32.gmra.mrb[0].mxu0 %v1506
        %v1607 = vpop.f32.mrb[0].mxu0
        %v1608 = vadd.f32 %v1480, %v1607
        %v1609 = vpop.f32.mrb[0].mxu0
        %1610 = vmatprep.mubr.f32.mxu0 0.0
        %1611 = vmatmul.mubr.f32.gmra.mrb[0].mxu0 %v1509
        %v1612 = vpop.f32.mrb[0].mxu0
        %v1613 = vadd.f32 %v1485, %v1612
        %v1614 = vpop.f32.mrb[0].mxu0
        %1615 = vdwg.mxu0
        %v1616 = vmax.f32 %v1578, 0.0
        %v1617 = vmax.f32 %v1583, 0.0
        %v1618 = vmax.f32 %v1588, 0.0
        %v1619 = vmax.f32 %v1593, 0.0
        %v1620 = vmax.f32 %v1598, 0.0
        %v1621 = vmax.f32 %v1603, 0.0
        %v1622 = vmax.f32 %v1608, 0.0
        %v1623 = vmax.f32 %v1613, 0.0
        %v1624 = vld [vmem:[%s8] sm:$0xff]
        %v1625 = vld [vmem:[%s8 + $0x8] sm:$0xff]
        %v1628 = vcombine.high %v1624, %v1624
        %v1629 = vcombine.high %v1625, %v1625
        %vm1630 = vcmask 31744
        %v1632 = vsel %vm1630, %v1616, 0
        %v1635 = vsel %vm1630, %v1617, 0
        %v1638 = vsel %vm1630, %v1618, 0
        %v1641 = vsel %vm1630, %v1619, 0
        %v1644 = vsel %vm1630, %v1620, 0
        %v1647 = vsel %vm1630, %v1621, 0
        %v1650 = vsel %vm1630, %v1622, 0
        %v1653 = vsel %vm1630, %v1623, 0
        %vm1655 = vcmask 1043456
        %v1656 = vsel %vm1655, %v1624, 0
        %v1658 = vsel %vm1655, %v1628, 0
        %v1660 = vsel %vm1655, %v1625, 0
        %v1662 = vsel %vm1655, %v1629, 0
        %1664 = vmatprep.subr.mxu0 %v1658
        %1665 = vmatpush1.msra.mxu0 %v1656
        %1666 = vmatprep.subr.mxu0 0.0
        %1667 = vmatpush1.msra.mxu0 0.0
        %1668 = vmatprep.subr.mxu0 0.0
        %1669 = vmatpush1.msra.mxu0 0.0
        %1670 = vmatprep.subr.mxu0 0.0
        %1671 = vmatpush1.msra.mxu0 0.0
        %1672 = vmatprep.subr.mxu0 0.0
        %1673 = vmatpush1.msra.mxu0 0.0
        %1674 = vmatprep.subr.mxu0 0.0
        %1675 = vmatpush1.msra.mxu0 0.0
        %1676 = vmatprep.subr.mxu0 0.0
        %1677 = vmatpush1.msra.mxu0 0.0
        %1678 = vmatprep.subr.mxu0 0.0
        %1679 = vmatpush1.msra.mxu0 0.0
        %1680 = vmatprep.subr.mxu0 0.0
        %1681 = vmatpush1.msra.mxu0 0.0
        %1682 = vmatprep.subr.mxu0 0.0
        %1683 = vmatpush1.msra.mxu0 0.0
        %1684 = vmatprep.subr.mxu0 0.0
        %1685 = vmatpush1.msra.mxu0 0.0
        %1686 = vmatprep.subr.mxu0 0.0
        %1687 = vmatpush1.msra.mxu0 0.0
        %1688 = vmatprep.subr.mxu0 0.0
        %1689 = vmatpush1.msra.mxu0 0.0
        %1690 = vmatprep.subr.mxu0 0.0
        %1691 = vmatpush1.msra.mxu0 0.0
        %1692 = vmatprep.subr.mxu0 0.0
        %1693 = vmatpush1.msra.mxu0 0.0
        %1694 = vmatprep.subr.mxu0 0.0
        %1695 = vmatpush1.msra.mxu0 0.0
        %1696 = vmatprep.subr.mxu0 0.0
        %1697 = vmatpush1.msra.mxu0 0.0
        %1698 = vmatprep.subr.mxu0 0.0
        %1699 = vmatpush1.msra.mxu0 0.0
        %1700 = vmatprep.subr.mxu0 0.0
        %1701 = vmatpush1.msra.mxu0 0.0
        %1702 = vmatprep.subr.mxu0 0.0
        %1703 = vmatpush1.msra.mxu0 0.0
        %1704 = vmatprep.subr.mxu0 0.0
        %1705 = vmatpush1.msra.mxu0 0.0
        %1706 = vmatprep.subr.mxu0 0.0
        %1707 = vmatpush1.msra.mxu0 0.0
        %1708 = vmatprep.subr.mxu0 0.0
        %1709 = vmatpush1.msra.mxu0 0.0
        %1710 = vmatprep.subr.mxu0 0.0
        %1711 = vmatpush1.msra.mxu0 0.0
        %1712 = vmatprep.subr.mxu0 0.0
        %1713 = vmatpush1.msra.mxu0 0.0
        %1714 = vmatprep.subr.mxu0 0.0
        %1715 = vmatpush1.msra.mxu0 0.0
        %1716 = vmatprep.subr.mxu0 0.0
        %1717 = vmatpush1.msra.mxu0 0.0
        %1718 = vmatprep.subr.mxu0 0.0
        %1719 = vmatpush1.msra.mxu0 0.0
        %1720 = vmatprep.subr.mxu0 0.0
        %1721 = vmatpush1.msra.mxu0 0.0
        %1722 = vmatprep.subr.mxu0 0.0
        %1723 = vmatpush1.msra.mxu0 0.0
        %1724 = vmatprep.subr.mxu0 0.0
        %1725 = vmatpush1.msra.mxu0 0.0
        %1726 = vmatprep.subr.mxu0 0.0
        %1727 = vmatpush1.msra.mxu0 0.0
        %1728 = vmatprep.mubr.f32.mxu0 0.0
        %1729 = vmatmul.mubr.f32.gmra.mrb[0].mxu0 %v1632
        %v1730 = vpop.f32.mrb[0].mxu0
        %v1731 = vadd.f32 0.0, %v1730
        %v1732 = vpop.f32.mrb[0].mxu0
        %v1733 = vadd.f32 0.0, %v1732
        %1734 = vmatprep.mubr.f32.mxu0 0.0
        %1735 = vmatmul.mubr.f32.gmra.mrb[0].mxu0 %v1635
        %v1736 = vpop.f32.mrb[0].mxu0
        %v1737 = vadd.f32 0.0, %v1736
        %v1738 = vpop.f32.mrb[0].mxu0
        %v1739 = vadd.f32 0.0, %v1738
        %1740 = vmatprep.mubr.f32.mxu0 0.0
        %1741 = vmatmul.mubr.f32.gmra.mrb[0].mxu0 %v1638
        %v1742 = vpop.f32.mrb[0].mxu0
        %v1743 = vadd.f32 0.0, %v1742
        %v1744 = vpop.f32.mrb[0].mxu0
        %v1745 = vadd.f32 0.0, %v1744
        %1746 = vmatprep.mubr.f32.mxu0 0.0
        %1747 = vmatmul.mubr.f32.gmra.mrb[0].mxu0 %v1641
        %v1748 = vpop.f32.mrb[0].mxu0
        %v1749 = vadd.f32 0.0, %v1748
        %v1750 = vpop.f32.mrb[0].mxu0
        %v1751 = vadd.f32 0.0, %v1750
        %1752 = vmatprep.mubr.f32.mxu0 0.0
        %1753 = vmatmul.mubr.f32.gmra.mrb[0].mxu0 %v1644
        %v1754 = vpop.f32.mrb[0].mxu0
        %v1755 = vadd.f32 0.0, %v1754
        %v1756 = vpop.f32.mrb[0].mxu0
        %v1757 = vadd.f32 0.0, %v1756
        %1758 = vmatprep.mubr.f32.mxu0 0.0
        %1759 = vmatmul.mubr.f32.gmra.mrb[0].mxu0 %v1647
        %v1760 = vpop.f32.mrb[0].mxu0
        %v1761 = vadd.f32 0.0, %v1760
        %v1762 = vpop.f32.mrb[0].mxu0
        %v1763 = vadd.f32 0.0, %v1762
        %1764 = vmatprep.mubr.f32.mxu0 0.0
        %1765 = vmatmul.mubr.f32.gmra.mrb[0].mxu0 %v1650
        %v1766 = vpop.f32.mrb[0].mxu0
        %v1767 = vadd.f32 0.0, %v1766
        %v1768 = vpop.f32.mrb[0].mxu0
        %v1769 = vadd.f32 0.0, %v1768
        %1770 = vmatprep.mubr.f32.mxu0 0.0
        %1771 = vmatmul.mubr.f32.gmra.mrb[0].mxu0 %v1653
        %v1772 = vpop.f32.mrb[0].mxu0
        %v1773 = vadd.f32 0.0, %v1772
        %v1774 = vpop.f32.mrb[0].mxu0
        %v1775 = vadd.f32 0.0, %v1774
        %1776 = vdwg.mxu0
        %1777 = vmatprep.subr.mxu0 %v1662
        %1778 = vmatpush1.msra.mxu0 %v1660
        %1779 = vmatprep.subr.mxu0 0.0
        %1780 = vmatpush1.msra.mxu0 0.0
        %1781 = vmatprep.subr.mxu0 0.0
        %1782 = vmatpush1.msra.mxu0 0.0
        %1783 = vmatprep.subr.mxu0 0.0
        %1784 = vmatpush1.msra.mxu0 0.0
        %1785 = vmatprep.subr.mxu0 0.0
        %1786 = vmatpush1.msra.mxu0 0.0
        %1787 = vmatprep.subr.mxu0 0.0
        %1788 = vmatpush1.msra.mxu0 0.0
        %1789 = vmatprep.subr.mxu0 0.0
        %1790 = vmatpush1.msra.mxu0 0.0
        %1791 = vmatprep.subr.mxu0 0.0
        %1792 = vmatpush1.msra.mxu0 0.0
        %1793 = vmatprep.subr.mxu0 0.0
        %1794 = vmatpush1.msra.mxu0 0.0
        %1795 = vmatprep.subr.mxu0 0.0
        %1796 = vmatpush1.msra.mxu0 0.0
        %1797 = vmatprep.subr.mxu0 0.0
        %1798 = vmatpush1.msra.mxu0 0.0
        %1799 = vmatprep.subr.mxu0 0.0
        %1800 = vmatpush1.msra.mxu0 0.0
        %1801 = vmatprep.subr.mxu0 0.0
        %1802 = vmatpush1.msra.mxu0 0.0
        %1803 = vmatprep.subr.mxu0 0.0
        %1804 = vmatpush1.msra.mxu0 0.0
        %1805 = vmatprep.subr.mxu0 0.0
        %1806 = vmatpush1.msra.mxu0 0.0
        %1807 = vmatprep.subr.mxu0 0.0
        %1808 = vmatpush1.msra.mxu0 0.0
        %1809 = vmatprep.subr.mxu0 0.0
        %1810 = vmatpush1.msra.mxu0 0.0
        %1811 = vmatprep.subr.mxu0 0.0
        %1812 = vmatpush1.msra.mxu0 0.0
        %1813 = vmatprep.subr.mxu0 0.0
        %1814 = vmatpush1.msra.mxu0 0.0
        %1815 = vmatprep.subr.mxu0 0.0
        %1816 = vmatpush1.msra.mxu0 0.0
        %1817 = vmatprep.subr.mxu0 0.0
        %1818 = vmatpush1.msra.mxu0 0.0
        %1819 = vmatprep.subr.mxu0 0.0
        %1820 = vmatpush1.msra.mxu0 0.0
        %1821 = vmatprep.subr.mxu0 0.0
        %1822 = vmatpush1.msra.mxu0 0.0
        %1823 = vmatprep.subr.mxu0 0.0
        %1824 = vmatpush1.msra.mxu0 0.0
        %1825 = vmatprep.subr.mxu0 0.0
        %1826 = vmatpush1.msra.mxu0 0.0
        %1827 = vmatprep.subr.mxu0 0.0
        %1828 = vmatpush1.msra.mxu0 0.0
        %1829 = vmatprep.subr.mxu0 0.0
        %1830 = vmatpush1.msra.mxu0 0.0
        %1831 = vmatprep.subr.mxu0 0.0
        %1832 = vmatpush1.msra.mxu0 0.0
        %1833 = vmatprep.subr.mxu0 0.0
        %1834 = vmatpush1.msra.mxu0 0.0
        %1835 = vmatprep.subr.mxu0 0.0
        %1836 = vmatpush1.msra.mxu0 0.0
        %1837 = vmatprep.subr.mxu0 0.0
        %1838 = vmatpush1.msra.mxu0 0.0
        %1839 = vmatprep.subr.mxu0 0.0
        %1840 = vmatpush1.msra.mxu0 0.0
        %1841 = vmatprep.mubr.f32.mxu0 0.0
        %1842 = vmatmul.mubr.f32.gmra.mrb[0].mxu0 %v1632
        %v1843 = vpop.f32.mrb[0].mxu0
        %v1844 = vadd.f32 0.0, %v1843
        %v1845 = vpop.f32.mrb[0].mxu0
        %v1846 = vadd.f32 0.0, %v1845
        %1847 = vmatprep.mubr.f32.mxu0 0.0
        %1848 = vmatmul.mubr.f32.gmra.mrb[0].mxu0 %v1635
        %v1849 = vpop.f32.mrb[0].mxu0
        %v1850 = vadd.f32 0.0, %v1849
        %v1851 = vpop.f32.mrb[0].mxu0
        %v1852 = vadd.f32 0.0, %v1851
        %1853 = vmatprep.mubr.f32.mxu0 0.0
        %1854 = vmatmul.mubr.f32.gmra.mrb[0].mxu0 %v1638
        %v1855 = vpop.f32.mrb[0].mxu0
        %v1856 = vadd.f32 0.0, %v1855
        %v1857 = vpop.f32.mrb[0].mxu0
        %v1858 = vadd.f32 0.0, %v1857
        %1859 = vmatprep.mubr.f32.mxu0 0.0
        %1860 = vmatmul.mubr.f32.gmra.mrb[0].mxu0 %v1641
        %v1861 = vpop.f32.mrb[0].mxu0
        %v1862 = vadd.f32 0.0, %v1861
        %v1863 = vpop.f32.mrb[0].mxu0
        %v1864 = vadd.f32 0.0, %v1863
        %1865 = vmatprep.mubr.f32.mxu0 0.0
        %1866 = vmatmul.mubr.f32.gmra.mrb[0].mxu0 %v1644
        %v1867 = vpop.f32.mrb[0].mxu0
        %v1868 = vadd.f32 0.0, %v1867
        %v1869 = vpop.f32.mrb[0].mxu0
        %v1870 = vadd.f32 0.0, %v1869
        %1871 = vmatprep.mubr.f32.mxu0 0.0
        %1872 = vmatmul.mubr.f32.gmra.mrb[0].mxu0 %v1647
        %v1873 = vpop.f32.mrb[0].mxu0
        %v1874 = vadd.f32 0.0, %v1873
        %v1875 = vpop.f32.mrb[0].mxu0
        %v1876 = vadd.f32 0.0, %v1875
        %1877 = vmatprep.mubr.f32.mxu0 0.0
        %1878 = vmatmul.mubr.f32.gmra.mrb[0].mxu0 %v1650
        %v1879 = vpop.f32.mrb[0].mxu0
        %v1880 = vadd.f32 0.0, %v1879
        %v1881 = vpop.f32.mrb[0].mxu0
        %v1882 = vadd.f32 0.0, %v1881
        %1883 = vmatprep.mubr.f32.mxu0 0.0
        %1884 = vmatmul.mubr.f32.gmra.mrb[0].mxu0 %v1653
        %v1885 = vpop.f32.mrb[0].mxu0
        %v1886 = vadd.f32 0.0, %v1885
        %v1887 = vpop.f32.mrb[0].mxu0
        %v1888 = vadd.f32 0.0, %v1887
        %1889 = vdwg.mxu0
        %v1890 = vpack.c.bf16 %v1737, %v1731
        %v1891 = vpack.c.bf16 %v1739, %v1733
        %v1892 = vpack.c.bf16 %v1850, %v1844
        %v1893 = vpack.c.bf16 %v1852, %v1846
        %v1894 = vpack.c.bf16 %v1749, %v1743
        %v1895 = vpack.c.bf16 %v1751, %v1745
        %v1896 = vpack.c.bf16 %v1862, %v1856
        %v1897 = vpack.c.bf16 %v1864, %v1858
        %v1898 = vpack.c.bf16 %v1761, %v1755
        %v1899 = vpack.c.bf16 %v1763, %v1757
        %v1900 = vpack.c.bf16 %v1874, %v1868
        %v1901 = vpack.c.bf16 %v1876, %v1870
        %v1902 = vpack.c.bf16 %v1773, %v1767
        %v1903 = vpack.c.bf16 %v1775, %v1769
        %v1904 = vpack.c.bf16 %v1886, %v1880
        %v1905 = vpack.c.bf16 %v1888, %v1882
        %v1922 = vunpack.c.l.b16 %v1890
        %v1923 = vunpack.c.l.b16 %v1891
        %v1924 = vunpack.c.l.b16 %v1892
        %v1925 = vunpack.c.l.b16 %v1893
        %v1926 = vunpack.c.h.b16 %v1890
        %v1927 = vunpack.c.h.b16 %v1891
        %v1928 = vunpack.c.h.b16 %v1892
        %v1929 = vunpack.c.h.b16 %v1893
        %v1930 = vunpack.c.l.b16 %v1894
        %v1931 = vunpack.c.l.b16 %v1895
        %v1932 = vunpack.c.l.b16 %v1896
        %v1933 = vunpack.c.l.b16 %v1897
        %v1934 = vunpack.c.h.b16 %v1894
        %v1935 = vunpack.c.h.b16 %v1895
        %v1936 = vunpack.c.h.b16 %v1896
        %v1937 = vunpack.c.h.b16 %v1897
        %v1938 = vunpack.c.l.b16 %v1898
        %v1939 = vunpack.c.l.b16 %v1899
        %v1940 = vunpack.c.l.b16 %v1900
        %v1941 = vunpack.c.l.b16 %v1901
        %v1942 = vunpack.c.h.b16 %v1898
        %v1943 = vunpack.c.h.b16 %v1899
        %v1944 = vunpack.c.h.b16 %v1900
        %v1945 = vunpack.c.h.b16 %v1901
        %v1946 = vunpack.c.l.b16 %v1902
        %v1947 = vunpack.c.l.b16 %v1903
        %v1948 = vunpack.c.l.b16 %v1904
        %v1949 = vunpack.c.l.b16 %v1905
        %v1950 = vunpack.c.h.b16 %v1902
        %v1951 = vunpack.c.h.b16 %v1903
        %v1952 = vunpack.c.h.b16 %v1904
        %v1953 = vunpack.c.h.b16 %v1905
        %v1954 = vpack.c.b16 %v1923, %v1922
        %v1955 = vpack.c.b16 %v1925, %v1924
        %v1956 = vpack.c.b16 %v1927, %v1926
        %v1957 = vpack.c.b16 %v1929, %v1928
        %v1958 = vpack.c.b16 %v1931, %v1930
        %v1959 = vpack.c.b16 %v1933, %v1932
        %v1960 = vpack.c.b16 %v1935, %v1934
        %v1961 = vpack.c.b16 %v1937, %v1936
        %v1962 = vpack.c.b16 %v1939, %v1938
        %v1963 = vpack.c.b16 %v1941, %v1940
        %v1964 = vpack.c.b16 %v1943, %v1942
        %v1965 = vpack.c.b16 %v1945, %v1944
        %v1966 = vpack.c.b16 %v1947, %v1946
        %v1967 = vpack.c.b16 %v1949, %v1948
        %v1968 = vpack.c.b16 %v1951, %v1950
        %v1969 = vpack.c.b16 %v1953, %v1952
        %1986 = vst [vmem:[%s379 + $0xc0] sm:$0xff] %v1954
        %1987 = vst [vmem:[%s379 + $0xc8] sm:$0xff] %v1955
        %1988 = vst [vmem:[%s379 + $0xd0] sm:$0xff] %v1956
        %1989 = vst [vmem:[%s379 + $0xd8] sm:$0xff] %v1957
        %1990 = vst [vmem:[%s379 + $0xe0] sm:$0xff] %v1958
        %1991 = vst [vmem:[%s379 + $0xe8] sm:$0xff] %v1959
        %1992 = vst [vmem:[%s379 + $0xf0] sm:$0xff] %v1960
        %1993 = vst [vmem:[%s379 + $0xf8] sm:$0xff] %v1961
        %1994 = vst [vmem:[%s379 + $0x100] sm:$0xff] %v1962
        %1995 = vst [vmem:[%s379 + $0x108] sm:$0xff] %v1963
        %1996 = vst [vmem:[%s379 + $0x110] sm:$0xff] %v1964
        %1997 = vst [vmem:[%s379 + $0x118] sm:$0xff] %v1965
        %1998 = vst [vmem:[%s379 + $0x120] sm:$0xff] %v1966
        %1999 = vst [vmem:[%s379 + $0x128] sm:$0xff] %v1967
        %2000 = vst [vmem:[%s379 + $0x130] sm:$0xff] %v1968
        %2001 = vst [vmem:[%s379 + $0x138] sm:$0xff] %v1969
        %v2002 = vld [vmem:[%s5] sm:$0xff]
        %v2003 = vld [vmem:[%s5 + $0x8] sm:$0xff]
        %v2004 = vld [vmem:[%s5 + $0x10] sm:$0xff]
        %v2005 = vld [vmem:[%s5 + $0x18] sm:$0xff]
        %v2006 = vld [vmem:[%s5 + $0x20] sm:$0xff]
        %v2007 = vld [vmem:[%s5 + $0x28] sm:$0xff]
        %v2008 = vld [vmem:[%s5 + $0x30] sm:$0xff]
        %v2009 = vld [vmem:[%s5 + $0x38] sm:$0xff]
        %v2010 = vld [vmem:[%s5 + $0x40] sm:$0xff]
        %v2011 = vld [vmem:[%s5 + $0x48] sm:$0xff]
        %v2012 = vld [vmem:[%s5 + $0x50] sm:$0xff]
        %v2013 = vld [vmem:[%s5 + $0x58] sm:$0xff]
        %v2014 = vld [vmem:[%s5 + $0x60] sm:$0xff]
        %v2015 = vld [vmem:[%s5 + $0x68] sm:$0xff]
        %v2016 = vld [vmem:[%s5 + $0x70] sm:$0xff]
        %v2017 = vld [vmem:[%s5 + $0x78] sm:$0xff]
        %v2018 = vld [vmem:[%s5 + $0x80] sm:$0xff]
        %v2019 = vld [vmem:[%s5 + $0x88] sm:$0xff]
        %v2020 = vld [vmem:[%s5 + $0x90] sm:$0xff]
        %v2021 = vld [vmem:[%s5 + $0x98] sm:$0xff]
        %v2022 = vld [vmem:[%s5 + $0xa0] sm:$0xff]
        %v2023 = vld [vmem:[%s5 + $0xa8] sm:$0xff]
        %v2024 = vld [vmem:[%s5 + $0xb0] sm:$0xff]
        %v2025 = vld [vmem:[%s5 + $0xb8] sm:$0xff]
        %v2026 = vld [vmem:[%s5 + $0xc0] sm:$0xff]
        %v2027 = vld [vmem:[%s5 + $0xc8] sm:$0xff]
        %v2028 = vld [vmem:[%s5 + $0xd0] sm:$0xff]
        %v2029 = vld [vmem:[%s5 + $0xd8] sm:$0xff]
        %v2030 = vld [vmem:[%s5 + $0xe0] sm:$0xff]
        %v2031 = vld [vmem:[%s5 + $0xe8] sm:$0xff]
        %v2032 = vld [vmem:[%s5 + $0xf0] sm:$0xff]
        %v2033 = vld [vmem:[%s5 + $0xf8] sm:$0xff]
        %v2034 = vld [vmem:[%s5 + $0x100] sm:$0xff]
        %v2035 = vld [vmem:[%s5 + $0x108] sm:$0xff]
        %v2036 = vld [vmem:[%s5 + $0x110] sm:$0xff]
        %v2037 = vld [vmem:[%s5 + $0x118] sm:$0xff]
        %v2038 = vld [vmem:[%s5 + $0x120] sm:$0xff]
        %v2039 = vld [vmem:[%s5 + $0x128] sm:$0xff]
        %v2040 = vld [vmem:[%s5 + $0x130] sm:$0xff]
        %v2041 = vld [vmem:[%s5 + $0x138] sm:$0xff]
        %v2042 = vld [vmem:[%s5 + $0x140] sm:$0xff]
        %v2043 = vld [vmem:[%s5 + $0x148] sm:$0xff]
        %v2044 = vld [vmem:[%s5 + $0x150] sm:$0xff]
        %v2045 = vld [vmem:[%s5 + $0x158] sm:$0xff]
        %v2046 = vld [vmem:[%s5 + $0x160] sm:$0xff]
        %v2047 = vld [vmem:[%s5 + $0x168] sm:$0xff]
        %v2048 = vld [vmem:[%s5 + $0x170] sm:$0xff]
        %v2049 = vld [vmem:[%s5 + $0x178] sm:$0xff]
        %v2050 = vld [vmem:[%s5 + $0x180] sm:$0xff]
        %v2051 = vld [vmem:[%s5 + $0x188] sm:$0xff]
        %v2052 = vld [vmem:[%s5 + $0x190] sm:$0xff]
        %v2053 = vld [vmem:[%s5 + $0x198] sm:$0xff]
        %v2054 = vld [vmem:[%s5 + $0x1a0] sm:$0xff]
        %v2055 = vld [vmem:[%s5 + $0x1a8] sm:$0xff]
        %v2056 = vld [vmem:[%s5 + $0x1b0] sm:$0xff]
        %v2057 = vld [vmem:[%s5 + $0x1b8] sm:$0xff]
        %v2058 = vld [vmem:[%s5 + $0x1c0] sm:$0xff]
        %v2059 = vld [vmem:[%s5 + $0x1c8] sm:$0xff]
        %v2060 = vld [vmem:[%s5 + $0x1d0] sm:$0xff]
        %v2061 = vld [vmem:[%s5 + $0x1d8] sm:$0xff]
        %v2062 = vld [vmem:[%s5 + $0x1e0] sm:$0xff]
        %v2063 = vld [vmem:[%s5 + $0x1e8] sm:$0xff]
        %v2064 = vld [vmem:[%s5 + $0x1f0] sm:$0xff]
        %v2065 = vld [vmem:[%s5 + $0x1f8] sm:$0xff]
        %2066 = vmatprep.subr.mxu0 0.0
        %2067 = vmatpush1.msra.mxu0 %v2002
        %2068 = vmatprep.subr.mxu0 0.0
        %2069 = vmatpush1.msra.mxu0 %v2003
        %2070 = vmatprep.subr.mxu0 0.0
        %2071 = vmatpush1.msra.mxu0 %v2004
        %2072 = vmatprep.subr.mxu0 0.0
        %2073 = vmatpush1.msra.mxu0 %v2005
        %2074 = vmatprep.subr.mxu0 0.0
        %2075 = vmatpush1.msra.mxu0 %v2006
        %2076 = vmatprep.subr.mxu0 0.0
        %2077 = vmatpush1.msra.mxu0 %v2007
        %2078 = vmatprep.subr.mxu0 0.0
        %2079 = vmatpush1.msra.mxu0 %v2008
        %2080 = vmatprep.subr.mxu0 0.0
        %2081 = vmatpush1.msra.mxu0 %v2009
        %2082 = vmatprep.subr.mxu0 0.0
        %2083 = vmatpush1.msra.mxu0 %v2010
        %2084 = vmatprep.subr.mxu0 0.0
        %2085 = vmatpush1.msra.mxu0 %v2011
        %2086 = vmatprep.subr.mxu0 0.0
        %2087 = vmatpush1.msra.mxu0 %v2012
        %2088 = vmatprep.subr.mxu0 0.0
        %2089 = vmatpush1.msra.mxu0 %v2013
        %2090 = vmatprep.subr.mxu0 0.0
        %2091 = vmatpush1.msra.mxu0 %v2014
        %2092 = vmatprep.subr.mxu0 0.0
        %2093 = vmatpush1.msra.mxu0 %v2015
        %2094 = vmatprep.subr.mxu0 0.0
        %2095 = vmatpush1.msra.mxu0 %v2016
        %2096 = vmatprep.subr.mxu0 0.0
        %2097 = vmatpush1.msra.mxu0 %v2017
        %2098 = vmatprep.subr.mxu0 0.0
        %2099 = vmatpush1.msra.mxu0 %v2018
        %2100 = vmatprep.subr.mxu0 0.0
        %2101 = vmatpush1.msra.mxu0 %v2019
        %2102 = vmatprep.subr.mxu0 0.0
        %2103 = vmatpush1.msra.mxu0 %v2020
        %2104 = vmatprep.subr.mxu0 0.0
        %2105 = vmatpush1.msra.mxu0 %v2021
        %2106 = vmatprep.subr.mxu0 0.0
        %2107 = vmatpush1.msra.mxu0 %v2022
        %2108 = vmatprep.subr.mxu0 0.0
        %2109 = vmatpush1.msra.mxu0 %v2023
        %2110 = vmatprep.subr.mxu0 0.0
        %2111 = vmatpush1.msra.mxu0 %v2024
        %2112 = vmatprep.subr.mxu0 0.0
        %2113 = vmatpush1.msra.mxu0 %v2025
        %2114 = vmatprep.subr.mxu0 0.0
        %2115 = vmatpush1.msra.mxu0 %v2026
        %2116 = vmatprep.subr.mxu0 0.0
        %2117 = vmatpush1.msra.mxu0 %v2027
        %2118 = vmatprep.subr.mxu0 0.0
        %2119 = vmatpush1.msra.mxu0 %v2028
        %2120 = vmatprep.subr.mxu0 0.0
        %2121 = vmatpush1.msra.mxu0 %v2029
        %2122 = vmatprep.subr.mxu0 0.0
        %2123 = vmatpush1.msra.mxu0 %v2030
        %2124 = vmatprep.subr.mxu0 0.0
        %2125 = vmatpush1.msra.mxu0 %v2031
        %2126 = vmatprep.subr.mxu0 0.0
        %2127 = vmatpush1.msra.mxu0 %v2032
        %2128 = vmatprep.subr.mxu0 0.0
        %2129 = vmatpush1.msra.mxu0 %v2033
        %2130 = vmatprep.mubr.f32.mxu0 %v394
        %2131 = vmatmul.mubr.f32.gmra.mrb[0].mxu0 %v393
        %v2132 = vpop.f32.mrb[0].mxu0
        %v2133 = vadd.f32 0.0, %v2132
        %v2134 = vpop.f32.mrb[0].mxu0
        %2135 = vmatprep.mubr.f32.mxu0 %v398
        %2136 = vmatmul.mubr.f32.gmra.mrb[0].mxu0 %v397
        %v2137 = vpop.f32.mrb[0].mxu0
        %v2138 = vadd.f32 0.0, %v2137
        %v2139 = vpop.f32.mrb[0].mxu0
        %2140 = vmatprep.mubr.f32.mxu0 %v402
        %2141 = vmatmul.mubr.f32.gmra.mrb[0].mxu0 %v401
        %v2142 = vpop.f32.mrb[0].mxu0
        %v2143 = vadd.f32 0.0, %v2142
        %v2144 = vpop.f32.mrb[0].mxu0
        %2145 = vmatprep.mubr.f32.mxu0 %v406
        %2146 = vmatmul.mubr.f32.gmra.mrb[0].mxu0 %v405
        %v2147 = vpop.f32.mrb[0].mxu0
        %v2148 = vadd.f32 0.0, %v2147
        %v2149 = vpop.f32.mrb[0].mxu0
        %2150 = vdwg.mxu0
        %2151 = vmatprep.subr.mxu0 0.0
        %2152 = vmatpush1.msra.mxu0 %v2034
        %2153 = vmatprep.subr.mxu0 0.0
        %2154 = vmatpush1.msra.mxu0 %v2035
        %2155 = vmatprep.subr.mxu0 0.0
        %2156 = vmatpush1.msra.mxu0 %v2036
        %2157 = vmatprep.subr.mxu0 0.0
        %2158 = vmatpush1.msra.mxu0 %v2037
        %2159 = vmatprep.subr.mxu0 0.0
        %2160 = vmatpush1.msra.mxu0 %v2038
        %2161 = vmatprep.subr.mxu0 0.0
        %2162 = vmatpush1.msra.mxu0 %v2039
        %2163 = vmatprep.subr.mxu0 0.0
        %2164 = vmatpush1.msra.mxu0 %v2040
        %2165 = vmatprep.subr.mxu0 0.0
        %2166 = vmatpush1.msra.mxu0 %v2041
        %2167 = vmatprep.subr.mxu0 0.0
        %2168 = vmatpush1.msra.mxu0 %v2042
        %2169 = vmatprep.subr.mxu0 0.0
        %2170 = vmatpush1.msra.mxu0 %v2043
        %2171 = vmatprep.subr.mxu0 0.0
        %2172 = vmatpush1.msra.mxu0 %v2044
        %2173 = vmatprep.subr.mxu0 0.0
        %2174 = vmatpush1.msra.mxu0 %v2045
        %2175 = vmatprep.subr.mxu0 0.0
        %2176 = vmatpush1.msra.mxu0 %v2046
        %2177 = vmatprep.subr.mxu0 0.0
        %2178 = vmatpush1.msra.mxu0 %v2047
        %2179 = vmatprep.subr.mxu0 0.0
        %2180 = vmatpush1.msra.mxu0 %v2048
        %2181 = vmatprep.subr.mxu0 0.0
        %2182 = vmatpush1.msra.mxu0 %v2049
        %2183 = vmatprep.subr.mxu0 0.0
        %2184 = vmatpush1.msra.mxu0 %v2050
        %2185 = vmatprep.subr.mxu0 0.0
        %2186 = vmatpush1.msra.mxu0 %v2051
        %2187 = vmatprep.subr.mxu0 0.0
        %2188 = vmatpush1.msra.mxu0 %v2052
        %2189 = vmatprep.subr.mxu0 0.0
        %2190 = vmatpush1.msra.mxu0 %v2053
        %2191 = vmatprep.subr.mxu0 0.0
        %2192 = vmatpush1.msra.mxu0 %v2054
        %2193 = vmatprep.subr.mxu0 0.0
        %2194 = vmatpush1.msra.mxu0 %v2055
        %2195 = vmatprep.subr.mxu0 0.0
        %2196 = vmatpush1.msra.mxu0 %v2056
        %2197 = vmatprep.subr.mxu0 0.0
        %2198 = vmatpush1.msra.mxu0 %v2057
        %2199 = vmatprep.subr.mxu0 0.0
        %2200 = vmatpush1.msra.mxu0 %v2058
        %2201 = vmatprep.subr.mxu0 0.0
        %2202 = vmatpush1.msra.mxu0 %v2059
        %2203 = vmatprep.subr.mxu0 0.0
        %2204 = vmatpush1.msra.mxu0 %v2060
        %2205 = vmatprep.subr.mxu0 0.0
        %2206 = vmatpush1.msra.mxu0 %v2061
        %2207 = vmatprep.subr.mxu0 0.0
        %2208 = vmatpush1.msra.mxu0 %v2062
        %2209 = vmatprep.subr.mxu0 0.0
        %2210 = vmatpush1.msra.mxu0 %v2063
        %2211 = vmatprep.subr.mxu0 0.0
        %2212 = vmatpush1.msra.mxu0 %v2064
        %2213 = vmatprep.subr.mxu0 0.0
        %2214 = vmatpush1.msra.mxu0 %v2065
        %2215 = vmatprep.mubr.f32.mxu0 %v396
        %2216 = vmatmul.mubr.f32.gmra.mrb[0].mxu0 %v395
        %v2217 = vpop.f32.mrb[0].mxu0
        %v2218 = vadd.f32 %v2133, %v2217
        %v2219 = vpop.f32.mrb[0].mxu0
        %2220 = vmatprep.mubr.f32.mxu0 %v400
        %2221 = vmatmul.mubr.f32.gmra.mrb[0].mxu0 %v399
        %v2222 = vpop.f32.mrb[0].mxu0
        %v2223 = vadd.f32 %v2138, %v2222
        %v2224 = vpop.f32.mrb[0].mxu0
        %2225 = vmatprep.mubr.f32.mxu0 %v404
        %2226 = vmatmul.mubr.f32.gmra.mrb[0].mxu0 %v403
        %v2227 = vpop.f32.mrb[0].mxu0
        %v2228 = vadd.f32 %v2143, %v2227
        %v2229 = vpop.f32.mrb[0].mxu0
        %2230 = vmatprep.mubr.f32.mxu0 %v408
        %2231 = vmatmul.mubr.f32.gmra.mrb[0].mxu0 %v407
        %v2232 = vpop.f32.mrb[0].mxu0
        %v2233 = vadd.f32 %v2148, %v2232
        %v2234 = vpop.f32.mrb[0].mxu0
        %2235 = vdwg.mxu0
        %s2236 = scalar_lea.vmem %s1, 128
        %v2237 = vld [vmem:[%s2236] sm:$0xff]
        %v2238 = vld [vmem:[%s2236 + $0x8] sm:$0xff]
        %v2239 = vld [vmem:[%s2236 + $0x10] sm:$0xff]
        %v2240 = vld [vmem:[%s2236 + $0x18] sm:$0xff]
        %v2241 = vld [vmem:[%s2236 + $0x20] sm:$0xff]
        %v2242 = vld [vmem:[%s2236 + $0x28] sm:$0xff]
        %v2243 = vld [vmem:[%s2236 + $0x30] sm:$0xff]
        %v2244 = vld [vmem:[%s2236 + $0x38] sm:$0xff]
        %s2245 = scalar_lea.vmem %s2, 128
        %v2246 = vld [vmem:[%s2245] sm:$0xff]
        %v2247 = vld [vmem:[%s2245 + $0x8] sm:$0xff]
        %v2248 = vld [vmem:[%s2245 + $0x10] sm:$0xff]
        %v2249 = vld [vmem:[%s2245 + $0x18] sm:$0xff]
        %v2250 = vld [vmem:[%s2245 + $0x20] sm:$0xff]
        %v2251 = vld [vmem:[%s2245 + $0x28] sm:$0xff]
        %v2252 = vld [vmem:[%s2245 + $0x30] sm:$0xff]
        %v2253 = vld [vmem:[%s2245 + $0x38] sm:$0xff]
        %2255 = vset.pattern.permute.xlu0 0
        %2256 = vperm.xlu0 %2255, %v2246
        %v2257 = vpop.permute.xlu0 %2256
        %2260 = vset.pattern.permute.xlu0 0
        %2261 = vperm.xlu0 %2260, %v2247
        %v2262 = vpop.permute.xlu0 %2261
        %2265 = vset.pattern.permute.xlu0 0
        %2266 = vperm.xlu0 %2265, %v2248
        %v2267 = vpop.permute.xlu0 %2266
        %2270 = vset.pattern.permute.xlu0 0
        %2271 = vperm.xlu0 %2270, %v2249
        %v2272 = vpop.permute.xlu0 %2271
        %2275 = vset.pattern.permute.xlu0 0
        %2276 = vperm.xlu0 %2275, %v2250
        %v2277 = vpop.permute.xlu0 %2276
        %2280 = vset.pattern.permute.xlu0 0
        %2281 = vperm.xlu0 %2280, %v2251
        %v2282 = vpop.permute.xlu0 %2281
        %2285 = vset.pattern.permute.xlu0 0
        %2286 = vperm.xlu0 %2285, %v2252
        %v2287 = vpop.permute.xlu0 %2286
        %2290 = vset.pattern.permute.xlu0 0
        %2291 = vperm.xlu0 %2290, %v2253
        %v2292 = vpop.permute.xlu0 %2291
        %v2295 = vsel %vm667, %v2237, 0
        %v2298 = vsel %vm667, %v2238, 0
        %v2301 = vsel %vm667, %v2239, 0
        %v2304 = vsel %vm667, %v2240, 0
        %v2307 = vsel %vm667, %v2241, 0
        %v2310 = vsel %vm667, %v2242, 0
        %v2313 = vsel %vm667, %v2243, 0
        %v2316 = vsel %vm667, %v2244, 0
        %2318 = vmatprep.subr.mxu0 0.0
        %2319 = vmatpush1.msra.mxu0 %v2218
        %2320 = vmatprep.subr.mxu0 0.0
        %2321 = vmatpush1.msra.mxu0 %v2223
        %2322 = vmatprep.subr.mxu0 0.0
        %2323 = vmatpush1.msra.mxu0 %v2228
        %2324 = vmatprep.subr.mxu0 0.0
        %2325 = vmatpush1.msra.mxu0 %v2233
        %2326 = vmatprep.subr.mxu0 0.0
        %2327 = vmatpush1.msra.mxu0 0.0
        %2328 = vmatprep.subr.mxu0 0.0
        %2329 = vmatpush1.msra.mxu0 0.0
        %2330 = vmatprep.subr.mxu0 0.0
        %2331 = vmatpush1.msra.mxu0 0.0
        %2332 = vmatprep.subr.mxu0 0.0
        %2333 = vmatpush1.msra.mxu0 0.0
        %2334 = vmatprep.subr.mxu0 0.0
        %2335 = vmatpush1.msra.mxu0 0.0
        %2336 = vmatprep.subr.mxu0 0.0
        %2337 = vmatpush1.msra.mxu0 0.0
        %2338 = vmatprep.subr.mxu0 0.0
        %2339 = vmatpush1.msra.mxu0 0.0
        %2340 = vmatprep.subr.mxu0 0.0
        %2341 = vmatpush1.msra.mxu0 0.0
        %2342 = vmatprep.subr.mxu0 0.0
        %2343 = vmatpush1.msra.mxu0 0.0
        %2344 = vmatprep.subr.mxu0 0.0
        %2345 = vmatpush1.msra.mxu0 0.0
        %2346 = vmatprep.subr.mxu0 0.0
        %2347 = vmatpush1.msra.mxu0 0.0
        %2348 = vmatprep.subr.mxu0 0.0
        %2349 = vmatpush1.msra.mxu0 0.0
        %2350 = vmatprep.subr.mxu0 0.0
        %2351 = vmatpush1.msra.mxu0 0.0
        %2352 = vmatprep.subr.mxu0 0.0
        %2353 = vmatpush1.msra.mxu0 0.0
        %2354 = vmatprep.subr.mxu0 0.0
        %2355 = vmatpush1.msra.mxu0 0.0
        %2356 = vmatprep.subr.mxu0 0.0
        %2357 = vmatpush1.msra.mxu0 0.0
        %2358 = vmatprep.subr.mxu0 0.0
        %2359 = vmatpush1.msra.mxu0 0.0
        %2360 = vmatprep.subr.mxu0 0.0
        %2361 = vmatpush1.msra.mxu0 0.0
        %2362 = vmatprep.subr.mxu0 0.0
        %2363 = vmatpush1.msra.mxu0 0.0
        %2364 = vmatprep.subr.mxu0 0.0
        %2365 = vmatpush1.msra.mxu0 0.0
        %2366 = vmatprep.subr.mxu0 0.0
        %2367 = vmatpush1.msra.mxu0 0.0
        %2368 = vmatprep.subr.mxu0 0.0
        %2369 = vmatpush1.msra.mxu0 0.0
        %2370 = vmatprep.subr.mxu0 0.0
        %2371 = vmatpush1.msra.mxu0 0.0
        %2372 = vmatprep.subr.mxu0 0.0
        %2373 = vmatpush1.msra.mxu0 0.0
        %2374 = vmatprep.subr.mxu0 0.0
        %2375 = vmatpush1.msra.mxu0 0.0
        %2376 = vmatprep.subr.mxu0 0.0
        %2377 = vmatpush1.msra.mxu0 0.0
        %2378 = vmatprep.subr.mxu0 0.0
        %2379 = vmatpush1.msra.mxu0 0.0
        %2380 = vmatprep.subr.mxu0 0.0
        %2381 = vmatpush1.msra.mxu0 0.0
        %2382 = vmatprep.mubr.f32.mxu0 0.0
        %2383 = vmatmul.mubr.f32.gmra.mrb[0].mxu0 %v2295
        %v2384 = vpop.f32.mrb[0].mxu0
        %v2385 = vadd.f32 %v2257, %v2384
        %v2386 = vpop.f32.mrb[0].mxu0
        %2387 = vmatprep.mubr.f32.mxu0 0.0
        %2388 = vmatmul.mubr.f32.gmra.mrb[0].mxu0 %v2298
        %v2389 = vpop.f32.mrb[0].mxu0
        %v2390 = vadd.f32 %v2262, %v2389
        %v2391 = vpop.f32.mrb[0].mxu0
        %2392 = vmatprep.mubr.f32.mxu0 0.0
        %2393 = vmatmul.mubr.f32.gmra.mrb[0].mxu0 %v2301
        %v2394 = vpop.f32.mrb[0].mxu0
        %v2395 = vadd.f32 %v2267, %v2394
        %v2396 = vpop.f32.mrb[0].mxu0
        %2397 = vmatprep.mubr.f32.mxu0 0.0
        %2398 = vmatmul.mubr.f32.gmra.mrb[0].mxu0 %v2304
        %v2399 = vpop.f32.mrb[0].mxu0
        %v2400 = vadd.f32 %v2272, %v2399
        %v2401 = vpop.f32.mrb[0].mxu0
        %2402 = vmatprep.mubr.f32.mxu0 0.0
        %2403 = vmatmul.mubr.f32.gmra.mrb[0].mxu0 %v2307
        %v2404 = vpop.f32.mrb[0].mxu0
        %v2405 = vadd.f32 %v2277, %v2404
        %v2406 = vpop.f32.mrb[0].mxu0
        %2407 = vmatprep.mubr.f32.mxu0 0.0
        %2408 = vmatmul.mubr.f32.gmra.mrb[0].mxu0 %v2310
        %v2409 = vpop.f32.mrb[0].mxu0
        %v2410 = vadd.f32 %v2282, %v2409
        %v2411 = vpop.f32.mrb[0].mxu0
        %2412 = vmatprep.mubr.f32.mxu0 0.0
        %2413 = vmatmul.mubr.f32.gmra.mrb[0].mxu0 %v2313
        %v2414 = vpop.f32.mrb[0].mxu0
        %v2415 = vadd.f32 %v2287, %v2414
        %v2416 = vpop.f32.mrb[0].mxu0
        %2417 = vmatprep.mubr.f32.mxu0 0.0
        %2418 = vmatmul.mubr.f32.gmra.mrb[0].mxu0 %v2316
        %v2419 = vpop.f32.mrb[0].mxu0
        %v2420 = vadd.f32 %v2292, %v2419
        %v2421 = vpop.f32.mrb[0].mxu0
        %2422 = vdwg.mxu0
        %v2423 = vmax.f32 %v2385, 0.0
        %v2424 = vmax.f32 %v2390, 0.0
        %v2425 = vmax.f32 %v2395, 0.0
        %v2426 = vmax.f32 %v2400, 0.0
        %v2427 = vmax.f32 %v2405, 0.0
        %v2428 = vmax.f32 %v2410, 0.0
        %v2429 = vmax.f32 %v2415, 0.0
        %v2430 = vmax.f32 %v2420, 0.0
        %v2431 = vld [vmem:[%s9] sm:$0xff]
        %v2432 = vld [vmem:[%s9 + $0x8] sm:$0xff]
        %v2433 = vld [vmem:[%s9 + $0x10] sm:$0xff]
        %v2434 = vld [vmem:[%s9 + $0x18] sm:$0xff]
        %v2435 = vld [vmem:[%s9 + $0x20] sm:$0x1]
        %v2436 = vld [vmem:[%s9 + $0x28] sm:$0x1]
        %v2437 = vld [vmem:[%s9 + $0x30] sm:$0x1]
        %v2438 = vld [vmem:[%s9 + $0x38] sm:$0x1]
        %vm2439 = vcmask 72704
        %v2441 = vsel %vm2439, %v2423, 0
        %v2444 = vsel %vm2439, %v2424, 0
        %v2447 = vsel %vm2439, %v2425, 0
        %v2450 = vsel %vm2439, %v2426, 0
        %v2453 = vsel %vm2439, %v2427, 0
        %v2456 = vsel %vm2439, %v2428, 0
        %v2459 = vsel %vm2439, %v2429, 0
        %v2462 = vsel %vm2439, %v2430, 0
        %v2465 = vsel %vm848, %v2435, 0
        %v2468 = vsel %vm848, %v2436, 0
        %v2471 = vsel %vm848, %v2437, 0
        %v2474 = vsel %vm848, %v2438, 0
        %2476 = vmatprep.subr.mxu0 %v2432
        %2477 = vmatpush1.msra.mxu0 %v2431
        %2478 = vmatprep.subr.mxu0 %v2468
        %2479 = vmatpush1.msra.mxu0 %v2465
        %2480 = vmatprep.subr.mxu0 0.0
        %2481 = vmatpush1.msra.mxu0 0.0
        %2482 = vmatprep.subr.mxu0 0.0
        %2483 = vmatpush1.msra.mxu0 0.0
        %2484 = vmatprep.subr.mxu0 0.0
        %2485 = vmatpush1.msra.mxu0 0.0
        %2486 = vmatprep.subr.mxu0 0.0
        %2487 = vmatpush1.msra.mxu0 0.0
        %2488 = vmatprep.subr.mxu0 0.0
        %2489 = vmatpush1.msra.mxu0 0.0
        %2490 = vmatprep.subr.mxu0 0.0
        %2491 = vmatpush1.msra.mxu0 0.0
        %2492 = vmatprep.subr.mxu0 0.0
        %2493 = vmatpush1.msra.mxu0 0.0
        %2494 = vmatprep.subr.mxu0 0.0
        %2495 = vmatpush1.msra.mxu0 0.0
        %2496 = vmatprep.subr.mxu0 0.0
        %2497 = vmatpush1.msra.mxu0 0.0
        %2498 = vmatprep.subr.mxu0 0.0
        %2499 = vmatpush1.msra.mxu0 0.0
        %2500 = vmatprep.subr.mxu0 0.0
        %2501 = vmatpush1.msra.mxu0 0.0
        %2502 = vmatprep.subr.mxu0 0.0
        %2503 = vmatpush1.msra.mxu0 0.0
        %2504 = vmatprep.subr.mxu0 0.0
        %2505 = vmatpush1.msra.mxu0 0.0
        %2506 = vmatprep.subr.mxu0 0.0
        %2507 = vmatpush1.msra.mxu0 0.0
        %2508 = vmatprep.subr.mxu0 0.0
        %2509 = vmatpush1.msra.mxu0 0.0
        %2510 = vmatprep.subr.mxu0 0.0
        %2511 = vmatpush1.msra.mxu0 0.0
        %2512 = vmatprep.subr.mxu0 0.0
        %2513 = vmatpush1.msra.mxu0 0.0
        %2514 = vmatprep.subr.mxu0 0.0
        %2515 = vmatpush1.msra.mxu0 0.0
        %2516 = vmatprep.subr.mxu0 0.0
        %2517 = vmatpush1.msra.mxu0 0.0
        %2518 = vmatprep.subr.mxu0 0.0
        %2519 = vmatpush1.msra.mxu0 0.0
        %2520 = vmatprep.subr.mxu0 0.0
        %2521 = vmatpush1.msra.mxu0 0.0
        %2522 = vmatprep.subr.mxu0 0.0
        %2523 = vmatpush1.msra.mxu0 0.0
        %2524 = vmatprep.subr.mxu0 0.0
        %2525 = vmatpush1.msra.mxu0 0.0
        %2526 = vmatprep.subr.mxu0 0.0
        %2527 = vmatpush1.msra.mxu0 0.0
        %2528 = vmatprep.subr.mxu0 0.0
        %2529 = vmatpush1.msra.mxu0 0.0
        %2530 = vmatprep.subr.mxu0 0.0
        %2531 = vmatpush1.msra.mxu0 0.0
        %2532 = vmatprep.subr.mxu0 0.0
        %2533 = vmatpush1.msra.mxu0 0.0
        %2534 = vmatprep.subr.mxu0 0.0
        %2535 = vmatpush1.msra.mxu0 0.0
        %2536 = vmatprep.subr.mxu0 0.0
        %2537 = vmatpush1.msra.mxu0 0.0
        %2538 = vmatprep.subr.mxu0 0.0
        %2539 = vmatpush1.msra.mxu0 0.0
        %2540 = vmatprep.mubr.f32.mxu0 0.0
        %2541 = vmatmul.mubr.f32.gmra.mrb[0].mxu0 %v2441
        %v2542 = vpop.f32.mrb[0].mxu0
        %v2543 = vadd.f32 0.0, %v2542
        %v2544 = vpop.f32.mrb[0].mxu0
        %v2545 = vadd.f32 0.0, %v2544
        %2546 = vmatprep.mubr.f32.mxu0 0.0
        %2547 = vmatmul.mubr.f32.gmra.mrb[0].mxu0 %v2444
        %v2548 = vpop.f32.mrb[0].mxu0
        %v2549 = vadd.f32 0.0, %v2548
        %v2550 = vpop.f32.mrb[0].mxu0
        %v2551 = vadd.f32 0.0, %v2550
        %2552 = vmatprep.mubr.f32.mxu0 0.0
        %2553 = vmatmul.mubr.f32.gmra.mrb[0].mxu0 %v2447
        %v2554 = vpop.f32.mrb[0].mxu0
        %v2555 = vadd.f32 0.0, %v2554
        %v2556 = vpop.f32.mrb[0].mxu0
        %v2557 = vadd.f32 0.0, %v2556
        %2558 = vmatprep.mubr.f32.mxu0 0.0
        %2559 = vmatmul.mubr.f32.gmra.mrb[0].mxu0 %v2450
        %v2560 = vpop.f32.mrb[0].mxu0
        %v2561 = vadd.f32 0.0, %v2560
        %v2562 = vpop.f32.mrb[0].mxu0
        %v2563 = vadd.f32 0.0, %v2562
        %2564 = vmatprep.mubr.f32.mxu0 0.0
        %2565 = vmatmul.mubr.f32.gmra.mrb[0].mxu0 %v2453
        %v2566 = vpop.f32.mrb[0].mxu0
        %v2567 = vadd.f32 0.0, %v2566
        %v2568 = vpop.f32.mrb[0].mxu0
        %v2569 = vadd.f32 0.0, %v2568
        %2570 = vmatprep.mubr.f32.mxu0 0.0
        %2571 = vmatmul.mubr.f32.gmra.mrb[0].mxu0 %v2456
        %v2572 = vpop.f32.mrb[0].mxu0
        %v2573 = vadd.f32 0.0, %v2572
        %v2574 = vpop.f32.mrb[0].mxu0
        %v2575 = vadd.f32 0.0, %v2574
        %2576 = vmatprep.mubr.f32.mxu0 0.0
        %2577 = vmatmul.mubr.f32.gmra.mrb[0].mxu0 %v2459
        %v2578 = vpop.f32.mrb[0].mxu0
        %v2579 = vadd.f32 0.0, %v2578
        %v2580 = vpop.f32.mrb[0].mxu0
        %v2581 = vadd.f32 0.0, %v2580
        %2582 = vmatprep.mubr.f32.mxu0 0.0
        %2583 = vmatmul.mubr.f32.gmra.mrb[0].mxu0 %v2462
        %v2584 = vpop.f32.mrb[0].mxu0
        %v2585 = vadd.f32 0.0, %v2584
        %v2586 = vpop.f32.mrb[0].mxu0
        %v2587 = vadd.f32 0.0, %v2586
        %2588 = vdwg.mxu0
        %2589 = vmatprep.subr.mxu0 %v2434
        %2590 = vmatpush1.msra.mxu0 %v2433
        %2591 = vmatprep.subr.mxu0 %v2474
        %2592 = vmatpush1.msra.mxu0 %v2471
        %2593 = vmatprep.subr.mxu0 0.0
        %2594 = vmatpush1.msra.mxu0 0.0
        %2595 = vmatprep.subr.mxu0 0.0
        %2596 = vmatpush1.msra.mxu0 0.0
        %2597 = vmatprep.subr.mxu0 0.0
        %2598 = vmatpush1.msra.mxu0 0.0
        %2599 = vmatprep.subr.mxu0 0.0
        %2600 = vmatpush1.msra.mxu0 0.0
        %2601 = vmatprep.subr.mxu0 0.0
        %2602 = vmatpush1.msra.mxu0 0.0
        %2603 = vmatprep.subr.mxu0 0.0
        %2604 = vmatpush1.msra.mxu0 0.0
        %2605 = vmatprep.subr.mxu0 0.0
        %2606 = vmatpush1.msra.mxu0 0.0
        %2607 = vmatprep.subr.mxu0 0.0
        %2608 = vmatpush1.msra.mxu0 0.0
        %2609 = vmatprep.subr.mxu0 0.0
        %2610 = vmatpush1.msra.mxu0 0.0
        %2611 = vmatprep.subr.mxu0 0.0
        %2612 = vmatpush1.msra.mxu0 0.0
        %2613 = vmatprep.subr.mxu0 0.0
        %2614 = vmatpush1.msra.mxu0 0.0
        %2615 = vmatprep.subr.mxu0 0.0
        %2616 = vmatpush1.msra.mxu0 0.0
        %2617 = vmatprep.subr.mxu0 0.0
        %2618 = vmatpush1.msra.mxu0 0.0
        %2619 = vmatprep.subr.mxu0 0.0
        %2620 = vmatpush1.msra.mxu0 0.0
        %2621 = vmatprep.subr.mxu0 0.0
        %2622 = vmatpush1.msra.mxu0 0.0
        %2623 = vmatprep.subr.mxu0 0.0
        %2624 = vmatpush1.msra.mxu0 0.0
        %2625 = vmatprep.subr.mxu0 0.0
        %2626 = vmatpush1.msra.mxu0 0.0
        %2627 = vmatprep.subr.mxu0 0.0
        %2628 = vmatpush1.msra.mxu0 0.0
        %2629 = vmatprep.subr.mxu0 0.0
        %2630 = vmatpush1.msra.mxu0 0.0
        %2631 = vmatprep.subr.mxu0 0.0
        %2632 = vmatpush1.msra.mxu0 0.0
        %2633 = vmatprep.subr.mxu0 0.0
        %2634 = vmatpush1.msra.mxu0 0.0
        %2635 = vmatprep.subr.mxu0 0.0
        %2636 = vmatpush1.msra.mxu0 0.0
        %2637 = vmatprep.subr.mxu0 0.0
        %2638 = vmatpush1.msra.mxu0 0.0
        %2639 = vmatprep.subr.mxu0 0.0
        %2640 = vmatpush1.msra.mxu0 0.0
        %2641 = vmatprep.subr.mxu0 0.0
        %2642 = vmatpush1.msra.mxu0 0.0
        %2643 = vmatprep.subr.mxu0 0.0
        %2644 = vmatpush1.msra.mxu0 0.0
        %2645 = vmatprep.subr.mxu0 0.0
        %2646 = vmatpush1.msra.mxu0 0.0
        %2647 = vmatprep.subr.mxu0 0.0
        %2648 = vmatpush1.msra.mxu0 0.0
        %2649 = vmatprep.subr.mxu0 0.0
        %2650 = vmatpush1.msra.mxu0 0.0
        %2651 = vmatprep.subr.mxu0 0.0
        %2652 = vmatpush1.msra.mxu0 0.0
        %2653 = vmatprep.mubr.f32.mxu0 0.0
        %2654 = vmatmul.mubr.f32.gmra.mrb[0].mxu0 %v2441
        %v2655 = vpop.f32.mrb[0].mxu0
        %v2656 = vadd.f32 0.0, %v2655
        %v2657 = vpop.f32.mrb[0].mxu0
        %v2658 = vadd.f32 0.0, %v2657
        %2659 = vmatprep.mubr.f32.mxu0 0.0
        %2660 = vmatmul.mubr.f32.gmra.mrb[0].mxu0 %v2444
        %v2661 = vpop.f32.mrb[0].mxu0
        %v2662 = vadd.f32 0.0, %v2661
        %v2663 = vpop.f32.mrb[0].mxu0
        %v2664 = vadd.f32 0.0, %v2663
        %2665 = vmatprep.mubr.f32.mxu0 0.0
        %2666 = vmatmul.mubr.f32.gmra.mrb[0].mxu0 %v2447
        %v2667 = vpop.f32.mrb[0].mxu0
        %v2668 = vadd.f32 0.0, %v2667
        %v2669 = vpop.f32.mrb[0].mxu0
        %v2670 = vadd.f32 0.0, %v2669
        %2671 = vmatprep.mubr.f32.mxu0 0.0
        %2672 = vmatmul.mubr.f32.gmra.mrb[0].mxu0 %v2450
        %v2673 = vpop.f32.mrb[0].mxu0
        %v2674 = vadd.f32 0.0, %v2673
        %v2675 = vpop.f32.mrb[0].mxu0
        %v2676 = vadd.f32 0.0, %v2675
        %2677 = vmatprep.mubr.f32.mxu0 0.0
        %2678 = vmatmul.mubr.f32.gmra.mrb[0].mxu0 %v2453
        %v2679 = vpop.f32.mrb[0].mxu0
        %v2680 = vadd.f32 0.0, %v2679
        %v2681 = vpop.f32.mrb[0].mxu0
        %v2682 = vadd.f32 0.0, %v2681
        %2683 = vmatprep.mubr.f32.mxu0 0.0
        %2684 = vmatmul.mubr.f32.gmra.mrb[0].mxu0 %v2456
        %v2685 = vpop.f32.mrb[0].mxu0
        %v2686 = vadd.f32 0.0, %v2685
        %v2687 = vpop.f32.mrb[0].mxu0
        %v2688 = vadd.f32 0.0, %v2687
        %2689 = vmatprep.mubr.f32.mxu0 0.0
        %2690 = vmatmul.mubr.f32.gmra.mrb[0].mxu0 %v2459
        %v2691 = vpop.f32.mrb[0].mxu0
        %v2692 = vadd.f32 0.0, %v2691
        %v2693 = vpop.f32.mrb[0].mxu0
        %v2694 = vadd.f32 0.0, %v2693
        %2695 = vmatprep.mubr.f32.mxu0 0.0
        %2696 = vmatmul.mubr.f32.gmra.mrb[0].mxu0 %v2462
        %v2697 = vpop.f32.mrb[0].mxu0
        %v2698 = vadd.f32 0.0, %v2697
        %v2699 = vpop.f32.mrb[0].mxu0
        %v2700 = vadd.f32 0.0, %v2699
        %2701 = vdwg.mxu0
        %v2702 = vpack.c.bf16 %v2549, %v2543
        %v2703 = vpack.c.bf16 %v2551, %v2545
        %v2704 = vpack.c.bf16 %v2662, %v2656
        %v2705 = vpack.c.bf16 %v2664, %v2658
        %v2706 = vpack.c.bf16 %v2561, %v2555
        %v2707 = vpack.c.bf16 %v2563, %v2557
        %v2708 = vpack.c.bf16 %v2674, %v2668
        %v2709 = vpack.c.bf16 %v2676, %v2670
        %v2710 = vpack.c.bf16 %v2573, %v2567
        %v2711 = vpack.c.bf16 %v2575, %v2569
        %v2712 = vpack.c.bf16 %v2686, %v2680
        %v2713 = vpack.c.bf16 %v2688, %v2682
        %v2714 = vpack.c.bf16 %v2585, %v2579
        %v2715 = vpack.c.bf16 %v2587, %v2581
        %v2716 = vpack.c.bf16 %v2698, %v2692
        %v2717 = vpack.c.bf16 %v2700, %v2694
        %v2734 = vunpack.c.l.b16 %v2702
        %v2735 = vunpack.c.l.b16 %v2703
        %v2736 = vunpack.c.l.b16 %v2704
        %v2737 = vunpack.c.l.b16 %v2705
        %v2738 = vunpack.c.h.b16 %v2702
        %v2739 = vunpack.c.h.b16 %v2703
        %v2740 = vunpack.c.h.b16 %v2704
        %v2741 = vunpack.c.h.b16 %v2705
        %v2742 = vunpack.c.l.b16 %v2706
        %v2743 = vunpack.c.l.b16 %v2707
        %v2744 = vunpack.c.l.b16 %v2708
        %v2745 = vunpack.c.l.b16 %v2709
        %v2746 = vunpack.c.h.b16 %v2706
        %v2747 = vunpack.c.h.b16 %v2707
        %v2748 = vunpack.c.h.b16 %v2708
        %v2749 = vunpack.c.h.b16 %v2709
        %v2750 = vunpack.c.l.b16 %v2710
        %v2751 = vunpack.c.l.b16 %v2711
        %v2752 = vunpack.c.l.b16 %v2712
        %v2753 = vunpack.c.l.b16 %v2713
        %v2754 = vunpack.c.h.b16 %v2710
        %v2755 = vunpack.c.h.b16 %v2711
        %v2756 = vunpack.c.h.b16 %v2712
        %v2757 = vunpack.c.h.b16 %v2713
        %v2758 = vunpack.c.l.b16 %v2714
        %v2759 = vunpack.c.l.b16 %v2715
        %v2760 = vunpack.c.l.b16 %v2716
        %v2761 = vunpack.c.l.b16 %v2717
        %v2762 = vunpack.c.h.b16 %v2714
        %v2763 = vunpack.c.h.b16 %v2715
        %v2764 = vunpack.c.h.b16 %v2716
        %v2765 = vunpack.c.h.b16 %v2717
        %v2766 = vpack.c.b16 %v2735, %v2734
        %v2767 = vpack.c.b16 %v2737, %v2736
        %v2768 = vpack.c.b16 %v2739, %v2738
        %v2769 = vpack.c.b16 %v2741, %v2740
        %v2770 = vpack.c.b16 %v2743, %v2742
        %v2771 = vpack.c.b16 %v2745, %v2744
        %v2772 = vpack.c.b16 %v2747, %v2746
        %v2773 = vpack.c.b16 %v2749, %v2748
        %v2774 = vpack.c.b16 %v2751, %v2750
        %v2775 = vpack.c.b16 %v2753, %v2752
        %v2776 = vpack.c.b16 %v2755, %v2754
        %v2777 = vpack.c.b16 %v2757, %v2756
        %v2778 = vpack.c.b16 %v2759, %v2758
        %v2779 = vpack.c.b16 %v2761, %v2760
        %v2780 = vpack.c.b16 %v2763, %v2762
        %v2781 = vpack.c.b16 %v2765, %v2764
        %2798 = vst [vmem:[%s379 + $0x140] sm:$0xff] %v2766
        %2799 = vst [vmem:[%s379 + $0x148] sm:$0xff] %v2767
        %2800 = vst [vmem:[%s379 + $0x150] sm:$0xff] %v2768
        %2801 = vst [vmem:[%s379 + $0x158] sm:$0xff] %v2769
        %2802 = vst [vmem:[%s379 + $0x160] sm:$0xff] %v2770
        %2803 = vst [vmem:[%s379 + $0x168] sm:$0xff] %v2771
        %2804 = vst [vmem:[%s379 + $0x170] sm:$0xff] %v2772
        %2805 = vst [vmem:[%s379 + $0x178] sm:$0xff] %v2773
        %2806 = vst [vmem:[%s379 + $0x180] sm:$0xff] %v2774
        %2807 = vst [vmem:[%s379 + $0x188] sm:$0xff] %v2775
        %2808 = vst [vmem:[%s379 + $0x190] sm:$0xff] %v2776
        %2809 = vst [vmem:[%s379 + $0x198] sm:$0xff] %v2777
        %2810 = vst [vmem:[%s379 + $0x1a0] sm:$0xff] %v2778
        %2811 = vst [vmem:[%s379 + $0x1a8] sm:$0xff] %v2779
        %2812 = vst [vmem:[%s379 + $0x1b0] sm:$0xff] %v2780
        %2813 = vst [vmem:[%s379 + $0x1b8] sm:$0xff] %v2781
        %v2814 = vld [vmem:[%s6] sm:$0xff]
        %v2815 = vld [vmem:[%s6 + $0x8] sm:$0xff]
        %v2816 = vld [vmem:[%s6 + $0x10] sm:$0xff]
        %v2817 = vld [vmem:[%s6 + $0x18] sm:$0xff]
        %v2818 = vld [vmem:[%s6 + $0x20] sm:$0xff]
        %v2819 = vld [vmem:[%s6 + $0x28] sm:$0xff]
        %v2820 = vld [vmem:[%s6 + $0x30] sm:$0xff]
        %v2821 = vld [vmem:[%s6 + $0x38] sm:$0xff]
        %v2822 = vld [vmem:[%s6 + $0x40] sm:$0xff]
        %v2823 = vld [vmem:[%s6 + $0x48] sm:$0xff]
        %v2824 = vld [vmem:[%s6 + $0x50] sm:$0xff]
        %v2825 = vld [vmem:[%s6 + $0x58] sm:$0xff]
        %v2826 = vld [vmem:[%s6 + $0x60] sm:$0xff]
        %v2827 = vld [vmem:[%s6 + $0x68] sm:$0xff]
        %v2828 = vld [vmem:[%s6 + $0x70] sm:$0xff]
        %v2829 = vld [vmem:[%s6 + $0x78] sm:$0xff]
        %v2830 = vld [vmem:[%s6 + $0x80] sm:$0xff]
        %v2831 = vld [vmem:[%s6 + $0x88] sm:$0xff]
        %v2832 = vld [vmem:[%s6 + $0x90] sm:$0xff]
        %v2833 = vld [vmem:[%s6 + $0x98] sm:$0xff]
        %v2834 = vld [vmem:[%s6 + $0xa0] sm:$0xff]
        %v2835 = vld [vmem:[%s6 + $0xa8] sm:$0xff]
        %v2836 = vld [vmem:[%s6 + $0xb0] sm:$0xff]
        %v2837 = vld [vmem:[%s6 + $0xb8] sm:$0xff]
        %v2838 = vld [vmem:[%s6 + $0xc0] sm:$0xff]
        %v2839 = vld [vmem:[%s6 + $0xc8] sm:$0xff]
        %v2840 = vld [vmem:[%s6 + $0xd0] sm:$0xff]
        %v2841 = vld [vmem:[%s6 + $0xd8] sm:$0xff]
        %v2842 = vld [vmem:[%s6 + $0xe0] sm:$0xff]
        %v2843 = vld [vmem:[%s6 + $0xe8] sm:$0xff]
        %v2844 = vld [vmem:[%s6 + $0xf0] sm:$0xff]
        %v2845 = vld [vmem:[%s6 + $0xf8] sm:$0xff]
        %v2846 = vld [vmem:[%s6 + $0x100] sm:$0xff]
        %v2847 = vld [vmem:[%s6 + $0x108] sm:$0xff]
        %v2848 = vld [vmem:[%s6 + $0x110] sm:$0xff]
        %v2849 = vld [vmem:[%s6 + $0x118] sm:$0xff]
        %v2850 = vld [vmem:[%s6 + $0x120] sm:$0xff]
        %v2851 = vld [vmem:[%s6 + $0x128] sm:$0xff]
        %v2852 = vld [vmem:[%s6 + $0x130] sm:$0xff]
        %v2853 = vld [vmem:[%s6 + $0x138] sm:$0xff]
        %v2854 = vld [vmem:[%s6 + $0x140] sm:$0xff]
        %v2855 = vld [vmem:[%s6 + $0x148] sm:$0xff]
        %v2856 = vld [vmem:[%s6 + $0x150] sm:$0xff]
        %v2857 = vld [vmem:[%s6 + $0x158] sm:$0xff]
        %v2858 = vld [vmem:[%s6 + $0x160] sm:$0xff]
        %v2859 = vld [vmem:[%s6 + $0x168] sm:$0xff]
        %v2860 = vld [vmem:[%s6 + $0x170] sm:$0xff]
        %v2861 = vld [vmem:[%s6 + $0x178] sm:$0xff]
        %v2862 = vld [vmem:[%s6 + $0x180] sm:$0xff]
        %v2863 = vld [vmem:[%s6 + $0x188] sm:$0xff]
        %v2864 = vld [vmem:[%s6 + $0x190] sm:$0xff]
        %v2865 = vld [vmem:[%s6 + $0x198] sm:$0xff]
        %v2866 = vld [vmem:[%s6 + $0x1a0] sm:$0xff]
        %v2867 = vld [vmem:[%s6 + $0x1a8] sm:$0xff]
        %v2868 = vld [vmem:[%s6 + $0x1b0] sm:$0xff]
        %v2869 = vld [vmem:[%s6 + $0x1b8] sm:$0xff]
        %v2870 = vld [vmem:[%s6 + $0x1c0] sm:$0xff]
        %v2871 = vld [vmem:[%s6 + $0x1c8] sm:$0xff]
        %v2872 = vld [vmem:[%s6 + $0x1d0] sm:$0xff]
        %v2873 = vld [vmem:[%s6 + $0x1d8] sm:$0xff]
        %v2874 = vld [vmem:[%s6 + $0x1e0] sm:$0xff]
        %v2875 = vld [vmem:[%s6 + $0x1e8] sm:$0xff]
        %v2876 = vld [vmem:[%s6 + $0x1f0] sm:$0xff]
        %v2877 = vld [vmem:[%s6 + $0x1f8] sm:$0xff]
        %2878 = vmatprep.subr.mxu0 0.0
        %2879 = vmatpush1.msra.mxu0 %v2814
        %2880 = vmatprep.subr.mxu0 0.0
        %2881 = vmatpush1.msra.mxu0 %v2815
        %2882 = vmatprep.subr.mxu0 0.0
        %2883 = vmatpush1.msra.mxu0 %v2816
        %2884 = vmatprep.subr.mxu0 0.0
        %2885 = vmatpush1.msra.mxu0 %v2817
        %2886 = vmatprep.subr.mxu0 0.0
        %2887 = vmatpush1.msra.mxu0 %v2818
        %2888 = vmatprep.subr.mxu0 0.0
        %2889 = vmatpush1.msra.mxu0 %v2819
        %2890 = vmatprep.subr.mxu0 0.0
        %2891 = vmatpush1.msra.mxu0 %v2820
        %2892 = vmatprep.subr.mxu0 0.0
        %2893 = vmatpush1.msra.mxu0 %v2821
        %2894 = vmatprep.subr.mxu0 0.0
        %2895 = vmatpush1.msra.mxu0 %v2822
        %2896 = vmatprep.subr.mxu0 0.0
        %2897 = vmatpush1.msra.mxu0 %v2823
        %2898 = vmatprep.subr.mxu0 0.0
        %2899 = vmatpush1.msra.mxu0 %v2824
        %2900 = vmatprep.subr.mxu0 0.0
        %2901 = vmatpush1.msra.mxu0 %v2825
        %2902 = vmatprep.subr.mxu0 0.0
        %2903 = vmatpush1.msra.mxu0 %v2826
        %2904 = vmatprep.subr.mxu0 0.0
        %2905 = vmatpush1.msra.mxu0 %v2827
        %2906 = vmatprep.subr.mxu0 0.0
        %2907 = vmatpush1.msra.mxu0 %v2828
        %2908 = vmatprep.subr.mxu0 0.0
        %2909 = vmatpush1.msra.mxu0 %v2829
        %2910 = vmatprep.subr.mxu0 0.0
        %2911 = vmatpush1.msra.mxu0 %v2830
        %2912 = vmatprep.subr.mxu0 0.0
        %2913 = vmatpush1.msra.mxu0 %v2831
        %2914 = vmatprep.subr.mxu0 0.0
        %2915 = vmatpush1.msra.mxu0 %v2832
        %2916 = vmatprep.subr.mxu0 0.0
        %2917 = vmatpush1.msra.mxu0 %v2833
        %2918 = vmatprep.subr.mxu0 0.0
        %2919 = vmatpush1.msra.mxu0 %v2834
        %2920 = vmatprep.subr.mxu0 0.0
        %2921 = vmatpush1.msra.mxu0 %v2835
        %2922 = vmatprep.subr.mxu0 0.0
        %2923 = vmatpush1.msra.mxu0 %v2836
        %2924 = vmatprep.subr.mxu0 0.0
        %2925 = vmatpush1.msra.mxu0 %v2837
        %2926 = vmatprep.subr.mxu0 0.0
        %2927 = vmatpush1.msra.mxu0 %v2838
        %2928 = vmatprep.subr.mxu0 0.0
        %2929 = vmatpush1.msra.mxu0 %v2839
        %2930 = vmatprep.subr.mxu0 0.0
        %2931 = vmatpush1.msra.mxu0 %v2840
        %2932 = vmatprep.subr.mxu0 0.0
        %2933 = vmatpush1.msra.mxu0 %v2841
        %2934 = vmatprep.subr.mxu0 0.0
        %2935 = vmatpush1.msra.mxu0 %v2842
        %2936 = vmatprep.subr.mxu0 0.0
        %2937 = vmatpush1.msra.mxu0 %v2843
        %2938 = vmatprep.subr.mxu0 0.0
        %2939 = vmatpush1.msra.mxu0 %v2844
        %2940 = vmatprep.subr.mxu0 0.0
        %2941 = vmatpush1.msra.mxu0 %v2845
        %2942 = vmatprep.mubr.f32.mxu0 %v394
        %2943 = vmatmul.mubr.f32.gmra.mrb[0].mxu0 %v393
        %v2944 = vpop.f32.mrb[0].mxu0
        %v2945 = vadd.f32 0.0, %v2944
        %v2946 = vpop.f32.mrb[0].mxu0
        %2947 = vmatprep.mubr.f32.mxu0 %v398
        %2948 = vmatmul.mubr.f32.gmra.mrb[0].mxu0 %v397
        %v2949 = vpop.f32.mrb[0].mxu0
        %v2950 = vadd.f32 0.0, %v2949
        %v2951 = vpop.f32.mrb[0].mxu0
        %2952 = vmatprep.mubr.f32.mxu0 %v402
        %2953 = vmatmul.mubr.f32.gmra.mrb[0].mxu0 %v401
        %v2954 = vpop.f32.mrb[0].mxu0
        %v2955 = vadd.f32 0.0, %v2954
        %v2956 = vpop.f32.mrb[0].mxu0
        %2957 = vmatprep.mubr.f32.mxu0 %v406
        %2958 = vmatmul.mubr.f32.gmra.mrb[0].mxu0 %v405
        %v2959 = vpop.f32.mrb[0].mxu0
        %v2960 = vadd.f32 0.0, %v2959
        %v2961 = vpop.f32.mrb[0].mxu0
        %2962 = vdwg.mxu0
        %2963 = vmatprep.subr.mxu0 0.0
        %2964 = vmatpush1.msra.mxu0 %v2846
        %2965 = vmatprep.subr.mxu0 0.0
        %2966 = vmatpush1.msra.mxu0 %v2847
        %2967 = vmatprep.subr.mxu0 0.0
        %2968 = vmatpush1.msra.mxu0 %v2848
        %2969 = vmatprep.subr.mxu0 0.0
        %2970 = vmatpush1.msra.mxu0 %v2849
        %2971 = vmatprep.subr.mxu0 0.0
        %2972 = vmatpush1.msra.mxu0 %v2850
        %2973 = vmatprep.subr.mxu0 0.0
        %2974 = vmatpush1.msra.mxu0 %v2851
        %2975 = vmatprep.subr.mxu0 0.0
        %2976 = vmatpush1.msra.mxu0 %v2852
        %2977 = vmatprep.subr.mxu0 0.0
        %2978 = vmatpush1.msra.mxu0 %v2853
        %2979 = vmatprep.subr.mxu0 0.0
        %2980 = vmatpush1.msra.mxu0 %v2854
        %2981 = vmatprep.subr.mxu0 0.0
        %2982 = vmatpush1.msra.mxu0 %v2855
        %2983 = vmatprep.subr.mxu0 0.0
        %2984 = vmatpush1.msra.mxu0 %v2856
        %2985 = vmatprep.subr.mxu0 0.0
        %2986 = vmatpush1.msra.mxu0 %v2857
        %2987 = vmatprep.subr.mxu0 0.0
        %2988 = vmatpush1.msra.mxu0 %v2858
        %2989 = vmatprep.subr.mxu0 0.0
        %2990 = vmatpush1.msra.mxu0 %v2859
        %2991 = vmatprep.subr.mxu0 0.0
        %2992 = vmatpush1.msra.mxu0 %v2860
        %2993 = vmatprep.subr.mxu0 0.0
        %2994 = vmatpush1.msra.mxu0 %v2861
        %2995 = vmatprep.subr.mxu0 0.0
        %2996 = vmatpush1.msra.mxu0 %v2862
        %2997 = vmatprep.subr.mxu0 0.0
        %2998 = vmatpush1.msra.mxu0 %v2863
        %2999 = vmatprep.subr.mxu0 0.0
        %3000 = vmatpush1.msra.mxu0 %v2864
        %3001 = vmatprep.subr.mxu0 0.0
        %3002 = vmatpush1.msra.mxu0 %v2865
        %3003 = vmatprep.subr.mxu0 0.0
        %3004 = vmatpush1.msra.mxu0 %v2866
        %3005 = vmatprep.subr.mxu0 0.0
        %3006 = vmatpush1.msra.mxu0 %v2867
        %3007 = vmatprep.subr.mxu0 0.0
        %3008 = vmatpush1.msra.mxu0 %v2868
        %3009 = vmatprep.subr.mxu0 0.0
        %3010 = vmatpush1.msra.mxu0 %v2869
        %3011 = vmatprep.subr.mxu0 0.0
        %3012 = vmatpush1.msra.mxu0 %v2870
        %3013 = vmatprep.subr.mxu0 0.0
        %3014 = vmatpush1.msra.mxu0 %v2871
        %3015 = vmatprep.subr.mxu0 0.0
        %3016 = vmatpush1.msra.mxu0 %v2872
        %3017 = vmatprep.subr.mxu0 0.0
        %3018 = vmatpush1.msra.mxu0 %v2873
        %3019 = vmatprep.subr.mxu0 0.0
        %3020 = vmatpush1.msra.mxu0 %v2874
        %3021 = vmatprep.subr.mxu0 0.0
        %3022 = vmatpush1.msra.mxu0 %v2875
        %3023 = vmatprep.subr.mxu0 0.0
        %3024 = vmatpush1.msra.mxu0 %v2876
        %3025 = vmatprep.subr.mxu0 0.0
        %3026 = vmatpush1.msra.mxu0 %v2877
        %3027 = vmatprep.mubr.f32.mxu0 %v396
        %3028 = vmatmul.mubr.f32.gmra.mrb[0].mxu0 %v395
        %v3029 = vpop.f32.mrb[0].mxu0
        %v3030 = vadd.f32 %v2945, %v3029
        %v3031 = vpop.f32.mrb[0].mxu0
        %3032 = vmatprep.mubr.f32.mxu0 %v400
        %3033 = vmatmul.mubr.f32.gmra.mrb[0].mxu0 %v399
        %v3034 = vpop.f32.mrb[0].mxu0
        %v3035 = vadd.f32 %v2950, %v3034
        %v3036 = vpop.f32.mrb[0].mxu0
        %3037 = vmatprep.mubr.f32.mxu0 %v404
        %3038 = vmatmul.mubr.f32.gmra.mrb[0].mxu0 %v403
        %v3039 = vpop.f32.mrb[0].mxu0
        %v3040 = vadd.f32 %v2955, %v3039
        %v3041 = vpop.f32.mrb[0].mxu0
        %3042 = vmatprep.mubr.f32.mxu0 %v408
        %3043 = vmatmul.mubr.f32.gmra.mrb[0].mxu0 %v407
        %v3044 = vpop.f32.mrb[0].mxu0
        %v3045 = vadd.f32 %v2960, %v3044
        %v3046 = vpop.f32.mrb[0].mxu0
        %3047 = vdwg.mxu0
        %s3048 = scalar_lea.vmem %s1, 192
        %v3049 = vld [vmem:[%s3048] sm:$0xff]
        %v3050 = vld [vmem:[%s3048 + $0x8] sm:$0xff]
        %v3051 = vld [vmem:[%s3048 + $0x10] sm:$0xff]
        %v3052 = vld [vmem:[%s3048 + $0x18] sm:$0xff]
        %v3053 = vld [vmem:[%s3048 + $0x20] sm:$0xff]
        %v3054 = vld [vmem:[%s3048 + $0x28] sm:$0xff]
        %v3055 = vld [vmem:[%s3048 + $0x30] sm:$0xff]
        %v3056 = vld [vmem:[%s3048 + $0x38] sm:$0xff]
        %s3057 = scalar_lea.vmem %s2, 192
        %v3058 = vld [vmem:[%s3057] sm:$0xff]
        %v3059 = vld [vmem:[%s3057 + $0x8] sm:$0xff]
        %v3060 = vld [vmem:[%s3057 + $0x10] sm:$0xff]
        %v3061 = vld [vmem:[%s3057 + $0x18] sm:$0xff]
        %v3062 = vld [vmem:[%s3057 + $0x20] sm:$0xff]
        %v3063 = vld [vmem:[%s3057 + $0x28] sm:$0xff]
        %v3064 = vld [vmem:[%s3057 + $0x30] sm:$0xff]
        %v3065 = vld [vmem:[%s3057 + $0x38] sm:$0xff]
        %3067 = vset.pattern.permute.xlu0 0
        %3068 = vperm.xlu0 %3067, %v3058
        %v3069 = vpop.permute.xlu0 %3068
        %3072 = vset.pattern.permute.xlu0 0
        %3073 = vperm.xlu0 %3072, %v3059
        %v3074 = vpop.permute.xlu0 %3073
        %3077 = vset.pattern.permute.xlu0 0
        %3078 = vperm.xlu0 %3077, %v3060
        %v3079 = vpop.permute.xlu0 %3078
        %3082 = vset.pattern.permute.xlu0 0
        %3083 = vperm.xlu0 %3082, %v3061
        %v3084 = vpop.permute.xlu0 %3083
        %3087 = vset.pattern.permute.xlu0 0
        %3088 = vperm.xlu0 %3087, %v3062
        %v3089 = vpop.permute.xlu0 %3088
        %3092 = vset.pattern.permute.xlu0 0
        %3093 = vperm.xlu0 %3092, %v3063
        %v3094 = vpop.permute.xlu0 %3093
        %3097 = vset.pattern.permute.xlu0 0
        %3098 = vperm.xlu0 %3097, %v3064
        %v3099 = vpop.permute.xlu0 %3098
        %3102 = vset.pattern.permute.xlu0 0
        %3103 = vperm.xlu0 %3102, %v3065
        %v3104 = vpop.permute.xlu0 %3103
        %v3107 = vsel %vm667, %v3049, 0
        %v3110 = vsel %vm667, %v3050, 0
        %v3113 = vsel %vm667, %v3051, 0
        %v3116 = vsel %vm667, %v3052, 0
        %v3119 = vsel %vm667, %v3053, 0
        %v3122 = vsel %vm667, %v3054, 0
        %v3125 = vsel %vm667, %v3055, 0
        %v3128 = vsel %vm667, %v3056, 0
        %3130 = vmatprep.subr.mxu0 0.0
        %3131 = vmatpush1.msra.mxu0 %v3030
        %3132 = vmatprep.subr.mxu0 0.0
        %3133 = vmatpush1.msra.mxu0 %v3035
        %3134 = vmatprep.subr.mxu0 0.0
        %3135 = vmatpush1.msra.mxu0 %v3040
        %3136 = vmatprep.subr.mxu0 0.0
        %3137 = vmatpush1.msra.mxu0 %v3045
        %3138 = vmatprep.subr.mxu0 0.0
        %3139 = vmatpush1.msra.mxu0 0.0
        %3140 = vmatprep.subr.mxu0 0.0
        %3141 = vmatpush1.msra.mxu0 0.0
        %3142 = vmatprep.subr.mxu0 0.0
        %3143 = vmatpush1.msra.mxu0 0.0
        %3144 = vmatprep.subr.mxu0 0.0
        %3145 = vmatpush1.msra.mxu0 0.0
        %3146 = vmatprep.subr.mxu0 0.0
        %3147 = vmatpush1.msra.mxu0 0.0
        %3148 = vmatprep.subr.mxu0 0.0
        %3149 = vmatpush1.msra.mxu0 0.0
        %3150 = vmatprep.subr.mxu0 0.0
        %3151 = vmatpush1.msra.mxu0 0.0
        %3152 = vmatprep.subr.mxu0 0.0
        %3153 = vmatpush1.msra.mxu0 0.0
        %3154 = vmatprep.subr.mxu0 0.0
        %3155 = vmatpush1.msra.mxu0 0.0
        %3156 = vmatprep.subr.mxu0 0.0
        %3157 = vmatpush1.msra.mxu0 0.0
        %3158 = vmatprep.subr.mxu0 0.0
        %3159 = vmatpush1.msra.mxu0 0.0
        %3160 = vmatprep.subr.mxu0 0.0
        %3161 = vmatpush1.msra.mxu0 0.0
        %3162 = vmatprep.subr.mxu0 0.0
        %3163 = vmatpush1.msra.mxu0 0.0
        %3164 = vmatprep.subr.mxu0 0.0
        %3165 = vmatpush1.msra.mxu0 0.0
        %3166 = vmatprep.subr.mxu0 0.0
        %3167 = vmatpush1.msra.mxu0 0.0
        %3168 = vmatprep.subr.mxu0 0.0
        %3169 = vmatpush1.msra.mxu0 0.0
        %3170 = vmatprep.subr.mxu0 0.0
        %3171 = vmatpush1.msra.mxu0 0.0
        %3172 = vmatprep.subr.mxu0 0.0
        %3173 = vmatpush1.msra.mxu0 0.0
        %3174 = vmatprep.subr.mxu0 0.0
        %3175 = vmatpush1.msra.mxu0 0.0
        %3176 = vmatprep.subr.mxu0 0.0
        %3177 = vmatpush1.msra.mxu0 0.0
        %3178 = vmatprep.subr.mxu0 0.0
        %3179 = vmatpush1.msra.mxu0 0.0
        %3180 = vmatprep.subr.mxu0 0.0
        %3181 = vmatpush1.msra.mxu0 0.0
        %3182 = vmatprep.subr.mxu0 0.0
        %3183 = vmatpush1.msra.mxu0 0.0
        %3184 = vmatprep.subr.mxu0 0.0
        %3185 = vmatpush1.msra.mxu0 0.0
        %3186 = vmatprep.subr.mxu0 0.0
        %3187 = vmatpush1.msra.mxu0 0.0
        %3188 = vmatprep.subr.mxu0 0.0
        %3189 = vmatpush1.msra.mxu0 0.0
        %3190 = vmatprep.subr.mxu0 0.0
        %3191 = vmatpush1.msra.mxu0 0.0
        %3192 = vmatprep.subr.mxu0 0.0
        %3193 = vmatpush1.msra.mxu0 0.0
        %3194 = vmatprep.mubr.f32.mxu0 0.0
        %3195 = vmatmul.mubr.f32.gmra.mrb[0].mxu0 %v3107
        %v3196 = vpop.f32.mrb[0].mxu0
        %v3197 = vadd.f32 %v3069, %v3196
        %v3198 = vpop.f32.mrb[0].mxu0
        %3199 = vmatprep.mubr.f32.mxu0 0.0
        %3200 = vmatmul.mubr.f32.gmra.mrb[0].mxu0 %v3110
        %v3201 = vpop.f32.mrb[0].mxu0
        %v3202 = vadd.f32 %v3074, %v3201
        %v3203 = vpop.f32.mrb[0].mxu0
        %3204 = vmatprep.mubr.f32.mxu0 0.0
        %3205 = vmatmul.mubr.f32.gmra.mrb[0].mxu0 %v3113
        %v3206 = vpop.f32.mrb[0].mxu0
        %v3207 = vadd.f32 %v3079, %v3206
        %v3208 = vpop.f32.mrb[0].mxu0
        %3209 = vmatprep.mubr.f32.mxu0 0.0
        %3210 = vmatmul.mubr.f32.gmra.mrb[0].mxu0 %v3116
        %v3211 = vpop.f32.mrb[0].mxu0
        %v3212 = vadd.f32 %v3084, %v3211
        %v3213 = vpop.f32.mrb[0].mxu0
        %3214 = vmatprep.mubr.f32.mxu0 0.0
        %3215 = vmatmul.mubr.f32.gmra.mrb[0].mxu0 %v3119
        %v3216 = vpop.f32.mrb[0].mxu0
        %v3217 = vadd.f32 %v3089, %v3216
        %v3218 = vpop.f32.mrb[0].mxu0
        %3219 = vmatprep.mubr.f32.mxu0 0.0
        %3220 = vmatmul.mubr.f32.gmra.mrb[0].mxu0 %v3122
        %v3221 = vpop.f32.mrb[0].mxu0
        %v3222 = vadd.f32 %v3094, %v3221
        %v3223 = vpop.f32.mrb[0].mxu0
        %3224 = vmatprep.mubr.f32.mxu0 0.0
        %3225 = vmatmul.mubr.f32.gmra.mrb[0].mxu0 %v3125
        %v3226 = vpop.f32.mrb[0].mxu0
        %v3227 = vadd.f32 %v3099, %v3226
        %v3228 = vpop.f32.mrb[0].mxu0
        %3229 = vmatprep.mubr.f32.mxu0 0.0
        %3230 = vmatmul.mubr.f32.gmra.mrb[0].mxu0 %v3128
        %v3231 = vpop.f32.mrb[0].mxu0
        %v3232 = vadd.f32 %v3104, %v3231
        %v3233 = vpop.f32.mrb[0].mxu0
        %3234 = vdwg.mxu0
        %v3235 = vmax.f32 %v3197, 0.0
        %v3236 = vmax.f32 %v3202, 0.0
        %v3237 = vmax.f32 %v3207, 0.0
        %v3238 = vmax.f32 %v3212, 0.0
        %v3239 = vmax.f32 %v3217, 0.0
        %v3240 = vmax.f32 %v3222, 0.0
        %v3241 = vmax.f32 %v3227, 0.0
        %v3242 = vmax.f32 %v3232, 0.0
        %v3243 = vld [vmem:[%s10] sm:$0xff]
        %v3244 = vld [vmem:[%s10 + $0x8] sm:$0xff]
        %v3245 = vld [vmem:[%s10 + $0x10] sm:$0xff]
        %v3246 = vld [vmem:[%s10 + $0x18] sm:$0xff]
        %v3247 = vld [vmem:[%s10 + $0x20] sm:$0xff]
        %v3248 = vld [vmem:[%s10 + $0x28] sm:$0xff]
        %v3249 = vld [vmem:[%s10 + $0x30] sm:$0xff]
        %v3250 = vld [vmem:[%s10 + $0x38] sm:$0xff]
        %v3251 = vld [vmem:[%s10 + $0x40] sm:$0xff]
        %v3252 = vld [vmem:[%s10 + $0x48] sm:$0xff]
        %v3253 = vld [vmem:[%s10 + $0x50] sm:$0xff]
        %v3254 = vld [vmem:[%s10 + $0x58] sm:$0xff]
        %v3255 = vld [vmem:[%s10 + $0x60] sm:$0xff]
        %v3256 = vld [vmem:[%s10 + $0x68] sm:$0xff]
        %v3257 = vld [vmem:[%s10 + $0x70] sm:$0xff]
        %v3258 = vld [vmem:[%s10 + $0x78] sm:$0xff]
        %v3259 = vld [vmem:[%s10 + $0x80] sm:$0xf]
        %v3260 = vld [vmem:[%s10 + $0x88] sm:$0xf]
        %v3261 = vld [vmem:[%s10 + $0x90] sm:$0xf]
        %v3262 = vld [vmem:[%s10 + $0x98] sm:$0xf]
        %vm3263 = vcmask 293888
        %v3265 = vsel %vm3263, %v3235, 0
        %v3268 = vsel %vm3263, %v3236, 0
        %v3271 = vsel %vm3263, %v3237, 0
        %v3274 = vsel %vm3263, %v3238, 0
        %v3277 = vsel %vm3263, %v3239, 0
        %v3280 = vsel %vm3263, %v3240, 0
        %v3283 = vsel %vm3263, %v3241, 0
        %v3286 = vsel %vm3263, %v3242, 0
        %v3289 = vsel %vm1655, %v3259, 0
        %v3292 = vsel %vm1655, %v3260, 0
        %v3295 = vsel %vm1655, %v3261, 0
        %v3298 = vsel %vm1655, %v3262, 0
        %3300 = vmatprep.subr.mxu0 %v3244
        %3301 = vmatpush1.msra.mxu0 %v3243
        %3302 = vmatprep.subr.mxu0 %v3248
        %3303 = vmatpush1.msra.mxu0 %v3247
        %3304 = vmatprep.subr.mxu0 %v3252
        %3305 = vmatpush1.msra.mxu0 %v3251
        %3306 = vmatprep.subr.mxu0 %v3256
        %3307 = vmatpush1.msra.mxu0 %v3255
        %3308 = vmatprep.subr.mxu0 %v3292
        %3309 = vmatpush1.msra.mxu0 %v3289
        %3310 = vmatprep.subr.mxu0 0.0
        %3311 = vmatpush1.msra.mxu0 0.0
        %3312 = vmatprep.subr.mxu0 0.0
        %3313 = vmatpush1.msra.mxu0 0.0
        %3314 = vmatprep.subr.mxu0 0.0
        %3315 = vmatpush1.msra.mxu0 0.0
        %3316 = vmatprep.subr.mxu0 0.0
        %3317 = vmatpush1.msra.mxu0 0.0
        %3318 = vmatprep.subr.mxu0 0.0
        %3319 = vmatpush1.msra.mxu0 0.0
        %3320 = vmatprep.subr.mxu0 0.0
        %3321 = vmatpush1.msra.mxu0 0.0
        %3322 = vmatprep.subr.mxu0 0.0
        %3323 = vmatpush1.msra.mxu0 0.0
        %3324 = vmatprep.subr.mxu0 0.0
        %3325 = vmatpush1.msra.mxu0 0.0
        %3326 = vmatprep.subr.mxu0 0.0
        %3327 = vmatpush1.msra.mxu0 0.0
        %3328 = vmatprep.subr.mxu0 0.0
        %3329 = vmatpush1.msra.mxu0 0.0
        %3330 = vmatprep.subr.mxu0 0.0
        %3331 = vmatpush1.msra.mxu0 0.0
        %3332 = vmatprep.subr.mxu0 0.0
        %3333 = vmatpush1.msra.mxu0 0.0
        %3334 = vmatprep.subr.mxu0 0.0
        %3335 = vmatpush1.msra.mxu0 0.0
        %3336 = vmatprep.subr.mxu0 0.0
        %3337 = vmatpush1.msra.mxu0 0.0
        %3338 = vmatprep.subr.mxu0 0.0
        %3339 = vmatpush1.msra.mxu0 0.0
        %3340 = vmatprep.subr.mxu0 0.0
        %3341 = vmatpush1.msra.mxu0 0.0
        %3342 = vmatprep.subr.mxu0 0.0
        %3343 = vmatpush1.msra.mxu0 0.0
        %3344 = vmatprep.subr.mxu0 0.0
        %3345 = vmatpush1.msra.mxu0 0.0
        %3346 = vmatprep.subr.mxu0 0.0
        %3347 = vmatpush1.msra.mxu0 0.0
        %3348 = vmatprep.subr.mxu0 0.0
        %3349 = vmatpush1.msra.mxu0 0.0
        %3350 = vmatprep.subr.mxu0 0.0
        %3351 = vmatpush1.msra.mxu0 0.0
        %3352 = vmatprep.subr.mxu0 0.0
        %3353 = vmatpush1.msra.mxu0 0.0
        %3354 = vmatprep.subr.mxu0 0.0
        %3355 = vmatpush1.msra.mxu0 0.0
        %3356 = vmatprep.subr.mxu0 0.0
        %3357 = vmatpush1.msra.mxu0 0.0
        %3358 = vmatprep.subr.mxu0 0.0
        %3359 = vmatpush1.msra.mxu0 0.0
        %3360 = vmatprep.subr.mxu0 0.0
        %3361 = vmatpush1.msra.mxu0 0.0
        %3362 = vmatprep.subr.mxu0 0.0
        %3363 = vmatpush1.msra.mxu0 0.0
        %3364 = vmatprep.mubr.f32.mxu0 0.0
        %3365 = vmatmul.mubr.f32.gmra.mrb[0].mxu0 %v3265
        %v3366 = vpop.f32.mrb[0].mxu0
        %v3367 = vadd.f32 0.0, %v3366
        %v3368 = vpop.f32.mrb[0].mxu0
        %v3369 = vadd.f32 0.0, %v3368
        %3370 = vmatprep.mubr.f32.mxu0 0.0
        %3371 = vmatmul.mubr.f32.gmra.mrb[0].mxu0 %v3268
        %v3372 = vpop.f32.mrb[0].mxu0
        %v3373 = vadd.f32 0.0, %v3372
        %v3374 = vpop.f32.mrb[0].mxu0
        %v3375 = vadd.f32 0.0, %v3374
        %3376 = vmatprep.mubr.f32.mxu0 0.0
        %3377 = vmatmul.mubr.f32.gmra.mrb[0].mxu0 %v3271
        %v3378 = vpop.f32.mrb[0].mxu0
        %v3379 = vadd.f32 0.0, %v3378
        %v3380 = vpop.f32.mrb[0].mxu0
        %v3381 = vadd.f32 0.0, %v3380
        %3382 = vmatprep.mubr.f32.mxu0 0.0
        %3383 = vmatmul.mubr.f32.gmra.mrb[0].mxu0 %v3274
        %v3384 = vpop.f32.mrb[0].mxu0
        %v3385 = vadd.f32 0.0, %v3384
        %v3386 = vpop.f32.mrb[0].mxu0
        %v3387 = vadd.f32 0.0, %v3386
        %3388 = vmatprep.mubr.f32.mxu0 0.0
        %3389 = vmatmul.mubr.f32.gmra.mrb[0].mxu0 %v3277
        %v3390 = vpop.f32.mrb[0].mxu0
        %v3391 = vadd.f32 0.0, %v3390
        %v3392 = vpop.f32.mrb[0].mxu0
        %v3393 = vadd.f32 0.0, %v3392
        %3394 = vmatprep.mubr.f32.mxu0 0.0
        %3395 = vmatmul.mubr.f32.gmra.mrb[0].mxu0 %v3280
        %v3396 = vpop.f32.mrb[0].mxu0
        %v3397 = vadd.f32 0.0, %v3396
        %v3398 = vpop.f32.mrb[0].mxu0
        %v3399 = vadd.f32 0.0, %v3398
        %3400 = vmatprep.mubr.f32.mxu0 0.0
        %3401 = vmatmul.mubr.f32.gmra.mrb[0].mxu0 %v3283
        %v3402 = vpop.f32.mrb[0].mxu0
        %v3403 = vadd.f32 0.0, %v3402
        %v3404 = vpop.f32.mrb[0].mxu0
        %v3405 = vadd.f32 0.0, %v3404
        %3406 = vmatprep.mubr.f32.mxu0 0.0
        %3407 = vmatmul.mubr.f32.gmra.mrb[0].mxu0 %v3286
        %v3408 = vpop.f32.mrb[0].mxu0
        %v3409 = vadd.f32 0.0, %v3408
        %v3410 = vpop.f32.mrb[0].mxu0
        %v3411 = vadd.f32 0.0, %v3410
        %3412 = vdwg.mxu0
        %3413 = vmatprep.subr.mxu0 %v3246
        %3414 = vmatpush1.msra.mxu0 %v3245
        %3415 = vmatprep.subr.mxu0 %v3250
        %3416 = vmatpush1.msra.mxu0 %v3249
        %3417 = vmatprep.subr.mxu0 %v3254
        %3418 = vmatpush1.msra.mxu0 %v3253
        %3419 = vmatprep.subr.mxu0 %v3258
        %3420 = vmatpush1.msra.mxu0 %v3257
        %3421 = vmatprep.subr.mxu0 %v3298
        %3422 = vmatpush1.msra.mxu0 %v3295
        %3423 = vmatprep.subr.mxu0 0.0
        %3424 = vmatpush1.msra.mxu0 0.0
        %3425 = vmatprep.subr.mxu0 0.0
        %3426 = vmatpush1.msra.mxu0 0.0
        %3427 = vmatprep.subr.mxu0 0.0
        %3428 = vmatpush1.msra.mxu0 0.0
        %3429 = vmatprep.subr.mxu0 0.0
        %3430 = vmatpush1.msra.mxu0 0.0
        %3431 = vmatprep.subr.mxu0 0.0
        %3432 = vmatpush1.msra.mxu0 0.0
        %3433 = vmatprep.subr.mxu0 0.0
        %3434 = vmatpush1.msra.mxu0 0.0
        %3435 = vmatprep.subr.mxu0 0.0
        %3436 = vmatpush1.msra.mxu0 0.0
        %3437 = vmatprep.subr.mxu0 0.0
        %3438 = vmatpush1.msra.mxu0 0.0
        %3439 = vmatprep.subr.mxu0 0.0
        %3440 = vmatpush1.msra.mxu0 0.0
        %3441 = vmatprep.subr.mxu0 0.0
        %3442 = vmatpush1.msra.mxu0 0.0
        %3443 = vmatprep.subr.mxu0 0.0
        %3444 = vmatpush1.msra.mxu0 0.0
        %3445 = vmatprep.subr.mxu0 0.0
        %3446 = vmatpush1.msra.mxu0 0.0
        %3447 = vmatprep.subr.mxu0 0.0
        %3448 = vmatpush1.msra.mxu0 0.0
        %3449 = vmatprep.subr.mxu0 0.0
        %3450 = vmatpush1.msra.mxu0 0.0
        %3451 = vmatprep.subr.mxu0 0.0
        %3452 = vmatpush1.msra.mxu0 0.0
        %3453 = vmatprep.subr.mxu0 0.0
        %3454 = vmatpush1.msra.mxu0 0.0
        %3455 = vmatprep.subr.mxu0 0.0
        %3456 = vmatpush1.msra.mxu0 0.0
        %3457 = vmatprep.subr.mxu0 0.0
        %3458 = vmatpush1.msra.mxu0 0.0
        %3459 = vmatprep.subr.mxu0 0.0
        %3460 = vmatpush1.msra.mxu0 0.0
        %3461 = vmatprep.subr.mxu0 0.0
        %3462 = vmatpush1.msra.mxu0 0.0
        %3463 = vmatprep.subr.mxu0 0.0
        %3464 = vmatpush1.msra.mxu0 0.0
        %3465 = vmatprep.subr.mxu0 0.0
        %3466 = vmatpush1.msra.mxu0 0.0
        %3467 = vmatprep.subr.mxu0 0.0
        %3468 = vmatpush1.msra.mxu0 0.0
        %3469 = vmatprep.subr.mxu0 0.0
        %3470 = vmatpush1.msra.mxu0 0.0
        %3471 = vmatprep.subr.mxu0 0.0
        %3472 = vmatpush1.msra.mxu0 0.0
        %3473 = vmatprep.subr.mxu0 0.0
        %3474 = vmatpush1.msra.mxu0 0.0
        %3475 = vmatprep.subr.mxu0 0.0
        %3476 = vmatpush1.msra.mxu0 0.0
        %3477 = vmatprep.mubr.f32.mxu0 0.0
        %3478 = vmatmul.mubr.f32.gmra.mrb[0].mxu0 %v3265
        %v3479 = vpop.f32.mrb[0].mxu0
        %v3480 = vadd.f32 0.0, %v3479
        %v3481 = vpop.f32.mrb[0].mxu0
        %v3482 = vadd.f32 0.0, %v3481
        %3483 = vmatprep.mubr.f32.mxu0 0.0
        %3484 = vmatmul.mubr.f32.gmra.mrb[0].mxu0 %v3268
        %v3485 = vpop.f32.mrb[0].mxu0
        %v3486 = vadd.f32 0.0, %v3485
        %v3487 = vpop.f32.mrb[0].mxu0
        %v3488 = vadd.f32 0.0, %v3487
        %3489 = vmatprep.mubr.f32.mxu0 0.0
        %3490 = vmatmul.mubr.f32.gmra.mrb[0].mxu0 %v3271
        %v3491 = vpop.f32.mrb[0].mxu0
        %v3492 = vadd.f32 0.0, %v3491
        %v3493 = vpop.f32.mrb[0].mxu0
        %v3494 = vadd.f32 0.0, %v3493
        %3495 = vmatprep.mubr.f32.mxu0 0.0
        %3496 = vmatmul.mubr.f32.gmra.mrb[0].mxu0 %v3274
        %v3497 = vpop.f32.mrb[0].mxu0
        %v3498 = vadd.f32 0.0, %v3497
        %v3499 = vpop.f32.mrb[0].mxu0
        %v3500 = vadd.f32 0.0, %v3499
        %3501 = vmatprep.mubr.f32.mxu0 0.0
        %3502 = vmatmul.mubr.f32.gmra.mrb[0].mxu0 %v3277
        %v3503 = vpop.f32.mrb[0].mxu0
        %v3504 = vadd.f32 0.0, %v3503
        %v3505 = vpop.f32.mrb[0].mxu0
        %v3506 = vadd.f32 0.0, %v3505
        %3507 = vmatprep.mubr.f32.mxu0 0.0
        %3508 = vmatmul.mubr.f32.gmra.mrb[0].mxu0 %v3280
        %v3509 = vpop.f32.mrb[0].mxu0
        %v3510 = vadd.f32 0.0, %v3509
        %v3511 = vpop.f32.mrb[0].mxu0
        %v3512 = vadd.f32 0.0, %v3511
        %3513 = vmatprep.mubr.f32.mxu0 0.0
        %3514 = vmatmul.mubr.f32.gmra.mrb[0].mxu0 %v3283
        %v3515 = vpop.f32.mrb[0].mxu0
        %v3516 = vadd.f32 0.0, %v3515
        %v3517 = vpop.f32.mrb[0].mxu0
        %v3518 = vadd.f32 0.0, %v3517
        %3519 = vmatprep.mubr.f32.mxu0 0.0
        %3520 = vmatmul.mubr.f32.gmra.mrb[0].mxu0 %v3286
        %v3521 = vpop.f32.mrb[0].mxu0
        %v3522 = vadd.f32 0.0, %v3521
        %v3523 = vpop.f32.mrb[0].mxu0
        %v3524 = vadd.f32 0.0, %v3523
        %3525 = vdwg.mxu0
        %v3526 = vpack.c.bf16 %v3373, %v3367
        %v3527 = vpack.c.bf16 %v3375, %v3369
        %v3528 = vpack.c.bf16 %v3486, %v3480
        %v3529 = vpack.c.bf16 %v3488, %v3482
        %v3530 = vpack.c.bf16 %v3385, %v3379
        %v3531 = vpack.c.bf16 %v3387, %v3381
        %v3532 = vpack.c.bf16 %v3498, %v3492
        %v3533 = vpack.c.bf16 %v3500, %v3494
        %v3534 = vpack.c.bf16 %v3397, %v3391
        %v3535 = vpack.c.bf16 %v3399, %v3393
        %v3536 = vpack.c.bf16 %v3510, %v3504
        %v3537 = vpack.c.bf16 %v3512, %v3506
        %v3538 = vpack.c.bf16 %v3409, %v3403
        %v3539 = vpack.c.bf16 %v3411, %v3405
        %v3540 = vpack.c.bf16 %v3522, %v3516
        %v3541 = vpack.c.bf16 %v3524, %v3518
        %v3558 = vunpack.c.l.b16 %v3526
        %v3559 = vunpack.c.l.b16 %v3527
        %v3560 = vunpack.c.l.b16 %v3528
        %v3561 = vunpack.c.l.b16 %v3529
        %v3562 = vunpack.c.h.b16 %v3526
        %v3563 = vunpack.c.h.b16 %v3527
        %v3564 = vunpack.c.h.b16 %v3528
        %v3565 = vunpack.c.h.b16 %v3529
        %v3566 = vunpack.c.l.b16 %v3530
        %v3567 = vunpack.c.l.b16 %v3531
        %v3568 = vunpack.c.l.b16 %v3532
        %v3569 = vunpack.c.l.b16 %v3533
        %v3570 = vunpack.c.h.b16 %v3530
        %v3571 = vunpack.c.h.b16 %v3531
        %v3572 = vunpack.c.h.b16 %v3532
        %v3573 = vunpack.c.h.b16 %v3533
        %v3574 = vunpack.c.l.b16 %v3534
        %v3575 = vunpack.c.l.b16 %v3535
        %v3576 = vunpack.c.l.b16 %v3536
        %v3577 = vunpack.c.l.b16 %v3537
        %v3578 = vunpack.c.h.b16 %v3534
        %v3579 = vunpack.c.h.b16 %v3535
        %v3580 = vunpack.c.h.b16 %v3536
        %v3581 = vunpack.c.h.b16 %v3537
        %v3582 = vunpack.c.l.b16 %v3538
        %v3583 = vunpack.c.l.b16 %v3539
        %v3584 = vunpack.c.l.b16 %v3540
        %v3585 = vunpack.c.l.b16 %v3541
        %v3586 = vunpack.c.h.b16 %v3538
        %v3587 = vunpack.c.h.b16 %v3539
        %v3588 = vunpack.c.h.b16 %v3540
        %v3589 = vunpack.c.h.b16 %v3541
        %v3590 = vpack.c.b16 %v3559, %v3558
        %v3591 = vpack.c.b16 %v3561, %v3560
        %v3592 = vpack.c.b16 %v3563, %v3562
        %v3593 = vpack.c.b16 %v3565, %v3564
        %v3594 = vpack.c.b16 %v3567, %v3566
        %v3595 = vpack.c.b16 %v3569, %v3568
        %v3596 = vpack.c.b16 %v3571, %v3570
        %v3597 = vpack.c.b16 %v3573, %v3572
        %v3598 = vpack.c.b16 %v3575, %v3574
        %v3599 = vpack.c.b16 %v3577, %v3576
        %v3600 = vpack.c.b16 %v3579, %v3578
        %v3601 = vpack.c.b16 %v3581, %v3580
        %v3602 = vpack.c.b16 %v3583, %v3582
        %v3603 = vpack.c.b16 %v3585, %v3584
        %v3604 = vpack.c.b16 %v3587, %v3586
        %v3605 = vpack.c.b16 %v3589, %v3588
        %3622 = vst [vmem:[%s379 + $0x1c0] sm:$0xff] %v3590
        %3623 = vst [vmem:[%s379 + $0x1c8] sm:$0xff] %v3591
        %3624 = vst [vmem:[%s379 + $0x1d0] sm:$0xff] %v3592
        %3625 = vst [vmem:[%s379 + $0x1d8] sm:$0xff] %v3593
        %3626 = vst [vmem:[%s379 + $0x1e0] sm:$0xff] %v3594
        %3627 = vst [vmem:[%s379 + $0x1e8] sm:$0xff] %v3595
        %3628 = vst [vmem:[%s379 + $0x1f0] sm:$0xff] %v3596
        %3629 = vst [vmem:[%s379 + $0x1f8] sm:$0xff] %v3597
        %3630 = vst [vmem:[%s379 + $0x200] sm:$0xff] %v3598
        %3631 = vst [vmem:[%s379 + $0x208] sm:$0xff] %v3599
        %3632 = vst [vmem:[%s379 + $0x210] sm:$0xff] %v3600
        %3633 = vst [vmem:[%s379 + $0x218] sm:$0xff] %v3601
        %3634 = vst [vmem:[%s379 + $0x220] sm:$0xff] %v3602
        %3635 = vst [vmem:[%s379 + $0x228] sm:$0xff] %v3603
        %3636 = vst [vmem:[%s379 + $0x230] sm:$0xff] %v3604
        %3637 = vst [vmem:[%s379 + $0x238] sm:$0xff] %v3605
        %s3638 = sand.u32 %s269, 1
        %s3639 = scalar_lea.sflag [#allocation3], %s3638
        %s3640 = sand.u32 %s269, 1
        %s3641 = smul.addr %s3640, 576
        %s3642 = scalar_lea.vmem [#allocation2], %s3641
        // Predicated region
        $region65: #{tpu_custom_call.1} parent=63 // pred_check
          %p3643 = pneg %p279
        $region66: #{tpu_custom_call.1} parent=63 // pred_check_branch
          %3645 = sbr.rel (%p3643) target = $region68
        $region67: #{tpu_custom_call.1} parent=63 // pred_region
          %s3647 = ssub.s32 9216, 9216
          %3648 = vsyncadd %s3639, %s3647
          %s3649 = smul.addr %s25, 144
          %s3650 = smul.addr %s3649, 64
          %s3651 = scalar_lea.hbm %s11, %s3650
          %s3652 = sshll.u32 %s3642, 4
          %s3653 = int_to_ptr.vmem [resolvable:$true] %s3652
          %3658 = dma.vmem_to_hbm [thread:$0]  %s3653, 9216, %s3651, %s3639, 256, 256, 16
        $region68: #{tpu_custom_call.1} parent=63 // pred_fallthru
          _
      $region64: #{tpu_custom_call.1} parent=5 // pred_fallthru
        _
      %p3659 = scmp.le.s32.totalorder 2, %s20
      // Predicated region
      $region69: #{tpu_custom_call.1} parent=5 // pred_check
        %p3660 = pneg %p3659
      $region70: #{tpu_custom_call.1} parent=5 // pred_check_branch
        %3662 = sbr.rel (%p3660) target = $region72
      $region71: #{tpu_custom_call.1} parent=5 // pred_region
        %s3663 = ssub.s32 %s20, 2
        // Predicated region
        $region73: #{tpu_custom_call.1} parent=71 // pred_check
          %p3664 = pneg %p285
        $region74: #{tpu_custom_call.1} parent=71 // pred_check_branch
          %3666 = sbr.rel (%p3664) target = $region76
        $region75: #{tpu_custom_call.1} parent=71 // pred_region
          %s3667 = sand.u32 %s270, 1
          %s3668 = scalar_lea.sflag [#allocation3], %s3667
          %s3669 = sand.u32 %s270, 1
          %s3670 = smul.addr %s3669, 576
          %s3671 = scalar_lea.vmem [#allocation2], %s3670
          %3672 = dma.done %s3668, 9216
        $region76: #{tpu_custom_call.1} parent=71 // pred_fallthru
          _
      $region72: #{tpu_custom_call.1} parent=5 // pred_fallthru
        _
    $region6: #{tpu_custom_call.1} parent=1 // loop_footer
      %s24 = sadd.s32 1, %s20
    $region7: #{tpu_custom_call.1} parent=1 // loop_footer_branch
      %19 = sbr.rel target = $region3
    $region8: #{tpu_custom_call.1} parent=1 // loop_exit
      _
    %3673 = vsyncpa [#allocation3], 1
    %s3674 = scalar_lea.sflag [#allocation3], 1
    %3675 = vsyncpa %s3674, 1

</llo_original>
